<compile_context>
chip_gen: v7x
topology: tpu7x:2x2x1
jax: 0.10.0
libtpu: 0.0.40
codegen_flags: <defaults>
</compile_context>

<pallas_src>
import jax
import jax.numpy as jnp
from jax.experimental import pallas as pl
from jax.experimental.pallas import tpu as pltpu

POINT_DIMS = 16          # native.point_dims()
NUM_EMBEDDINGS = 64      # native.embeddings()
EMB_DIM = 32
H0 = 128
H1 = 112
H1_PAD = 128             # zero-padded hidden width (lane-dense)
INPUT_RANGE = 1.0
WEIGHT_RANGE = 1.0

_WB_ROWS = POINT_DIMS + NUM_EMBEDDINGS + H0   # 16 + 64 + 128 = 208


def _mlp_kernel(x_ref, wb_ref, tail_ref, o_ref):
    # x_ref: (TILE_B, POINT_DIMS+1) f32 — columns 0..15 = point, col 16 = pos.
    xa = x_ref[...]
    x = xa[:, :POINT_DIMS].astype(jnp.bfloat16)            # (TB, 16) bf16
    pos = xa[:, POINT_DIMS:POINT_DIMS + 1]                  # (TB, 1)  f32

    # --- interpolated embedding lookup, fused as a one-hot lerp matmul -------
    # (valid for 0 <= pos <= NUM_EMBEDDINGS-1, same domain as nn.Embedding)
    idx1 = pos.astype(jnp.int32)                             # trunc == .int()
    idx2 = jnp.minimum(idx1 + 1, NUM_EMBEDDINGS - 1)
    frac = pos - idx1.astype(jnp.float32)

    tb = xa.shape[0]
    cols = jax.lax.broadcasted_iota(jnp.int32, (tb, NUM_EMBEDDINGS), 1)
    onehot = (jnp.where(cols == idx1, 1.0 - frac, 0.0)
              + jnp.where(cols == idx2, frac, 0.0)).astype(jnp.bfloat16)

    # --- coalesced bf16 weight slab ------------------------------------------
    w0x = wb_ref[0:POINT_DIMS, :]                                    # (16, 128)
    emb_proj = wb_ref[POINT_DIMS:POINT_DIMS + NUM_EMBEDDINGS, :]     # (64, 128) (b0 folded)
    w1 = wb_ref[POINT_DIMS + NUM_EMBEDDINGS:_WB_ROWS, :]             # (128,128)

    # --- layer 0: concat(x, em) @ W0 + b0 == x @ W0x + onehot @ (emb@W0e + b0)
    h0 = (jnp.dot(x, w0x, preferred_element_type=jnp.float32)
          + jnp.dot(onehot, emb_proj, preferred_element_type=jnp.float32))
    h0 = jnp.clip(h0, 0.0, INPUT_RANGE).astype(jnp.bfloat16)

    # --- layer 1 (H1 zero-padded to 128; padded lanes stay exactly 0) --------
    b1 = tail_ref[0:1, :]                                            # (1, 128) f32
    h1 = jnp.dot(h0, w1, preferred_element_type=jnp.float32) + b1
    h1 = jnp.clip(h1, 0.0, INPUT_RANGE)                              # (TB,128) f32

    # --- layer 2 + sigmoid: [1,128] x [TB,128]^T -> lane-dense (1, TB) -------
    w2 = tail_ref[1:2, :]                                            # (1, 128) f32
    b2 = tail_ref[2:3, 0:1]                                          # (1, 1)   f32
    logits = jax.lax.dot_general(
        w2, h1, dimension_numbers=(((1,), (1,)), ((), ())),
        preferred_element_type=jnp.float32) + b2
    o_ref[...] = jax.nn.sigmoid(logits)


def _pick_tile_b(batch, max_tile=2048, min_tile=256):
    """Largest tile (multiple of 256, capped) that still yields >=2 grid steps
    when B allows it, so v7x's two TensorCores both get work."""
    half = -(-batch // 2)
    tile = ((half + min_tile - 1) // min_tile) * min_tile
    return max(min_tile, min(max_tile, tile))


def model_forward(packed, x, embeddings, *, tile_b=None):
    """x: (B, POINT_DIMS) f32; embeddings: (B,) f32 fractional indices in
    [0, NUM_EMBEDDINGS-1]."""
    B = x.shape[0]
    if tile_b is None:
        tile_b = _pick_tile_b(B)
    assert tile_b % 128 == 0, "tile_b must be a multiple of 128 (lane-dense out)"

    n_tiles = pl.cdiv(B, tile_b)
    b_pad = n_tiles * tile_b

    # pos rides as column 16 of the x tile (no separate narrow input stream)
    xa = jnp.concatenate(
        [x.astype(jnp.float32),
         embeddings.astype(jnp.float32).reshape(-1, 1)], axis=1)      # (B, 17)
    if b_pad != B:
        xa = jnp.pad(xa, ((0, b_pad - B), (0, 0)))

    out = pl.pallas_call(
        _mlp_kernel,
        out_shape=jax.ShapeDtypeStruct((1, b_pad), jnp.float32),
        grid=(n_tiles,),
        in_specs=[
            pl.BlockSpec((tile_b, POINT_DIMS + 1), lambda i: (i, 0)),  # x tile
            pl.BlockSpec((_WB_ROWS, H0), lambda i: (0, 0)),            # bf16 weights
            pl.BlockSpec((8, H1_PAD), lambda i: (0, 0)),               # f32 tail
        ],
        out_specs=pl.BlockSpec((1, tile_b), lambda i: (0, i)),         # lane-dense
        compiler_params=pltpu.CompilerParams(
            dimension_semantics=("parallel",)),
    )(xa, packed["wb"], packed["tail"])

    return out.reshape(b_pad, 1)[:B]


# ----------------------------- parameters -----------------------------------

def init_params(key):
    """Raw params in PyTorch-equivalent layout: W stored as (in, out), b as (1, out)."""
    keys = jax.random.split(key, 7)

    def lin(kw, kb, fan_in, fan_out):
        bound = 1.0 / jnp.sqrt(jnp.float32(fan_in))
        w = jax.random.uniform(kw, (fan_in, fan_out), jnp.float32, -bound, bound)
        b = jax.random.uniform(kb, (1, fan_out), jnp.float32, -bound, bound)
        return jnp.clip(w, -WEIGHT_RANGE, WEIGHT_RANGE), b

    emb = jnp.clip(jax.random.normal(keys[0], (NUM_EMBEDDINGS, EMB_DIM), jnp.float32),
                   -WEIGHT_RANGE, WEIGHT_RANGE)
    w0, b0 = lin(keys[1], keys[2], POINT_DIMS + EMB_DIM, H0)
    w1, b1 = lin(keys[3], keys[4], H0, H1)
    w2, b2 = lin(keys[5], keys[6], H1, 1)
    return {"emb": emb, "w0": w0, "b0": b0, "w1": w1, "b1": b1, "w2": w2, "b2": b2}


def pack_params(p):
    """One-time repack: split l0, fold emb table AND b0 into the l0 weight,
    pad H1->128, coalesce into one bf16 slab + one small f32 tail slab."""
    hp = jax.lax.Precision.HIGHEST
    w0x = p["w0"][:POINT_DIMS]                                   # (16, 128)
    w0e = p["w0"][POINT_DIMS:]                                   # (32, 128)
    # one-hot lerp rows sum to 1, so b0 folds into every emb_proj row
    emb_proj = jnp.dot(p["emb"], w0e, precision=hp) + p["b0"]    # (64, 128)
    w1 = jnp.pad(p["w1"], ((0, 0), (0, H1_PAD - H1)))            # (128, 128)
    wb = jnp.concatenate([w0x, emb_proj, w1], axis=0).astype(jnp.bfloat16)  # (208,128)

    b1 = jnp.pad(p["b1"], ((0, 0), (0, H1_PAD - H1)))            # (1, 128)
    w2row = jnp.pad(p["w2"].T, ((0, 0), (0, H1_PAD - H1)))       # (1, 128)
    b2row = jnp.broadcast_to(p["b2"], (1, H1_PAD))               # (1, 128)
    tail = jnp.concatenate(
        [b1, w2row, b2row, jnp.zeros((5, H1_PAD), jnp.float32)], axis=0)    # (8, 128)
    return {"wb": wb, "tail": tail}


# --------------------------- pure-JAX reference ------------------------------

def reference_forward(p, x, embeddings):
    hp = jax.lax.Precision.HIGHEST
    em1 = embeddings.astype(jnp.int32)
    em2 = jnp.minimum(em1 + 1, NUM_EMBEDDINGS - 1)
    frac = (embeddings - em1.astype(jnp.float32)).reshape(-1, 1)
    e1 = p["emb"][em1]
    e2 = p["emb"][em2]
    em = e1 + frac * (e2 - e1)
    h = jnp.dot(jnp.concatenate([x, em], axis=1), p["w0"], precision=hp) + p["b0"]
    h = jnp.clip(h, 0.0, INPUT_RANGE)
    h = jnp.clip(jnp.dot(h, p["w1"], precision=hp) + p["b1"], 0.0, INPUT_RANGE)
    h = jnp.dot(h, p["w2"], precision=hp) + p["b2"]
    return jax.nn.sigmoid(h)


if __name__ == "__main__":
    key = jax.random.PRNGKey(0)
    k_param, k_x, k_e = jax.random.split(key, 3)

    B = 1000                       # non-multiple of tile -> exercises padding path
    params = init_params(k_param)
    packed = pack_params(params)

    x = jax.random.uniform(k_x, (B, POINT_DIMS), jnp.float32,
                           -INPUT_RANGE, INPUT_RANGE)
    embeddings = jax.random.uniform(k_e, (B,), jnp.float32,
                                    0.0, float(NUM_EMBEDDINGS - 1))

    # auto tile: B=1000 -> tile_b=512, 2 tiles (both TCs busy on v7x)
    out = model_forward(packed, x, embeddings)
    out = jax.block_until_ready(out)

    assert out.shape == (B, 1) and out.dtype == jnp.float32
    ref = reference_forward(params, x, embeddings)
    err = float(jnp.max(jnp.abs(out - ref)))
    assert err < 5e-3, f"mismatch vs reference: max abs err {err}"
    print("KERNEL_OK")
</pallas_src>

<mosaic_0001>
module attributes {stable_mosaic.version = 11 : i64} {
  func.func @_mlp_kernel(%arg0: i32, %arg1: memref<512x17xf32, #tpu.memory_space<vmem>>, %arg2: memref<208x128xbf16, #tpu.memory_space<vmem>>, %arg3: memref<8x128xf32, #tpu.memory_space<vmem>>, %arg4: memref<1x512xf32, #tpu.memory_space<vmem>>) attributes {dimension_semantics = [#tpu.dimension_semantics<parallel>], iteration_bounds = array<i64: 2>, scalar_prefetch = 0 : i64, scratch_operands = 0 : i64, tpu.core_type = #tpu.core_type<tc>, window_params = [{transform_indices = @transform_0, window_bounds = array<i64: 512, 17>}, {pipeline_mode = #tpu.pipeline_mode<synchronous>, transform_indices = @transform_1, window_bounds = array<i64: 208, 128>}, {pipeline_mode = #tpu.pipeline_mode<synchronous>, transform_indices = @transform_2, window_bounds = array<i64: 8, 128>}, {transform_indices = @transform_3, window_bounds = array<i64: 1, 512>}]} {
    %c0 = arith.constant 0 : index
    %c0_0 = arith.constant 0 : index
    %0 = vector.load %arg1[%c0, %c0_0] : memref<512x17xf32, #tpu.memory_space<vmem>>, vector<512x17xf32>
    %1 = vector.extract_strided_slice %0 {offsets = [0, 0], sizes = [512, 16], strides = [1, 1]} : vector<512x17xf32> to vector<512x16xf32>
    %2 = arith.truncf %1 : vector<512x16xf32> to vector<512x16xbf16>
    %3 = vector.extract_strided_slice %0 {offsets = [0, 16], sizes = [512, 1], strides = [1, 1]} : vector<512x17xf32> to vector<512x1xf32>
    %4 = arith.fptosi %3 : vector<512x1xf32> to vector<512x1xi32>
    %c1_i32 = arith.constant 1 : i32
    %5 = vector.broadcast %c1_i32 : i32 to vector<512x1xi32>
    %6 = arith.addi %4, %5 : vector<512x1xi32>
    %c63_i32 = arith.constant 63 : i32
    %7 = vector.broadcast %c63_i32 : i32 to vector<512x1xi32>
    %8 = arith.minsi %6, %7 : vector<512x1xi32>
    %9 = arith.sitofp %4 : vector<512x1xi32> to vector<512x1xf32>
    %10 = arith.subf %3, %9 : vector<512x1xf32>
    %11 = tpu.iota {dimensions = array<i32: 1>} : vector<512x64xi32>
    %12 = vector.broadcast %4 : vector<512x1xi32> to vector<512x64xi32>
    %13 = arith.cmpi eq, %11, %12 : vector<512x64xi32>
    %cst = arith.constant 1.000000e+00 : f32
    %14 = vector.broadcast %cst : f32 to vector<512x1xf32>
    %15 = arith.subf %14, %10 : vector<512x1xf32>
    %cst_1 = arith.constant 0.000000e+00 : f32
    %16 = vector.shape_cast %15 : vector<512x1xf32> to vector<512x1xf32>
    %17 = vector.broadcast %16 : vector<512x1xf32> to vector<512x64xf32>
    %18 = vector.broadcast %cst_1 : f32 to vector<512x64xf32>
    %19 = arith.select %13, %17, %18 : vector<512x64xi1>, vector<512x64xf32>
    %20 = vector.broadcast %8 : vector<512x1xi32> to vector<512x64xi32>
    %21 = arith.cmpi eq, %11, %20 : vector<512x64xi32>
    %cst_2 = arith.constant 0.000000e+00 : f32
    %22 = vector.shape_cast %10 : vector<512x1xf32> to vector<512x1xf32>
    %23 = vector.broadcast %22 : vector<512x1xf32> to vector<512x64xf32>
    %24 = vector.broadcast %cst_2 : f32 to vector<512x64xf32>
    %25 = arith.select %21, %23, %24 : vector<512x64xi1>, vector<512x64xf32>
    %26 = arith.addf %19, %25 : vector<512x64xf32>
    %27 = arith.truncf %26 : vector<512x64xf32> to vector<512x64xbf16>
    %c0_3 = arith.constant 0 : index
    %c0_4 = arith.constant 0 : index
    %28 = vector.load %arg2[%c0_3, %c0_4] : memref<208x128xbf16, #tpu.memory_space<vmem>>, vector<16x128xbf16>
    %c16 = arith.constant 16 : index
    %c0_5 = arith.constant 0 : index
    %29 = vector.load %arg2[%c16, %c0_5] : memref<208x128xbf16, #tpu.memory_space<vmem>>, vector<64x128xbf16>
    %c80 = arith.constant 80 : index
    %c0_6 = arith.constant 0 : index
    %30 = vector.load %arg2[%c80, %c0_6] : memref<208x128xbf16, #tpu.memory_space<vmem>>, vector<128x128xbf16>
    %cst_7 = arith.constant dense<0.000000e+00> : vector<512x128xf32>
    %31 = tpu.matmul %2, %28, %cst_7 {dimension_numbers = #tpu.dot_dimension_numbers<[1], [0], [0], [1], [0, 0, 1, 1], [], []>} : vector<512x16xbf16>, vector<16x128xbf16>, vector<512x128xf32> -> vector<512x128xf32>
    %cst_8 = arith.constant dense<0.000000e+00> : vector<512x128xf32>
    %32 = tpu.matmul %27, %29, %cst_8 {dimension_numbers = #tpu.dot_dimension_numbers<[1], [0], [0], [1], [0, 0, 1, 1], [], []>} : vector<512x64xbf16>, vector<64x128xbf16>, vector<512x128xf32> -> vector<512x128xf32>
    %33 = arith.addf %31, %32 : vector<512x128xf32>
    %cst_9 = arith.constant 0.000000e+00 : f32
    %cst_10 = arith.constant 1.000000e+00 : f32
    %34 = vector.broadcast %cst_9 : f32 to vector<512x128xf32>
    %35 = arith.maximumf %34, %33 : vector<512x128xf32>
    %36 = vector.broadcast %cst_10 : f32 to vector<512x128xf32>
    %37 = arith.minimumf %36, %35 : vector<512x128xf32>
    %38 = arith.truncf %37 : vector<512x128xf32> to vector<512x128xbf16>
    %c0_11 = arith.constant 0 : index
    %c0_12 = arith.constant 0 : index
    %39 = vector.load %arg3[%c0_11, %c0_12] : memref<8x128xf32, #tpu.memory_space<vmem>>, vector<1x128xf32>
    %cst_13 = arith.constant dense<0.000000e+00> : vector<512x128xf32>
    %40 = tpu.matmul %38, %30, %cst_13 {dimension_numbers = #tpu.dot_dimension_numbers<[1], [0], [0], [1], [0, 0, 1, 1], [], []>} : vector<512x128xbf16>, vector<128x128xbf16>, vector<512x128xf32> -> vector<512x128xf32>
    %41 = vector.broadcast %39 : vector<1x128xf32> to vector<512x128xf32>
    %42 = arith.addf %40, %41 : vector<512x128xf32>
    %cst_14 = arith.constant 0.000000e+00 : f32
    %cst_15 = arith.constant 1.000000e+00 : f32
    %43 = vector.broadcast %cst_14 : f32 to vector<512x128xf32>
    %44 = arith.maximumf %43, %42 : vector<512x128xf32>
    %45 = vector.broadcast %cst_15 : f32 to vector<512x128xf32>
    %46 = arith.minimumf %45, %44 : vector<512x128xf32>
    %c1 = arith.constant 1 : index
    %c0_16 = arith.constant 0 : index
    %47 = vector.load %arg3[%c1, %c0_16] : memref<8x128xf32, #tpu.memory_space<vmem>>, vector<1x128xf32>
    %c2 = arith.constant 2 : index
    %c0_17 = arith.constant 0 : index
    %48 = vector.load %arg3[%c2, %c0_17] : memref<8x128xf32, #tpu.memory_space<vmem>>, vector<1x1xf32>
    %cst_18 = arith.constant dense<0.000000e+00> : vector<1x512xf32>
    %49 = tpu.matmul %47, %46, %cst_18 {dimension_numbers = #tpu.dot_dimension_numbers<[1], [1], [0], [0], [0, 0, 1, 0], [], []>} : vector<1x128xf32>, vector<512x128xf32>, vector<1x512xf32> -> vector<1x512xf32>
    %50 = vector.broadcast %48 : vector<1x1xf32> to vector<1x512xf32>
    %51 = arith.addf %49, %50 : vector<1x512xf32>
    %52 = arith.negf %51 : vector<1x512xf32>
    %53 = math.exp %52 : vector<1x512xf32>
    %cst_19 = arith.constant 1.000000e+00 : f32
    %54 = vector.broadcast %cst_19 : f32 to vector<1x512xf32>
    %55 = arith.addf %54, %53 : vector<1x512xf32>
    %56 = arith.divf %54, %55 : vector<1x512xf32>
    %c0_20 = arith.constant 0 : index
    %c0_21 = arith.constant 0 : index
    %57 = vector.load %arg4[%c0_20, %c0_21] : memref<1x512xf32, #tpu.memory_space<vmem>>, vector<1x512xf32>
    tpu.vector_store %arg4[%c0_20, %c0_21], %56 {strides = array<i32>} : memref<1x512xf32, #tpu.memory_space<vmem>>, vector<1x512xf32>,
    return
  }
  func.func @transform_0(%arg0: i32) -> (i32, i32) {
    %c0_i32 = arith.constant 0 : i32
    %c0_i32_0 = arith.constant 0 : i32
    return %arg0, %c0_i32 : i32, i32
  }
  func.func @transform_1(%arg0: i32) -> (i32, i32) {
    %c0_i32 = arith.constant 0 : i32
    %c0_i32_0 = arith.constant 0 : i32
    %c0_i32_1 = arith.constant 0 : i32
    return %c0_i32, %c0_i32_0 : i32, i32
  }
  func.func @transform_2(%arg0: i32) -> (i32, i32) {
    %c0_i32 = arith.constant 0 : i32
    %c0_i32_0 = arith.constant 0 : i32
    %c0_i32_1 = arith.constant 0 : i32
    return %c0_i32, %c0_i32_0 : i32, i32
  }
  func.func @transform_3(%arg0: i32) -> (i32, i32) {
    %c0_i32 = arith.constant 0 : i32
    %c0_i32_0 = arith.constant 0 : i32
    return %c0_i32, %arg0 : i32, i32
  }
}

</mosaic_0001>

<llo_original>
// kernel: tpu_custom_call.1
$region0: #{tpu_custom_call.1}
  #allocation0 [shape = 'u32[]', space=smem, size = 0x4, offset = 0x4, fixed_abs, tag = 'smem constant byte address 0x4 - core index']
  #allocation1 [shape = 'u32[144,128]{1,0:T(1,128)}', space=vmem, size = 0x12000, scoped, tag = 'internal scratch']
  %s0 = inlined_call_operand.vmem [shape: f32[1024,17], index: 0, kind: input, shape index: {}]
  %s1 = inlined_call_operand.vmem [shape: bf16[208,128], index: 1, kind: input, shape index: {}]
  %s2 = inlined_call_operand.vmem [shape: f32[8,128], index: 2, kind: input, shape index: {}]
  %s3 = inlined_call_operand.hbm [shape: f32[1,1024], index: 3, kind: output, shape index: {}]
  %s4 = sld [smem:[#allocation0]]
  $region45: #{tpu_custom_call.1} parent=0
    _
  %s6 = ssub.s32 1, %s4
  %s7 = scalar_select 0, %s6, %s4
  $region1: #{tpu_custom_call.1} parent=0
    #allocation2 [shape = 'u8[4096]{0}', space=vmem, size = 0x1000, scoped, tag = 'output window, operand 0']
    #allocation3 [shape = 's32[2]{0}', space=sflag, size = 0x8, scoped, tag = 'scoped memory for tpu_custom_call.1']
    %8 = vsyncpa [#allocation3], 0
    %s9 = scalar_lea.sflag [#allocation3], 1
    %10 = vsyncpa %s9, 0
    loop: start=0, step=1, limit=4
    $region2: #{tpu_custom_call.1} parent=1 // loop_pre_header
      _
    $region3: #{tpu_custom_call.1} parent=1 // loop_header
      %s12 = sphi 0, %s16
      %p13 = scmp.ge.s32.totalorder %s12, 4
      %s22 = sphi 0, %s24
      %s25 = sphi 0, %s22
      %s26 = sphi 0, %s25
      %s42 = sphi 0, %s26
      %s46 = sphi 0, %s46
      %s48 = sphi 0, %s46
      %s49 = sphi 0, %s48
      %s63 = sphi 0, %s49
      %s67 = sphi 0, %s67
      %s69 = sphi 0, %s67
      %s70 = sphi 0, %s69
      %s84 = sphi 0, %s70
      %s90 = sphi 0, %s92
      %s93 = sphi 0, %s90
      %s94 = sphi 0, %s93
      %s110 = sphi 0, %s94
    $region4: #{tpu_custom_call.1} parent=1 // loop_header_branch
      %15 = sbr.rel (%p13) target = $region8
    $region5: #{tpu_custom_call.1} parent=1 // loop_body
      %s17 = ssub.s32 %s12, 1
      %s18 = ssub.s32 %s12, 2
      %s19 = sadd.s32 %s12, 1
      %s20 = ssub.s32 %s12, %s19
      %p21 = scmp.eq.s32.totalorder %s20, 0
      %s23 = sadd.s32 %s22, 1
      %s24 = scalar_select %p21, %s22, %s23
      %p27 = pneg %p21
      %p28 = scmp.eq.s32.totalorder %s12, 1
      %p29 = por %p27, %p28
      %p30 = scmp.ne.s32.totalorder %s22, %s25
      %p31 = scmp.eq.s32.totalorder %s12, 0
      %p32 = por %p30, %p31
      %p33 = scmp.ne.s32.totalorder %s22, %s25
      %p34 = scmp.eq.s32.totalorder %s17, 1
      %p35 = por %p33, %p34
      %p36 = scmp.ne.s32.totalorder %s25, %s26
      %p37 = scmp.eq.s32.totalorder %s17, 0
      %p38 = por %p36, %p37
      %p39 = scmp.ne.s32.totalorder %s25, %s26
      %p40 = scmp.eq.s32.totalorder %s18, 1
      %p41 = por %p39, %p40
      %p43 = scmp.ne.s32.totalorder %s26, %s42
      %p44 = scmp.eq.s32.totalorder %s18, 0
      %p45 = por %p43, %p44
      %s47 = sadd.s32 %s46, 1
      %p50 = scmp.eq.s32.totalorder %s12, 1
      %p51 = scmp.ne.s32.totalorder %s46, %s48
      %p52 = scmp.eq.s32.totalorder %s12, 0
      %p53 = por %p51, %p52
      %p54 = scmp.ne.s32.totalorder %s46, %s48
      %p55 = scmp.eq.s32.totalorder %s17, 1
      %p56 = por %p54, %p55
      %p57 = scmp.ne.s32.totalorder %s48, %s49
      %p58 = scmp.eq.s32.totalorder %s17, 0
      %p59 = por %p57, %p58
      %p60 = scmp.ne.s32.totalorder %s48, %s49
      %p61 = scmp.eq.s32.totalorder %s18, 1
      %p62 = por %p60, %p61
      %p64 = scmp.ne.s32.totalorder %s49, %s63
      %p65 = scmp.eq.s32.totalorder %s18, 0
      %p66 = por %p64, %p65
      %s68 = sadd.s32 %s67, 1
      %p71 = scmp.eq.s32.totalorder %s12, 1
      %p72 = scmp.ne.s32.totalorder %s67, %s69
      %p73 = scmp.eq.s32.totalorder %s12, 0
      %p74 = por %p72, %p73
      %p75 = scmp.ne.s32.totalorder %s67, %s69
      %p76 = scmp.eq.s32.totalorder %s17, 1
      %p77 = por %p75, %p76
      %p78 = scmp.ne.s32.totalorder %s69, %s70
      %p79 = scmp.eq.s32.totalorder %s17, 0
      %p80 = por %p78, %p79
      %p81 = scmp.ne.s32.totalorder %s69, %s70
      %p82 = scmp.eq.s32.totalorder %s18, 1
      %p83 = por %p81, %p82
      %p85 = scmp.ne.s32.totalorder %s70, %s84
      %p86 = scmp.eq.s32.totalorder %s18, 0
      %p87 = por %p85, %p86
      %s88 = ssub.s32 %s12, %s19
      %p89 = scmp.eq.s32.totalorder %s88, 0
      %s91 = sadd.s32 %s90, 1
      %s92 = scalar_select %p89, %s90, %s91
      %p95 = pneg %p89
      %p96 = scmp.eq.s32.totalorder %s12, 1
      %p97 = por %p95, %p96
      %p98 = scmp.ne.s32.totalorder %s90, %s93
      %p99 = scmp.eq.s32.totalorder %s12, 0
      %p100 = por %p98, %p99
      %p101 = scmp.ne.s32.totalorder %s90, %s93
      %p102 = scmp.eq.s32.totalorder %s17, 1
      %p103 = por %p101, %p102
      %p104 = scmp.ne.s32.totalorder %s93, %s94
      %p105 = scmp.eq.s32.totalorder %s17, 0
      %p106 = por %p104, %p105
      %p107 = scmp.ne.s32.totalorder %s93, %s94
      %p108 = scmp.eq.s32.totalorder %s18, 1
      %p109 = por %p107, %p108
      %p111 = scmp.ne.s32.totalorder %s94, %s110
      %p112 = scmp.eq.s32.totalorder %s18, 0
      %p113 = por %p111, %p112
      %p114 = scmp.le.s32.totalorder 1, %s12
      %p115 = scmp.lt.s32.totalorder %s12, 3
      %p116 = pnand %p114, %p115
      %p117 = pneg %p116
      // Predicated region
      $region9: #{tpu_custom_call.1} parent=5 // pred_check
        _
      $region10: #{tpu_custom_call.1} parent=5 // pred_check_branch
        %119 = sbr.rel (%p116) target = $region12
      $region11: #{tpu_custom_call.1} parent=5 // pred_region
        %s120 = ssub.s32 %s12, 1
        // Predicated region
        $region13: #{tpu_custom_call.1} parent=11 // pred_check
          %p121 = pneg %p59
        $region14: #{tpu_custom_call.1} parent=11 // pred_check_branch
          %123 = sbr.rel (%p121) target = $region16
        $region15: #{tpu_custom_call.1} parent=11 // pred_region
          _
        $region16: #{tpu_custom_call.1} parent=11 // pred_fallthru
          _
        // Predicated region
        $region17: #{tpu_custom_call.1} parent=11 // pred_check
          %p124 = pneg %p80
        $region18: #{tpu_custom_call.1} parent=11 // pred_check_branch
          %126 = sbr.rel (%p124) target = $region20
        $region19: #{tpu_custom_call.1} parent=11 // pred_region
          _
        $region20: #{tpu_custom_call.1} parent=11 // pred_fallthru
          _
      $region12: #{tpu_custom_call.1} parent=5 // pred_fallthru
        _
      %p127 = scmp.lt.s32.totalorder %s12, 2
      // Predicated region
      $region21: #{tpu_custom_call.1} parent=5 // pred_check
        %p128 = pneg %p127
      $region22: #{tpu_custom_call.1} parent=5 // pred_check_branch
        %130 = sbr.rel (%p128) target = $region24
      $region23: #{tpu_custom_call.1} parent=5 // pred_region
        // Predicated region
        $region25: #{tpu_custom_call.1} parent=23 // pred_check
          %p131 = pneg %p32
        $region26: #{tpu_custom_call.1} parent=23 // pred_check_branch
          %133 = sbr.rel (%p131) target = $region28
        $region27: #{tpu_custom_call.1} parent=23 // pred_region
          %s134 = smul.u32 64, %s12
          %p135 = scmp.lt.s32.totalorder %s134, 127
          %s136 = scalar_select %p135, %s134, 127
          %s137 = smul.addr %s136, 8
          %s138 = scalar_lea.vmem %s0, %s137
          %s139 = smul.u32 64, %s12
        $region28: #{tpu_custom_call.1} parent=23 // pred_fallthru
          _
      $region24: #{tpu_custom_call.1} parent=5 // pred_fallthru
        _
      %p140 = scmp.le.s32.totalorder 1, %s12
      %p141 = scmp.lt.s32.totalorder %s12, 3
      %p142 = pnand %p140, %p141
      %p143 = pneg %p142
      // Predicated region
      $region29: #{tpu_custom_call.1} parent=5 // pred_check
        _
      $region30: #{tpu_custom_call.1} parent=5 // pred_check_branch
        %145 = sbr.rel (%p142) target = $region32
      $region31: #{tpu_custom_call.1} parent=5 // pred_region
        %s146 = ssub.s32 %s12, 1
        %s147 = smul.u32 64, %s17
        %p148 = scmp.lt.s32.totalorder %s147, 127
        %s149 = scalar_select %p148, %s147, 127
        %s150 = smul.addr %s149, 8
        %s151 = scalar_lea.vmem %s0, %s150
        %p152 = pneg %p38
        %p153 = pneg %p35
        %p154 = pneg %p59
        %p155 = pneg %p56
        %p156 = pneg %p80
        %p157 = pneg %p77
        %p158 = pneg %p106
        %p159 = pneg %p103
        %s160 = sand.u32 %s93, 1
        %s161 = scalar_lea.sflag [#allocation3], %s160
        %s162 = sand.u32 %s93, 1
        %s163 = smul.addr %s162, 4
        %s164 = scalar_lea.vmem [#allocation2], %s163
        %s165 = smul.u32 64, %s17
        %p166 = scmp.lt.s32.totalorder %s165, 127
        %s167 = scalar_select %p166, %s165, 127
        %s168 = smul.addr %s167, 8
        %s169 = scalar_lea.vmem %s0, %s168
        %s170 = smul.u32 64, %s17
        %s171 = smul.u32 4, %s17
        %v173 = vld [vmem:[%s169] sm:$0xff]
        %v174 = vld [vmem:[%s169 + $0x8] sm:$0xff]
        %v175 = vld [vmem:[%s169 + $0x10] sm:$0xff]
        %v176 = vld [vmem:[%s169 + $0x18] sm:$0xff]
        %v177 = vld [vmem:[%s169 + $0x20] sm:$0xff]
        %v178 = vld [vmem:[%s169 + $0x28] sm:$0xff]
        %v179 = vld [vmem:[%s169 + $0x30] sm:$0xff]
        %v180 = vld [vmem:[%s169 + $0x38] sm:$0xff]
        %v181 = vld [vmem:[%s169 + $0x40] sm:$0xff]
        %v182 = vld [vmem:[%s169 + $0x48] sm:$0xff]
        %v183 = vld [vmem:[%s169 + $0x50] sm:$0xff]
        %v184 = vld [vmem:[%s169 + $0x58] sm:$0xff]
        %v185 = vld [vmem:[%s169 + $0x60] sm:$0xff]
        %v186 = vld [vmem:[%s169 + $0x68] sm:$0xff]
        %v187 = vld [vmem:[%s169 + $0x70] sm:$0xff]
        %v188 = vld [vmem:[%s169 + $0x78] sm:$0xff]
        %v189 = vld [vmem:[%s169 + $0x80] sm:$0xff]
        %v190 = vld [vmem:[%s169 + $0x88] sm:$0xff]
        %v191 = vld [vmem:[%s169 + $0x90] sm:$0xff]
        %v192 = vld [vmem:[%s169 + $0x98] sm:$0xff]
        %v193 = vld [vmem:[%s169 + $0xa0] sm:$0xff]
        %v194 = vld [vmem:[%s169 + $0xa8] sm:$0xff]
        %v195 = vld [vmem:[%s169 + $0xb0] sm:$0xff]
        %v196 = vld [vmem:[%s169 + $0xb8] sm:$0xff]
        %v197 = vld [vmem:[%s169 + $0xc0] sm:$0xff]
        %v198 = vld [vmem:[%s169 + $0xc8] sm:$0xff]
        %v199 = vld [vmem:[%s169 + $0xd0] sm:$0xff]
        %v200 = vld [vmem:[%s169 + $0xd8] sm:$0xff]
        %v201 = vld [vmem:[%s169 + $0xe0] sm:$0xff]
        %v202 = vld [vmem:[%s169 + $0xe8] sm:$0xff]
        %v203 = vld [vmem:[%s169 + $0xf0] sm:$0xff]
        %v204 = vld [vmem:[%s169 + $0xf8] sm:$0xff]
        %v205 = vld [vmem:[%s169 + $0x100] sm:$0xff]
        %v206 = vld [vmem:[%s169 + $0x108] sm:$0xff]
        %v207 = vld [vmem:[%s169 + $0x110] sm:$0xff]
        %v208 = vld [vmem:[%s169 + $0x118] sm:$0xff]
        %v209 = vld [vmem:[%s169 + $0x120] sm:$0xff]
        %v210 = vld [vmem:[%s169 + $0x128] sm:$0xff]
        %v211 = vld [vmem:[%s169 + $0x130] sm:$0xff]
        %v212 = vld [vmem:[%s169 + $0x138] sm:$0xff]
        %v213 = vld [vmem:[%s169 + $0x140] sm:$0xff]
        %v214 = vld [vmem:[%s169 + $0x148] sm:$0xff]
        %v215 = vld [vmem:[%s169 + $0x150] sm:$0xff]
        %v216 = vld [vmem:[%s169 + $0x158] sm:$0xff]
        %v217 = vld [vmem:[%s169 + $0x160] sm:$0xff]
        %v218 = vld [vmem:[%s169 + $0x168] sm:$0xff]
        %v219 = vld [vmem:[%s169 + $0x170] sm:$0xff]
        %v220 = vld [vmem:[%s169 + $0x178] sm:$0xff]
        %v221 = vld [vmem:[%s169 + $0x180] sm:$0xff]
        %v222 = vld [vmem:[%s169 + $0x188] sm:$0xff]
        %v223 = vld [vmem:[%s169 + $0x190] sm:$0xff]
        %v224 = vld [vmem:[%s169 + $0x198] sm:$0xff]
        %v225 = vld [vmem:[%s169 + $0x1a0] sm:$0xff]
        %v226 = vld [vmem:[%s169 + $0x1a8] sm:$0xff]
        %v227 = vld [vmem:[%s169 + $0x1b0] sm:$0xff]
        %v228 = vld [vmem:[%s169 + $0x1b8] sm:$0xff]
        %v229 = vld [vmem:[%s169 + $0x1c0] sm:$0xff]
        %v230 = vld [vmem:[%s169 + $0x1c8] sm:$0xff]
        %v231 = vld [vmem:[%s169 + $0x1d0] sm:$0xff]
        %v232 = vld [vmem:[%s169 + $0x1d8] sm:$0xff]
        %v233 = vld [vmem:[%s169 + $0x1e0] sm:$0xff]
        %v234 = vld [vmem:[%s169 + $0x1e8] sm:$0xff]
        %v235 = vld [vmem:[%s169 + $0x1f0] sm:$0xff]
        %v236 = vld [vmem:[%s169 + $0x1f8] sm:$0xff]
        %v237 = vpack.c.bf16 %v174, %v173
        %v238 = vpack.c.bf16 %v176, %v175
        %v239 = vpack.c.bf16 %v178, %v177
        %v240 = vpack.c.bf16 %v180, %v179
        %v241 = vpack.c.bf16 %v182, %v181
        %v242 = vpack.c.bf16 %v184, %v183
        %v243 = vpack.c.bf16 %v186, %v185
        %v244 = vpack.c.bf16 %v188, %v187
        %v245 = vpack.c.bf16 %v190, %v189
        %v246 = vpack.c.bf16 %v192, %v191
        %v247 = vpack.c.bf16 %v194, %v193
        %v248 = vpack.c.bf16 %v196, %v195
        %v249 = vpack.c.bf16 %v198, %v197
        %v250 = vpack.c.bf16 %v200, %v199
        %v251 = vpack.c.bf16 %v202, %v201
        %v252 = vpack.c.bf16 %v204, %v203
        %v253 = vpack.c.bf16 %v206, %v205
        %v254 = vpack.c.bf16 %v208, %v207
        %v255 = vpack.c.bf16 %v210, %v209
        %v256 = vpack.c.bf16 %v212, %v211
        %v257 = vpack.c.bf16 %v214, %v213
        %v258 = vpack.c.bf16 %v216, %v215
        %v259 = vpack.c.bf16 %v218, %v217
        %v260 = vpack.c.bf16 %v220, %v219
        %v261 = vpack.c.bf16 %v222, %v221
        %v262 = vpack.c.bf16 %v224, %v223
        %v263 = vpack.c.bf16 %v226, %v225
        %v264 = vpack.c.bf16 %v228, %v227
        %v265 = vpack.c.bf16 %v230, %v229
        %v266 = vpack.c.bf16 %v232, %v231
        %v267 = vpack.c.bf16 %v234, %v233
        %v268 = vpack.c.bf16 %v236, %v235
        %v269 = vcvt.f32.s32.to.zero.pseudo %v173
        %v270 = vcvt.f32.s32.to.zero.pseudo %v174
        %v271 = vcvt.f32.s32.to.zero.pseudo %v175
        %v272 = vcvt.f32.s32.to.zero.pseudo %v176
        %v273 = vcvt.f32.s32.to.zero.pseudo %v177
        %v274 = vcvt.f32.s32.to.zero.pseudo %v178
        %v275 = vcvt.f32.s32.to.zero.pseudo %v179
        %v276 = vcvt.f32.s32.to.zero.pseudo %v180
        %v277 = vcvt.f32.s32.to.zero.pseudo %v181
        %v278 = vcvt.f32.s32.to.zero.pseudo %v182
        %v279 = vcvt.f32.s32.to.zero.pseudo %v183
        %v280 = vcvt.f32.s32.to.zero.pseudo %v184
        %v281 = vcvt.f32.s32.to.zero.pseudo %v185
        %v282 = vcvt.f32.s32.to.zero.pseudo %v186
        %v283 = vcvt.f32.s32.to.zero.pseudo %v187
        %v284 = vcvt.f32.s32.to.zero.pseudo %v188
        %v285 = vcvt.f32.s32.to.zero.pseudo %v189
        %v286 = vcvt.f32.s32.to.zero.pseudo %v190
        %v287 = vcvt.f32.s32.to.zero.pseudo %v191
        %v288 = vcvt.f32.s32.to.zero.pseudo %v192
        %v289 = vcvt.f32.s32.to.zero.pseudo %v193
        %v290 = vcvt.f32.s32.to.zero.pseudo %v194
        %v291 = vcvt.f32.s32.to.zero.pseudo %v195
        %v292 = vcvt.f32.s32.to.zero.pseudo %v196
        %v293 = vcvt.f32.s32.to.zero.pseudo %v197
        %v294 = vcvt.f32.s32.to.zero.pseudo %v198
        %v295 = vcvt.f32.s32.to.zero.pseudo %v199
        %v296 = vcvt.f32.s32.to.zero.pseudo %v200
        %v297 = vcvt.f32.s32.to.zero.pseudo %v201
        %v298 = vcvt.f32.s32.to.zero.pseudo %v202
        %v299 = vcvt.f32.s32.to.zero.pseudo %v203
        %v300 = vcvt.f32.s32.to.zero.pseudo %v204
        %v301 = vcvt.f32.s32.to.zero.pseudo %v205
        %v302 = vcvt.f32.s32.to.zero.pseudo %v206
        %v303 = vcvt.f32.s32.to.zero.pseudo %v207
        %v304 = vcvt.f32.s32.to.zero.pseudo %v208
        %v305 = vcvt.f32.s32.to.zero.pseudo %v209
        %v306 = vcvt.f32.s32.to.zero.pseudo %v210
        %v307 = vcvt.f32.s32.to.zero.pseudo %v211
        %v308 = vcvt.f32.s32.to.zero.pseudo %v212
        %v309 = vcvt.f32.s32.to.zero.pseudo %v213
        %v310 = vcvt.f32.s32.to.zero.pseudo %v214
        %v311 = vcvt.f32.s32.to.zero.pseudo %v215
        %v312 = vcvt.f32.s32.to.zero.pseudo %v216
        %v313 = vcvt.f32.s32.to.zero.pseudo %v217
        %v314 = vcvt.f32.s32.to.zero.pseudo %v218
        %v315 = vcvt.f32.s32.to.zero.pseudo %v219
        %v316 = vcvt.f32.s32.to.zero.pseudo %v220
        %v317 = vcvt.f32.s32.to.zero.pseudo %v221
        %v318 = vcvt.f32.s32.to.zero.pseudo %v222
        %v319 = vcvt.f32.s32.to.zero.pseudo %v223
        %v320 = vcvt.f32.s32.to.zero.pseudo %v224
        %v321 = vcvt.f32.s32.to.zero.pseudo %v225
        %v322 = vcvt.f32.s32.to.zero.pseudo %v226
        %v323 = vcvt.f32.s32.to.zero.pseudo %v227
        %v324 = vcvt.f32.s32.to.zero.pseudo %v228
        %v325 = vcvt.f32.s32.to.zero.pseudo %v229
        %v326 = vcvt.f32.s32.to.zero.pseudo %v230
        %v327 = vcvt.f32.s32.to.zero.pseudo %v231
        %v328 = vcvt.f32.s32.to.zero.pseudo %v232
        %v329 = vcvt.f32.s32.to.zero.pseudo %v233
        %v330 = vcvt.f32.s32.to.zero.pseudo %v234
        %v331 = vcvt.f32.s32.to.zero.pseudo %v235
        %v332 = vcvt.f32.s32.to.zero.pseudo %v236
        %v333 = vadd.s32 %v269, 1
        %v334 = vadd.s32 %v270, 1
        %v335 = vadd.s32 %v271, 1
        %v336 = vadd.s32 %v272, 1
        %v337 = vadd.s32 %v273, 1
        %v338 = vadd.s32 %v274, 1
        %v339 = vadd.s32 %v275, 1
        %v340 = vadd.s32 %v276, 1
        %v341 = vadd.s32 %v277, 1
        %v342 = vadd.s32 %v278, 1
        %v343 = vadd.s32 %v279, 1
        %v344 = vadd.s32 %v280, 1
        %v345 = vadd.s32 %v281, 1
        %v346 = vadd.s32 %v282, 1
        %v347 = vadd.s32 %v283, 1
        %v348 = vadd.s32 %v284, 1
        %v349 = vadd.s32 %v285, 1
        %v350 = vadd.s32 %v286, 1
        %v351 = vadd.s32 %v287, 1
        %v352 = vadd.s32 %v288, 1
        %v353 = vadd.s32 %v289, 1
        %v354 = vadd.s32 %v290, 1
        %v355 = vadd.s32 %v291, 1
        %v356 = vadd.s32 %v292, 1
        %v357 = vadd.s32 %v293, 1
        %v358 = vadd.s32 %v294, 1
        %v359 = vadd.s32 %v295, 1
        %v360 = vadd.s32 %v296, 1
        %v361 = vadd.s32 %v297, 1
        %v362 = vadd.s32 %v298, 1
        %v363 = vadd.s32 %v299, 1
        %v364 = vadd.s32 %v300, 1
        %v365 = vadd.s32 %v301, 1
        %v366 = vadd.s32 %v302, 1
        %v367 = vadd.s32 %v303, 1
        %v368 = vadd.s32 %v304, 1
        %v369 = vadd.s32 %v305, 1
        %v370 = vadd.s32 %v306, 1
        %v371 = vadd.s32 %v307, 1
        %v372 = vadd.s32 %v308, 1
        %v373 = vadd.s32 %v309, 1
        %v374 = vadd.s32 %v310, 1
        %v375 = vadd.s32 %v311, 1
        %v376 = vadd.s32 %v312, 1
        %v377 = vadd.s32 %v313, 1
        %v378 = vadd.s32 %v314, 1
        %v379 = vadd.s32 %v315, 1
        %v380 = vadd.s32 %v316, 1
        %v381 = vadd.s32 %v317, 1
        %v382 = vadd.s32 %v318, 1
        %v383 = vadd.s32 %v319, 1
        %v384 = vadd.s32 %v320, 1
        %v385 = vadd.s32 %v321, 1
        %v386 = vadd.s32 %v322, 1
        %v387 = vadd.s32 %v323, 1
        %v388 = vadd.s32 %v324, 1
        %v389 = vadd.s32 %v325, 1
        %v390 = vadd.s32 %v326, 1
        %v391 = vadd.s32 %v327, 1
        %v392 = vadd.s32 %v328, 1
        %v393 = vadd.s32 %v329, 1
        %v394 = vadd.s32 %v330, 1
        %v395 = vadd.s32 %v331, 1
        %v396 = vadd.s32 %v332, 1
        %vm397 = vcmp.lt.s32.totalorder %v333, 63
        %v398 = vsel %vm397, %v333, 63
        %vm399 = vcmp.lt.s32.totalorder %v334, 63
        %v400 = vsel %vm399, %v334, 63
        %vm401 = vcmp.lt.s32.totalorder %v335, 63
        %v402 = vsel %vm401, %v335, 63
        %vm403 = vcmp.lt.s32.totalorder %v336, 63
        %v404 = vsel %vm403, %v336, 63
        %vm405 = vcmp.lt.s32.totalorder %v337, 63
        %v406 = vsel %vm405, %v337, 63
        %vm407 = vcmp.lt.s32.totalorder %v338, 63
        %v408 = vsel %vm407, %v338, 63
        %vm409 = vcmp.lt.s32.totalorder %v339, 63
        %v410 = vsel %vm409, %v339, 63
        %vm411 = vcmp.lt.s32.totalorder %v340, 63
        %v412 = vsel %vm411, %v340, 63
        %vm413 = vcmp.lt.s32.totalorder %v341, 63
        %v414 = vsel %vm413, %v341, 63
        %vm415 = vcmp.lt.s32.totalorder %v342, 63
        %v416 = vsel %vm415, %v342, 63
        %vm417 = vcmp.lt.s32.totalorder %v343, 63
        %v418 = vsel %vm417, %v343, 63
        %vm419 = vcmp.lt.s32.totalorder %v344, 63
        %v420 = vsel %vm419, %v344, 63
        %vm421 = vcmp.lt.s32.totalorder %v345, 63
        %v422 = vsel %vm421, %v345, 63
        %vm423 = vcmp.lt.s32.totalorder %v346, 63
        %v424 = vsel %vm423, %v346, 63
        %vm425 = vcmp.lt.s32.totalorder %v347, 63
        %v426 = vsel %vm425, %v347, 63
        %vm427 = vcmp.lt.s32.totalorder %v348, 63
        %v428 = vsel %vm427, %v348, 63
        %vm429 = vcmp.lt.s32.totalorder %v349, 63
        %v430 = vsel %vm429, %v349, 63
        %vm431 = vcmp.lt.s32.totalorder %v350, 63
        %v432 = vsel %vm431, %v350, 63
        %vm433 = vcmp.lt.s32.totalorder %v351, 63
        %v434 = vsel %vm433, %v351, 63
        %vm435 = vcmp.lt.s32.totalorder %v352, 63
        %v436 = vsel %vm435, %v352, 63
        %vm437 = vcmp.lt.s32.totalorder %v353, 63
        %v438 = vsel %vm437, %v353, 63
        %vm439 = vcmp.lt.s32.totalorder %v354, 63
        %v440 = vsel %vm439, %v354, 63
        %vm441 = vcmp.lt.s32.totalorder %v355, 63
        %v442 = vsel %vm441, %v355, 63
        %vm443 = vcmp.lt.s32.totalorder %v356, 63
        %v444 = vsel %vm443, %v356, 63
        %vm445 = vcmp.lt.s32.totalorder %v357, 63
        %v446 = vsel %vm445, %v357, 63
        %vm447 = vcmp.lt.s32.totalorder %v358, 63
        %v448 = vsel %vm447, %v358, 63
        %vm449 = vcmp.lt.s32.totalorder %v359, 63
        %v450 = vsel %vm449, %v359, 63
        %vm451 = vcmp.lt.s32.totalorder %v360, 63
        %v452 = vsel %vm451, %v360, 63
        %vm453 = vcmp.lt.s32.totalorder %v361, 63
        %v454 = vsel %vm453, %v361, 63
        %vm455 = vcmp.lt.s32.totalorder %v362, 63
        %v456 = vsel %vm455, %v362, 63
        %vm457 = vcmp.lt.s32.totalorder %v363, 63
        %v458 = vsel %vm457, %v363, 63
        %vm459 = vcmp.lt.s32.totalorder %v364, 63
        %v460 = vsel %vm459, %v364, 63
        %vm461 = vcmp.lt.s32.totalorder %v365, 63
        %v462 = vsel %vm461, %v365, 63
        %vm463 = vcmp.lt.s32.totalorder %v366, 63
        %v464 = vsel %vm463, %v366, 63
        %vm465 = vcmp.lt.s32.totalorder %v367, 63
        %v466 = vsel %vm465, %v367, 63
        %vm467 = vcmp.lt.s32.totalorder %v368, 63
        %v468 = vsel %vm467, %v368, 63
        %vm469 = vcmp.lt.s32.totalorder %v369, 63
        %v470 = vsel %vm469, %v369, 63
        %vm471 = vcmp.lt.s32.totalorder %v370, 63
        %v472 = vsel %vm471, %v370, 63
        %vm473 = vcmp.lt.s32.totalorder %v371, 63
        %v474 = vsel %vm473, %v371, 63
        %vm475 = vcmp.lt.s32.totalorder %v372, 63
        %v476 = vsel %vm475, %v372, 63
        %vm477 = vcmp.lt.s32.totalorder %v373, 63
        %v478 = vsel %vm477, %v373, 63
        %vm479 = vcmp.lt.s32.totalorder %v374, 63
        %v480 = vsel %vm479, %v374, 63
        %vm481 = vcmp.lt.s32.totalorder %v375, 63
        %v482 = vsel %vm481, %v375, 63
        %vm483 = vcmp.lt.s32.totalorder %v376, 63
        %v484 = vsel %vm483, %v376, 63
        %vm485 = vcmp.lt.s32.totalorder %v377, 63
        %v486 = vsel %vm485, %v377, 63
        %vm487 = vcmp.lt.s32.totalorder %v378, 63
        %v488 = vsel %vm487, %v378, 63
        %vm489 = vcmp.lt.s32.totalorder %v379, 63
        %v490 = vsel %vm489, %v379, 63
        %vm491 = vcmp.lt.s32.totalorder %v380, 63
        %v492 = vsel %vm491, %v380, 63
        %vm493 = vcmp.lt.s32.totalorder %v381, 63
        %v494 = vsel %vm493, %v381, 63
        %vm495 = vcmp.lt.s32.totalorder %v382, 63
        %v496 = vsel %vm495, %v382, 63
        %vm497 = vcmp.lt.s32.totalorder %v383, 63
        %v498 = vsel %vm497, %v383, 63
        %vm499 = vcmp.lt.s32.totalorder %v384, 63
        %v500 = vsel %vm499, %v384, 63
        %vm501 = vcmp.lt.s32.totalorder %v385, 63
        %v502 = vsel %vm501, %v385, 63
        %vm503 = vcmp.lt.s32.totalorder %v386, 63
        %v504 = vsel %vm503, %v386, 63
        %vm505 = vcmp.lt.s32.totalorder %v387, 63
        %v506 = vsel %vm505, %v387, 63
        %vm507 = vcmp.lt.s32.totalorder %v388, 63
        %v508 = vsel %vm507, %v388, 63
        %vm509 = vcmp.lt.s32.totalorder %v389, 63
        %v510 = vsel %vm509, %v389, 63
        %vm511 = vcmp.lt.s32.totalorder %v390, 63
        %v512 = vsel %vm511, %v390, 63
        %vm513 = vcmp.lt.s32.totalorder %v391, 63
        %v514 = vsel %vm513, %v391, 63
        %vm515 = vcmp.lt.s32.totalorder %v392, 63
        %v516 = vsel %vm515, %v392, 63
        %vm517 = vcmp.lt.s32.totalorder %v393, 63
        %v518 = vsel %vm517, %v393, 63
        %vm519 = vcmp.lt.s32.totalorder %v394, 63
        %v520 = vsel %vm519, %v394, 63
        %vm521 = vcmp.lt.s32.totalorder %v395, 63
        %v522 = vsel %vm521, %v395, 63
        %vm523 = vcmp.lt.s32.totalorder %v396, 63
        %v524 = vsel %vm523, %v396, 63
        %v525 = vcvt.s32.f32 %v269
        %v526 = vcvt.s32.f32 %v270
        %v527 = vcvt.s32.f32 %v271
        %v528 = vcvt.s32.f32 %v272
        %v529 = vcvt.s32.f32 %v273
        %v530 = vcvt.s32.f32 %v274
        %v531 = vcvt.s32.f32 %v275
        %v532 = vcvt.s32.f32 %v276
        %v533 = vcvt.s32.f32 %v277
        %v534 = vcvt.s32.f32 %v278
        %v535 = vcvt.s32.f32 %v279
        %v536 = vcvt.s32.f32 %v280
        %v537 = vcvt.s32.f32 %v281
        %v538 = vcvt.s32.f32 %v282
        %v539 = vcvt.s32.f32 %v283
        %v540 = vcvt.s32.f32 %v284
        %v541 = vcvt.s32.f32 %v285
        %v542 = vcvt.s32.f32 %v286
        %v543 = vcvt.s32.f32 %v287
        %v544 = vcvt.s32.f32 %v288
        %v545 = vcvt.s32.f32 %v289
        %v546 = vcvt.s32.f32 %v290
        %v547 = vcvt.s32.f32 %v291
        %v548 = vcvt.s32.f32 %v292
        %v549 = vcvt.s32.f32 %v293
        %v550 = vcvt.s32.f32 %v294
        %v551 = vcvt.s32.f32 %v295
        %v552 = vcvt.s32.f32 %v296
        %v553 = vcvt.s32.f32 %v297
        %v554 = vcvt.s32.f32 %v298
        %v555 = vcvt.s32.f32 %v299
        %v556 = vcvt.s32.f32 %v300
        %v557 = vcvt.s32.f32 %v301
        %v558 = vcvt.s32.f32 %v302
        %v559 = vcvt.s32.f32 %v303
        %v560 = vcvt.s32.f32 %v304
        %v561 = vcvt.s32.f32 %v305
        %v562 = vcvt.s32.f32 %v306
        %v563 = vcvt.s32.f32 %v307
        %v564 = vcvt.s32.f32 %v308
        %v565 = vcvt.s32.f32 %v309
        %v566 = vcvt.s32.f32 %v310
        %v567 = vcvt.s32.f32 %v311
        %v568 = vcvt.s32.f32 %v312
        %v569 = vcvt.s32.f32 %v313
        %v570 = vcvt.s32.f32 %v314
        %v571 = vcvt.s32.f32 %v315
        %v572 = vcvt.s32.f32 %v316
        %v573 = vcvt.s32.f32 %v317
        %v574 = vcvt.s32.f32 %v318
        %v575 = vcvt.s32.f32 %v319
        %v576 = vcvt.s32.f32 %v320
        %v577 = vcvt.s32.f32 %v321
        %v578 = vcvt.s32.f32 %v322
        %v579 = vcvt.s32.f32 %v323
        %v580 = vcvt.s32.f32 %v324
        %v581 = vcvt.s32.f32 %v325
        %v582 = vcvt.s32.f32 %v326
        %v583 = vcvt.s32.f32 %v327
        %v584 = vcvt.s32.f32 %v328
        %v585 = vcvt.s32.f32 %v329
        %v586 = vcvt.s32.f32 %v330
        %v587 = vcvt.s32.f32 %v331
        %v588 = vcvt.s32.f32 %v332
        %v589 = vsub.f32 %v173, %v525
        %v590 = vsub.f32 %v174, %v526
        %v591 = vsub.f32 %v175, %v527
        %v592 = vsub.f32 %v176, %v528
        %v593 = vsub.f32 %v177, %v529
        %v594 = vsub.f32 %v178, %v530
        %v595 = vsub.f32 %v179, %v531
        %v596 = vsub.f32 %v180, %v532
        %v597 = vsub.f32 %v181, %v533
        %v598 = vsub.f32 %v182, %v534
        %v599 = vsub.f32 %v183, %v535
        %v600 = vsub.f32 %v184, %v536
        %v601 = vsub.f32 %v185, %v537
        %v602 = vsub.f32 %v186, %v538
        %v603 = vsub.f32 %v187, %v539
        %v604 = vsub.f32 %v188, %v540
        %v605 = vsub.f32 %v189, %v541
        %v606 = vsub.f32 %v190, %v542
        %v607 = vsub.f32 %v191, %v543
        %v608 = vsub.f32 %v192, %v544
        %v609 = vsub.f32 %v193, %v545
        %v610 = vsub.f32 %v194, %v546
        %v611 = vsub.f32 %v195, %v547
        %v612 = vsub.f32 %v196, %v548
        %v613 = vsub.f32 %v197, %v549
        %v614 = vsub.f32 %v198, %v550
        %v615 = vsub.f32 %v199, %v551
        %v616 = vsub.f32 %v200, %v552
        %v617 = vsub.f32 %v201, %v553
        %v618 = vsub.f32 %v202, %v554
        %v619 = vsub.f32 %v203, %v555
        %v620 = vsub.f32 %v204, %v556
        %v621 = vsub.f32 %v205, %v557
        %v622 = vsub.f32 %v206, %v558
        %v623 = vsub.f32 %v207, %v559
        %v624 = vsub.f32 %v208, %v560
        %v625 = vsub.f32 %v209, %v561
        %v626 = vsub.f32 %v210, %v562
        %v627 = vsub.f32 %v211, %v563
        %v628 = vsub.f32 %v212, %v564
        %v629 = vsub.f32 %v213, %v565
        %v630 = vsub.f32 %v214, %v566
        %v631 = vsub.f32 %v215, %v567
        %v632 = vsub.f32 %v216, %v568
        %v633 = vsub.f32 %v217, %v569
        %v634 = vsub.f32 %v218, %v570
        %v635 = vsub.f32 %v219, %v571
        %v636 = vsub.f32 %v220, %v572
        %v637 = vsub.f32 %v221, %v573
        %v638 = vsub.f32 %v222, %v574
        %v639 = vsub.f32 %v223, %v575
        %v640 = vsub.f32 %v224, %v576
        %v641 = vsub.f32 %v225, %v577
        %v642 = vsub.f32 %v226, %v578
        %v643 = vsub.f32 %v227, %v579
        %v644 = vsub.f32 %v228, %v580
        %v645 = vsub.f32 %v229, %v581
        %v646 = vsub.f32 %v230, %v582
        %v647 = vsub.f32 %v231, %v583
        %v648 = vsub.f32 %v232, %v584
        %v649 = vsub.f32 %v233, %v585
        %v650 = vsub.f32 %v234, %v586
        %v651 = vsub.f32 %v235, %v587
        %v652 = vsub.f32 %v236, %v588
        %v653 = vlaneseq
        %v654 = vand.u32 %v653, 127
        %655 = vset.pattern.permute.xlu0 16
        %656 = vperm.xlu0 %655, %v269
        %v657 = vpop.permute.xlu0 %656
        %658 = vset.pattern.permute.xlu0 16
        %659 = vperm.xlu0 %658, %v270
        %v660 = vpop.permute.xlu0 %659
        %661 = vset.pattern.permute.xlu0 16
        %662 = vperm.xlu0 %661, %v271
        %v663 = vpop.permute.xlu0 %662
        %664 = vset.pattern.permute.xlu0 16
        %665 = vperm.xlu0 %664, %v272
        %v666 = vpop.permute.xlu0 %665
        %667 = vset.pattern.permute.xlu0 16
        %668 = vperm.xlu0 %667, %v273
        %v669 = vpop.permute.xlu0 %668
        %670 = vset.pattern.permute.xlu0 16
        %671 = vperm.xlu0 %670, %v274
        %v672 = vpop.permute.xlu0 %671
        %673 = vset.pattern.permute.xlu0 16
        %674 = vperm.xlu0 %673, %v275
        %v675 = vpop.permute.xlu0 %674
        %676 = vset.pattern.permute.xlu0 16
        %677 = vperm.xlu0 %676, %v276
        %v678 = vpop.permute.xlu0 %677
        %679 = vset.pattern.permute.xlu0 16
        %680 = vperm.xlu0 %679, %v277
        %v681 = vpop.permute.xlu0 %680
        %682 = vset.pattern.permute.xlu0 16
        %683 = vperm.xlu0 %682, %v278
        %v684 = vpop.permute.xlu0 %683
        %685 = vset.pattern.permute.xlu0 16
        %686 = vperm.xlu0 %685, %v279
        %v687 = vpop.permute.xlu0 %686
        %688 = vset.pattern.permute.xlu0 16
        %689 = vperm.xlu0 %688, %v280
        %v690 = vpop.permute.xlu0 %689
        %691 = vset.pattern.permute.xlu0 16
        %692 = vperm.xlu0 %691, %v281
        %v693 = vpop.permute.xlu0 %692
        %694 = vset.pattern.permute.xlu0 16
        %695 = vperm.xlu0 %694, %v282
        %v696 = vpop.permute.xlu0 %695
        %697 = vset.pattern.permute.xlu0 16
        %698 = vperm.xlu0 %697, %v283
        %v699 = vpop.permute.xlu0 %698
        %700 = vset.pattern.permute.xlu0 16
        %701 = vperm.xlu0 %700, %v284
        %v702 = vpop.permute.xlu0 %701
        %703 = vset.pattern.permute.xlu0 16
        %704 = vperm.xlu0 %703, %v285
        %v705 = vpop.permute.xlu0 %704
        %706 = vset.pattern.permute.xlu0 16
        %707 = vperm.xlu0 %706, %v286
        %v708 = vpop.permute.xlu0 %707
        %709 = vset.pattern.permute.xlu0 16
        %710 = vperm.xlu0 %709, %v287
        %v711 = vpop.permute.xlu0 %710
        %712 = vset.pattern.permute.xlu0 16
        %713 = vperm.xlu0 %712, %v288
        %v714 = vpop.permute.xlu0 %713
        %715 = vset.pattern.permute.xlu0 16
        %716 = vperm.xlu0 %715, %v289
        %v717 = vpop.permute.xlu0 %716
        %718 = vset.pattern.permute.xlu0 16
        %719 = vperm.xlu0 %718, %v290
        %v720 = vpop.permute.xlu0 %719
        %721 = vset.pattern.permute.xlu0 16
        %722 = vperm.xlu0 %721, %v291
        %v723 = vpop.permute.xlu0 %722
        %724 = vset.pattern.permute.xlu0 16
        %725 = vperm.xlu0 %724, %v292
        %v726 = vpop.permute.xlu0 %725
        %727 = vset.pattern.permute.xlu0 16
        %728 = vperm.xlu0 %727, %v293
        %v729 = vpop.permute.xlu0 %728
        %730 = vset.pattern.permute.xlu0 16
        %731 = vperm.xlu0 %730, %v294
        %v732 = vpop.permute.xlu0 %731
        %733 = vset.pattern.permute.xlu0 16
        %734 = vperm.xlu0 %733, %v295
        %v735 = vpop.permute.xlu0 %734
        %736 = vset.pattern.permute.xlu0 16
        %737 = vperm.xlu0 %736, %v296
        %v738 = vpop.permute.xlu0 %737
        %739 = vset.pattern.permute.xlu0 16
        %740 = vperm.xlu0 %739, %v297
        %v741 = vpop.permute.xlu0 %740
        %742 = vset.pattern.permute.xlu0 16
        %743 = vperm.xlu0 %742, %v298
        %v744 = vpop.permute.xlu0 %743
        %745 = vset.pattern.permute.xlu0 16
        %746 = vperm.xlu0 %745, %v299
        %v747 = vpop.permute.xlu0 %746
        %748 = vset.pattern.permute.xlu0 16
        %749 = vperm.xlu0 %748, %v300
        %v750 = vpop.permute.xlu0 %749
        %751 = vset.pattern.permute.xlu0 16
        %752 = vperm.xlu0 %751, %v301
        %v753 = vpop.permute.xlu0 %752
        %754 = vset.pattern.permute.xlu0 16
        %755 = vperm.xlu0 %754, %v302
        %v756 = vpop.permute.xlu0 %755
        %757 = vset.pattern.permute.xlu0 16
        %758 = vperm.xlu0 %757, %v303
        %v759 = vpop.permute.xlu0 %758
        %760 = vset.pattern.permute.xlu0 16
        %761 = vperm.xlu0 %760, %v304
        %v762 = vpop.permute.xlu0 %761
        %763 = vset.pattern.permute.xlu0 16
        %764 = vperm.xlu0 %763, %v305
        %v765 = vpop.permute.xlu0 %764
        %766 = vset.pattern.permute.xlu0 16
        %767 = vperm.xlu0 %766, %v306
        %v768 = vpop.permute.xlu0 %767
        %769 = vset.pattern.permute.xlu0 16
        %770 = vperm.xlu0 %769, %v307
        %v771 = vpop.permute.xlu0 %770
        %772 = vset.pattern.permute.xlu0 16
        %773 = vperm.xlu0 %772, %v308
        %v774 = vpop.permute.xlu0 %773
        %775 = vset.pattern.permute.xlu0 16
        %776 = vperm.xlu0 %775, %v309
        %v777 = vpop.permute.xlu0 %776
        %778 = vset.pattern.permute.xlu0 16
        %779 = vperm.xlu0 %778, %v310
        %v780 = vpop.permute.xlu0 %779
        %781 = vset.pattern.permute.xlu0 16
        %782 = vperm.xlu0 %781, %v311
        %v783 = vpop.permute.xlu0 %782
        %784 = vset.pattern.permute.xlu0 16
        %785 = vperm.xlu0 %784, %v312
        %v786 = vpop.permute.xlu0 %785
        %787 = vset.pattern.permute.xlu0 16
        %788 = vperm.xlu0 %787, %v313
        %v789 = vpop.permute.xlu0 %788
        %790 = vset.pattern.permute.xlu0 16
        %791 = vperm.xlu0 %790, %v314
        %v792 = vpop.permute.xlu0 %791
        %793 = vset.pattern.permute.xlu0 16
        %794 = vperm.xlu0 %793, %v315
        %v795 = vpop.permute.xlu0 %794
        %796 = vset.pattern.permute.xlu0 16
        %797 = vperm.xlu0 %796, %v316
        %v798 = vpop.permute.xlu0 %797
        %799 = vset.pattern.permute.xlu0 16
        %800 = vperm.xlu0 %799, %v317
        %v801 = vpop.permute.xlu0 %800
        %802 = vset.pattern.permute.xlu0 16
        %803 = vperm.xlu0 %802, %v318
        %v804 = vpop.permute.xlu0 %803
        %805 = vset.pattern.permute.xlu0 16
        %806 = vperm.xlu0 %805, %v319
        %v807 = vpop.permute.xlu0 %806
        %808 = vset.pattern.permute.xlu0 16
        %809 = vperm.xlu0 %808, %v320
        %v810 = vpop.permute.xlu0 %809
        %811 = vset.pattern.permute.xlu0 16
        %812 = vperm.xlu0 %811, %v321
        %v813 = vpop.permute.xlu0 %812
        %814 = vset.pattern.permute.xlu0 16
        %815 = vperm.xlu0 %814, %v322
        %v816 = vpop.permute.xlu0 %815
        %817 = vset.pattern.permute.xlu0 16
        %818 = vperm.xlu0 %817, %v323
        %v819 = vpop.permute.xlu0 %818
        %820 = vset.pattern.permute.xlu0 16
        %821 = vperm.xlu0 %820, %v324
        %v822 = vpop.permute.xlu0 %821
        %823 = vset.pattern.permute.xlu0 16
        %824 = vperm.xlu0 %823, %v325
        %v825 = vpop.permute.xlu0 %824
        %826 = vset.pattern.permute.xlu0 16
        %827 = vperm.xlu0 %826, %v326
        %v828 = vpop.permute.xlu0 %827
        %829 = vset.pattern.permute.xlu0 16
        %830 = vperm.xlu0 %829, %v327
        %v831 = vpop.permute.xlu0 %830
        %832 = vset.pattern.permute.xlu0 16
        %833 = vperm.xlu0 %832, %v328
        %v834 = vpop.permute.xlu0 %833
        %835 = vset.pattern.permute.xlu0 16
        %836 = vperm.xlu0 %835, %v329
        %v837 = vpop.permute.xlu0 %836
        %838 = vset.pattern.permute.xlu0 16
        %839 = vperm.xlu0 %838, %v330
        %v840 = vpop.permute.xlu0 %839
        %841 = vset.pattern.permute.xlu0 16
        %842 = vperm.xlu0 %841, %v331
        %v843 = vpop.permute.xlu0 %842
        %844 = vset.pattern.permute.xlu0 16
        %845 = vperm.xlu0 %844, %v332
        %v846 = vpop.permute.xlu0 %845
        %vm847 = vcmp.eq.s32.totalorder %v654, %v657
        %vm848 = vcmp.eq.s32.totalorder %v654, %v660
        %vm849 = vcmp.eq.s32.totalorder %v654, %v663
        %vm850 = vcmp.eq.s32.totalorder %v654, %v666
        %vm851 = vcmp.eq.s32.totalorder %v654, %v669
        %vm852 = vcmp.eq.s32.totalorder %v654, %v672
        %vm853 = vcmp.eq.s32.totalorder %v654, %v675
        %vm854 = vcmp.eq.s32.totalorder %v654, %v678
        %vm855 = vcmp.eq.s32.totalorder %v654, %v681
        %vm856 = vcmp.eq.s32.totalorder %v654, %v684
        %vm857 = vcmp.eq.s32.totalorder %v654, %v687
        %vm858 = vcmp.eq.s32.totalorder %v654, %v690
        %vm859 = vcmp.eq.s32.totalorder %v654, %v693
        %vm860 = vcmp.eq.s32.totalorder %v654, %v696
        %vm861 = vcmp.eq.s32.totalorder %v654, %v699
        %vm862 = vcmp.eq.s32.totalorder %v654, %v702
        %vm863 = vcmp.eq.s32.totalorder %v654, %v705
        %vm864 = vcmp.eq.s32.totalorder %v654, %v708
        %vm865 = vcmp.eq.s32.totalorder %v654, %v711
        %vm866 = vcmp.eq.s32.totalorder %v654, %v714
        %vm867 = vcmp.eq.s32.totalorder %v654, %v717
        %vm868 = vcmp.eq.s32.totalorder %v654, %v720
        %vm869 = vcmp.eq.s32.totalorder %v654, %v723
        %vm870 = vcmp.eq.s32.totalorder %v654, %v726
        %vm871 = vcmp.eq.s32.totalorder %v654, %v729
        %vm872 = vcmp.eq.s32.totalorder %v654, %v732
        %vm873 = vcmp.eq.s32.totalorder %v654, %v735
        %vm874 = vcmp.eq.s32.totalorder %v654, %v738
        %vm875 = vcmp.eq.s32.totalorder %v654, %v741
        %vm876 = vcmp.eq.s32.totalorder %v654, %v744
        %vm877 = vcmp.eq.s32.totalorder %v654, %v747
        %vm878 = vcmp.eq.s32.totalorder %v654, %v750
        %vm879 = vcmp.eq.s32.totalorder %v654, %v753
        %vm880 = vcmp.eq.s32.totalorder %v654, %v756
        %vm881 = vcmp.eq.s32.totalorder %v654, %v759
        %vm882 = vcmp.eq.s32.totalorder %v654, %v762
        %vm883 = vcmp.eq.s32.totalorder %v654, %v765
        %vm884 = vcmp.eq.s32.totalorder %v654, %v768
        %vm885 = vcmp.eq.s32.totalorder %v654, %v771
        %vm886 = vcmp.eq.s32.totalorder %v654, %v774
        %vm887 = vcmp.eq.s32.totalorder %v654, %v777
        %vm888 = vcmp.eq.s32.totalorder %v654, %v780
        %vm889 = vcmp.eq.s32.totalorder %v654, %v783
        %vm890 = vcmp.eq.s32.totalorder %v654, %v786
        %vm891 = vcmp.eq.s32.totalorder %v654, %v789
        %vm892 = vcmp.eq.s32.totalorder %v654, %v792
        %vm893 = vcmp.eq.s32.totalorder %v654, %v795
        %vm894 = vcmp.eq.s32.totalorder %v654, %v798
        %vm895 = vcmp.eq.s32.totalorder %v654, %v801
        %vm896 = vcmp.eq.s32.totalorder %v654, %v804
        %vm897 = vcmp.eq.s32.totalorder %v654, %v807
        %vm898 = vcmp.eq.s32.totalorder %v654, %v810
        %vm899 = vcmp.eq.s32.totalorder %v654, %v813
        %vm900 = vcmp.eq.s32.totalorder %v654, %v816
        %vm901 = vcmp.eq.s32.totalorder %v654, %v819
        %vm902 = vcmp.eq.s32.totalorder %v654, %v822
        %vm903 = vcmp.eq.s32.totalorder %v654, %v825
        %vm904 = vcmp.eq.s32.totalorder %v654, %v828
        %vm905 = vcmp.eq.s32.totalorder %v654, %v831
        %vm906 = vcmp.eq.s32.totalorder %v654, %v834
        %vm907 = vcmp.eq.s32.totalorder %v654, %v837
        %vm908 = vcmp.eq.s32.totalorder %v654, %v840
        %vm909 = vcmp.eq.s32.totalorder %v654, %v843
        %vm910 = vcmp.eq.s32.totalorder %v654, %v846
        %v911 = vsub.f32 1.0, %v589
        %v912 = vsub.f32 1.0, %v590
        %v913 = vsub.f32 1.0, %v591
        %v914 = vsub.f32 1.0, %v592
        %v915 = vsub.f32 1.0, %v593
        %v916 = vsub.f32 1.0, %v594
        %v917 = vsub.f32 1.0, %v595
        %v918 = vsub.f32 1.0, %v596
        %v919 = vsub.f32 1.0, %v597
        %v920 = vsub.f32 1.0, %v598
        %v921 = vsub.f32 1.0, %v599
        %v922 = vsub.f32 1.0, %v600
        %v923 = vsub.f32 1.0, %v601
        %v924 = vsub.f32 1.0, %v602
        %v925 = vsub.f32 1.0, %v603
        %v926 = vsub.f32 1.0, %v604
        %v927 = vsub.f32 1.0, %v605
        %v928 = vsub.f32 1.0, %v606
        %v929 = vsub.f32 1.0, %v607
        %v930 = vsub.f32 1.0, %v608
        %v931 = vsub.f32 1.0, %v609
        %v932 = vsub.f32 1.0, %v610
        %v933 = vsub.f32 1.0, %v611
        %v934 = vsub.f32 1.0, %v612
        %v935 = vsub.f32 1.0, %v613
        %v936 = vsub.f32 1.0, %v614
        %v937 = vsub.f32 1.0, %v615
        %v938 = vsub.f32 1.0, %v616
        %v939 = vsub.f32 1.0, %v617
        %v940 = vsub.f32 1.0, %v618
        %v941 = vsub.f32 1.0, %v619
        %v942 = vsub.f32 1.0, %v620
        %v943 = vsub.f32 1.0, %v621
        %v944 = vsub.f32 1.0, %v622
        %v945 = vsub.f32 1.0, %v623
        %v946 = vsub.f32 1.0, %v624
        %v947 = vsub.f32 1.0, %v625
        %v948 = vsub.f32 1.0, %v626
        %v949 = vsub.f32 1.0, %v627
        %v950 = vsub.f32 1.0, %v628
        %v951 = vsub.f32 1.0, %v629
        %v952 = vsub.f32 1.0, %v630
        %v953 = vsub.f32 1.0, %v631
        %v954 = vsub.f32 1.0, %v632
        %v955 = vsub.f32 1.0, %v633
        %v956 = vsub.f32 1.0, %v634
        %v957 = vsub.f32 1.0, %v635
        %v958 = vsub.f32 1.0, %v636
        %v959 = vsub.f32 1.0, %v637
        %v960 = vsub.f32 1.0, %v638
        %v961 = vsub.f32 1.0, %v639
        %v962 = vsub.f32 1.0, %v640
        %v963 = vsub.f32 1.0, %v641
        %v964 = vsub.f32 1.0, %v642
        %v965 = vsub.f32 1.0, %v643
        %v966 = vsub.f32 1.0, %v644
        %v967 = vsub.f32 1.0, %v645
        %v968 = vsub.f32 1.0, %v646
        %v969 = vsub.f32 1.0, %v647
        %v970 = vsub.f32 1.0, %v648
        %v971 = vsub.f32 1.0, %v649
        %v972 = vsub.f32 1.0, %v650
        %v973 = vsub.f32 1.0, %v651
        %v974 = vsub.f32 1.0, %v652
        %976 = vset.pattern.permute.xlu0 16
        %977 = vperm.xlu0 %976, %v911
        %v978 = vpop.permute.xlu0 %977
        %981 = vset.pattern.permute.xlu0 16
        %982 = vperm.xlu0 %981, %v912
        %v983 = vpop.permute.xlu0 %982
        %986 = vset.pattern.permute.xlu0 16
        %987 = vperm.xlu0 %986, %v913
        %v988 = vpop.permute.xlu0 %987
        %991 = vset.pattern.permute.xlu0 16
        %992 = vperm.xlu0 %991, %v914
        %v993 = vpop.permute.xlu0 %992
        %996 = vset.pattern.permute.xlu0 16
        %997 = vperm.xlu0 %996, %v915
        %v998 = vpop.permute.xlu0 %997
        %1001 = vset.pattern.permute.xlu0 16
        %1002 = vperm.xlu0 %1001, %v916
        %v1003 = vpop.permute.xlu0 %1002
        %1006 = vset.pattern.permute.xlu0 16
        %1007 = vperm.xlu0 %1006, %v917
        %v1008 = vpop.permute.xlu0 %1007
        %1011 = vset.pattern.permute.xlu0 16
        %1012 = vperm.xlu0 %1011, %v918
        %v1013 = vpop.permute.xlu0 %1012
        %1016 = vset.pattern.permute.xlu0 16
        %1017 = vperm.xlu0 %1016, %v919
        %v1018 = vpop.permute.xlu0 %1017
        %1021 = vset.pattern.permute.xlu0 16
        %1022 = vperm.xlu0 %1021, %v920
        %v1023 = vpop.permute.xlu0 %1022
        %1026 = vset.pattern.permute.xlu0 16
        %1027 = vperm.xlu0 %1026, %v921
        %v1028 = vpop.permute.xlu0 %1027
        %1031 = vset.pattern.permute.xlu0 16
        %1032 = vperm.xlu0 %1031, %v922
        %v1033 = vpop.permute.xlu0 %1032
        %1036 = vset.pattern.permute.xlu0 16
        %1037 = vperm.xlu0 %1036, %v923
        %v1038 = vpop.permute.xlu0 %1037
        %1041 = vset.pattern.permute.xlu0 16
        %1042 = vperm.xlu0 %1041, %v924
        %v1043 = vpop.permute.xlu0 %1042
        %1046 = vset.pattern.permute.xlu0 16
        %1047 = vperm.xlu0 %1046, %v925
        %v1048 = vpop.permute.xlu0 %1047
        %1051 = vset.pattern.permute.xlu0 16
        %1052 = vperm.xlu0 %1051, %v926
        %v1053 = vpop.permute.xlu0 %1052
        %1056 = vset.pattern.permute.xlu0 16
        %1057 = vperm.xlu0 %1056, %v927
        %v1058 = vpop.permute.xlu0 %1057
        %1061 = vset.pattern.permute.xlu0 16
        %1062 = vperm.xlu0 %1061, %v928
        %v1063 = vpop.permute.xlu0 %1062
        %1066 = vset.pattern.permute.xlu0 16
        %1067 = vperm.xlu0 %1066, %v929
        %v1068 = vpop.permute.xlu0 %1067
        %1071 = vset.pattern.permute.xlu0 16
        %1072 = vperm.xlu0 %1071, %v930
        %v1073 = vpop.permute.xlu0 %1072
        %1076 = vset.pattern.permute.xlu0 16
        %1077 = vperm.xlu0 %1076, %v931
        %v1078 = vpop.permute.xlu0 %1077
        %1081 = vset.pattern.permute.xlu0 16
        %1082 = vperm.xlu0 %1081, %v932
        %v1083 = vpop.permute.xlu0 %1082
        %1086 = vset.pattern.permute.xlu0 16
        %1087 = vperm.xlu0 %1086, %v933
        %v1088 = vpop.permute.xlu0 %1087
        %1091 = vset.pattern.permute.xlu0 16
        %1092 = vperm.xlu0 %1091, %v934
        %v1093 = vpop.permute.xlu0 %1092
        %1096 = vset.pattern.permute.xlu0 16
        %1097 = vperm.xlu0 %1096, %v935
        %v1098 = vpop.permute.xlu0 %1097
        %1101 = vset.pattern.permute.xlu0 16
        %1102 = vperm.xlu0 %1101, %v936
        %v1103 = vpop.permute.xlu0 %1102
        %1106 = vset.pattern.permute.xlu0 16
        %1107 = vperm.xlu0 %1106, %v937
        %v1108 = vpop.permute.xlu0 %1107
        %1111 = vset.pattern.permute.xlu0 16
        %1112 = vperm.xlu0 %1111, %v938
        %v1113 = vpop.permute.xlu0 %1112
        %1116 = vset.pattern.permute.xlu0 16
        %1117 = vperm.xlu0 %1116, %v939
        %v1118 = vpop.permute.xlu0 %1117
        %1121 = vset.pattern.permute.xlu0 16
        %1122 = vperm.xlu0 %1121, %v940
        %v1123 = vpop.permute.xlu0 %1122
        %1126 = vset.pattern.permute.xlu0 16
        %1127 = vperm.xlu0 %1126, %v941
        %v1128 = vpop.permute.xlu0 %1127
        %1131 = vset.pattern.permute.xlu0 16
        %1132 = vperm.xlu0 %1131, %v942
        %v1133 = vpop.permute.xlu0 %1132
        %1136 = vset.pattern.permute.xlu0 16
        %1137 = vperm.xlu0 %1136, %v943
        %v1138 = vpop.permute.xlu0 %1137
        %1141 = vset.pattern.permute.xlu0 16
        %1142 = vperm.xlu0 %1141, %v944
        %v1143 = vpop.permute.xlu0 %1142
        %1146 = vset.pattern.permute.xlu0 16
        %1147 = vperm.xlu0 %1146, %v945
        %v1148 = vpop.permute.xlu0 %1147
        %1151 = vset.pattern.permute.xlu0 16
        %1152 = vperm.xlu0 %1151, %v946
        %v1153 = vpop.permute.xlu0 %1152
        %1156 = vset.pattern.permute.xlu0 16
        %1157 = vperm.xlu0 %1156, %v947
        %v1158 = vpop.permute.xlu0 %1157
        %1161 = vset.pattern.permute.xlu0 16
        %1162 = vperm.xlu0 %1161, %v948
        %v1163 = vpop.permute.xlu0 %1162
        %1166 = vset.pattern.permute.xlu0 16
        %1167 = vperm.xlu0 %1166, %v949
        %v1168 = vpop.permute.xlu0 %1167
        %1171 = vset.pattern.permute.xlu0 16
        %1172 = vperm.xlu0 %1171, %v950
        %v1173 = vpop.permute.xlu0 %1172
        %1176 = vset.pattern.permute.xlu0 16
        %1177 = vperm.xlu0 %1176, %v951
        %v1178 = vpop.permute.xlu0 %1177
        %1181 = vset.pattern.permute.xlu0 16
        %1182 = vperm.xlu0 %1181, %v952
        %v1183 = vpop.permute.xlu0 %1182
        %1186 = vset.pattern.permute.xlu0 16
        %1187 = vperm.xlu0 %1186, %v953
        %v1188 = vpop.permute.xlu0 %1187
        %1191 = vset.pattern.permute.xlu0 16
        %1192 = vperm.xlu0 %1191, %v954
        %v1193 = vpop.permute.xlu0 %1192
        %1196 = vset.pattern.permute.xlu0 16
        %1197 = vperm.xlu0 %1196, %v955
        %v1198 = vpop.permute.xlu0 %1197
        %1201 = vset.pattern.permute.xlu0 16
        %1202 = vperm.xlu0 %1201, %v956
        %v1203 = vpop.permute.xlu0 %1202
        %1206 = vset.pattern.permute.xlu0 16
        %1207 = vperm.xlu0 %1206, %v957
        %v1208 = vpop.permute.xlu0 %1207
        %1211 = vset.pattern.permute.xlu0 16
        %1212 = vperm.xlu0 %1211, %v958
        %v1213 = vpop.permute.xlu0 %1212
        %1216 = vset.pattern.permute.xlu0 16
        %1217 = vperm.xlu0 %1216, %v959
        %v1218 = vpop.permute.xlu0 %1217
        %1221 = vset.pattern.permute.xlu0 16
        %1222 = vperm.xlu0 %1221, %v960
        %v1223 = vpop.permute.xlu0 %1222
        %1226 = vset.pattern.permute.xlu0 16
        %1227 = vperm.xlu0 %1226, %v961
        %v1228 = vpop.permute.xlu0 %1227
        %1231 = vset.pattern.permute.xlu0 16
        %1232 = vperm.xlu0 %1231, %v962
        %v1233 = vpop.permute.xlu0 %1232
        %1236 = vset.pattern.permute.xlu0 16
        %1237 = vperm.xlu0 %1236, %v963
        %v1238 = vpop.permute.xlu0 %1237
        %1241 = vset.pattern.permute.xlu0 16
        %1242 = vperm.xlu0 %1241, %v964
        %v1243 = vpop.permute.xlu0 %1242
        %1246 = vset.pattern.permute.xlu0 16
        %1247 = vperm.xlu0 %1246, %v965
        %v1248 = vpop.permute.xlu0 %1247
        %1251 = vset.pattern.permute.xlu0 16
        %1252 = vperm.xlu0 %1251, %v966
        %v1253 = vpop.permute.xlu0 %1252
        %1256 = vset.pattern.permute.xlu0 16
        %1257 = vperm.xlu0 %1256, %v967
        %v1258 = vpop.permute.xlu0 %1257
        %1261 = vset.pattern.permute.xlu0 16
        %1262 = vperm.xlu0 %1261, %v968
        %v1263 = vpop.permute.xlu0 %1262
        %1266 = vset.pattern.permute.xlu0 16
        %1267 = vperm.xlu0 %1266, %v969
        %v1268 = vpop.permute.xlu0 %1267
        %1271 = vset.pattern.permute.xlu0 16
        %1272 = vperm.xlu0 %1271, %v970
        %v1273 = vpop.permute.xlu0 %1272
        %1276 = vset.pattern.permute.xlu0 16
        %1277 = vperm.xlu0 %1276, %v971
        %v1278 = vpop.permute.xlu0 %1277
        %1281 = vset.pattern.permute.xlu0 16
        %1282 = vperm.xlu0 %1281, %v972
        %v1283 = vpop.permute.xlu0 %1282
        %1286 = vset.pattern.permute.xlu0 16
        %1287 = vperm.xlu0 %1286, %v973
        %v1288 = vpop.permute.xlu0 %1287
        %1291 = vset.pattern.permute.xlu0 16
        %1292 = vperm.xlu0 %1291, %v974
        %v1293 = vpop.permute.xlu0 %1292
        %v1295 = vsel %vm847, %v978, 0.0
        %v1296 = vsel %vm848, %v983, 0.0
        %v1297 = vsel %vm849, %v988, 0.0
        %v1298 = vsel %vm850, %v993, 0.0
        %v1299 = vsel %vm851, %v998, 0.0
        %v1300 = vsel %vm852, %v1003, 0.0
        %v1301 = vsel %vm853, %v1008, 0.0
        %v1302 = vsel %vm854, %v1013, 0.0
        %v1303 = vsel %vm855, %v1018, 0.0
        %v1304 = vsel %vm856, %v1023, 0.0
        %v1305 = vsel %vm857, %v1028, 0.0
        %v1306 = vsel %vm858, %v1033, 0.0
        %v1307 = vsel %vm859, %v1038, 0.0
        %v1308 = vsel %vm860, %v1043, 0.0
        %v1309 = vsel %vm861, %v1048, 0.0
        %v1310 = vsel %vm862, %v1053, 0.0
        %v1311 = vsel %vm863, %v1058, 0.0
        %v1312 = vsel %vm864, %v1063, 0.0
        %v1313 = vsel %vm865, %v1068, 0.0
        %v1314 = vsel %vm866, %v1073, 0.0
        %v1315 = vsel %vm867, %v1078, 0.0
        %v1316 = vsel %vm868, %v1083, 0.0
        %v1317 = vsel %vm869, %v1088, 0.0
        %v1318 = vsel %vm870, %v1093, 0.0
        %v1319 = vsel %vm871, %v1098, 0.0
        %v1320 = vsel %vm872, %v1103, 0.0
        %v1321 = vsel %vm873, %v1108, 0.0
        %v1322 = vsel %vm874, %v1113, 0.0
        %v1323 = vsel %vm875, %v1118, 0.0
        %v1324 = vsel %vm876, %v1123, 0.0
        %v1325 = vsel %vm877, %v1128, 0.0
        %v1326 = vsel %vm878, %v1133, 0.0
        %v1327 = vsel %vm879, %v1138, 0.0
        %v1328 = vsel %vm880, %v1143, 0.0
        %v1329 = vsel %vm881, %v1148, 0.0
        %v1330 = vsel %vm882, %v1153, 0.0
        %v1331 = vsel %vm883, %v1158, 0.0
        %v1332 = vsel %vm884, %v1163, 0.0
        %v1333 = vsel %vm885, %v1168, 0.0
        %v1334 = vsel %vm886, %v1173, 0.0
        %v1335 = vsel %vm887, %v1178, 0.0
        %v1336 = vsel %vm888, %v1183, 0.0
        %v1337 = vsel %vm889, %v1188, 0.0
        %v1338 = vsel %vm890, %v1193, 0.0
        %v1339 = vsel %vm891, %v1198, 0.0
        %v1340 = vsel %vm892, %v1203, 0.0
        %v1341 = vsel %vm893, %v1208, 0.0
        %v1342 = vsel %vm894, %v1213, 0.0
        %v1343 = vsel %vm895, %v1218, 0.0
        %v1344 = vsel %vm896, %v1223, 0.0
        %v1345 = vsel %vm897, %v1228, 0.0
        %v1346 = vsel %vm898, %v1233, 0.0
        %v1347 = vsel %vm899, %v1238, 0.0
        %v1348 = vsel %vm900, %v1243, 0.0
        %v1349 = vsel %vm901, %v1248, 0.0
        %v1350 = vsel %vm902, %v1253, 0.0
        %v1351 = vsel %vm903, %v1258, 0.0
        %v1352 = vsel %vm904, %v1263, 0.0
        %v1353 = vsel %vm905, %v1268, 0.0
        %v1354 = vsel %vm906, %v1273, 0.0
        %v1355 = vsel %vm907, %v1278, 0.0
        %v1356 = vsel %vm908, %v1283, 0.0
        %v1357 = vsel %vm909, %v1288, 0.0
        %v1358 = vsel %vm910, %v1293, 0.0
        %1359 = vset.pattern.permute.xlu0 16
        %1360 = vperm.xlu0 %1359, %v398
        %v1361 = vpop.permute.xlu0 %1360
        %1362 = vset.pattern.permute.xlu0 16
        %1363 = vperm.xlu0 %1362, %v400
        %v1364 = vpop.permute.xlu0 %1363
        %1365 = vset.pattern.permute.xlu0 16
        %1366 = vperm.xlu0 %1365, %v402
        %v1367 = vpop.permute.xlu0 %1366
        %1368 = vset.pattern.permute.xlu0 16
        %1369 = vperm.xlu0 %1368, %v404
        %v1370 = vpop.permute.xlu0 %1369
        %1371 = vset.pattern.permute.xlu0 16
        %1372 = vperm.xlu0 %1371, %v406
        %v1373 = vpop.permute.xlu0 %1372
        %1374 = vset.pattern.permute.xlu0 16
        %1375 = vperm.xlu0 %1374, %v408
        %v1376 = vpop.permute.xlu0 %1375
        %1377 = vset.pattern.permute.xlu0 16
        %1378 = vperm.xlu0 %1377, %v410
        %v1379 = vpop.permute.xlu0 %1378
        %1380 = vset.pattern.permute.xlu0 16
        %1381 = vperm.xlu0 %1380, %v412
        %v1382 = vpop.permute.xlu0 %1381
        %1383 = vset.pattern.permute.xlu0 16
        %1384 = vperm.xlu0 %1383, %v414
        %v1385 = vpop.permute.xlu0 %1384
        %1386 = vset.pattern.permute.xlu0 16
        %1387 = vperm.xlu0 %1386, %v416
        %v1388 = vpop.permute.xlu0 %1387
        %1389 = vset.pattern.permute.xlu0 16
        %1390 = vperm.xlu0 %1389, %v418
        %v1391 = vpop.permute.xlu0 %1390
        %1392 = vset.pattern.permute.xlu0 16
        %1393 = vperm.xlu0 %1392, %v420
        %v1394 = vpop.permute.xlu0 %1393
        %1395 = vset.pattern.permute.xlu0 16
        %1396 = vperm.xlu0 %1395, %v422
        %v1397 = vpop.permute.xlu0 %1396
        %1398 = vset.pattern.permute.xlu0 16
        %1399 = vperm.xlu0 %1398, %v424
        %v1400 = vpop.permute.xlu0 %1399
        %1401 = vset.pattern.permute.xlu0 16
        %1402 = vperm.xlu0 %1401, %v426
        %v1403 = vpop.permute.xlu0 %1402
        %1404 = vset.pattern.permute.xlu0 16
        %1405 = vperm.xlu0 %1404, %v428
        %v1406 = vpop.permute.xlu0 %1405
        %1407 = vset.pattern.permute.xlu0 16
        %1408 = vperm.xlu0 %1407, %v430
        %v1409 = vpop.permute.xlu0 %1408
        %1410 = vset.pattern.permute.xlu0 16
        %1411 = vperm.xlu0 %1410, %v432
        %v1412 = vpop.permute.xlu0 %1411
        %1413 = vset.pattern.permute.xlu0 16
        %1414 = vperm.xlu0 %1413, %v434
        %v1415 = vpop.permute.xlu0 %1414
        %1416 = vset.pattern.permute.xlu0 16
        %1417 = vperm.xlu0 %1416, %v436
        %v1418 = vpop.permute.xlu0 %1417
        %1419 = vset.pattern.permute.xlu0 16
        %1420 = vperm.xlu0 %1419, %v438
        %v1421 = vpop.permute.xlu0 %1420
        %1422 = vset.pattern.permute.xlu0 16
        %1423 = vperm.xlu0 %1422, %v440
        %v1424 = vpop.permute.xlu0 %1423
        %1425 = vset.pattern.permute.xlu0 16
        %1426 = vperm.xlu0 %1425, %v442
        %v1427 = vpop.permute.xlu0 %1426
        %1428 = vset.pattern.permute.xlu0 16
        %1429 = vperm.xlu0 %1428, %v444
        %v1430 = vpop.permute.xlu0 %1429
        %1431 = vset.pattern.permute.xlu0 16
        %1432 = vperm.xlu0 %1431, %v446
        %v1433 = vpop.permute.xlu0 %1432
        %1434 = vset.pattern.permute.xlu0 16
        %1435 = vperm.xlu0 %1434, %v448
        %v1436 = vpop.permute.xlu0 %1435
        %1437 = vset.pattern.permute.xlu0 16
        %1438 = vperm.xlu0 %1437, %v450
        %v1439 = vpop.permute.xlu0 %1438
        %1440 = vset.pattern.permute.xlu0 16
        %1441 = vperm.xlu0 %1440, %v452
        %v1442 = vpop.permute.xlu0 %1441
        %1443 = vset.pattern.permute.xlu0 16
        %1444 = vperm.xlu0 %1443, %v454
        %v1445 = vpop.permute.xlu0 %1444
        %1446 = vset.pattern.permute.xlu0 16
        %1447 = vperm.xlu0 %1446, %v456
        %v1448 = vpop.permute.xlu0 %1447
        %1449 = vset.pattern.permute.xlu0 16
        %1450 = vperm.xlu0 %1449, %v458
        %v1451 = vpop.permute.xlu0 %1450
        %1452 = vset.pattern.permute.xlu0 16
        %1453 = vperm.xlu0 %1452, %v460
        %v1454 = vpop.permute.xlu0 %1453
        %1455 = vset.pattern.permute.xlu0 16
        %1456 = vperm.xlu0 %1455, %v462
        %v1457 = vpop.permute.xlu0 %1456
        %1458 = vset.pattern.permute.xlu0 16
        %1459 = vperm.xlu0 %1458, %v464
        %v1460 = vpop.permute.xlu0 %1459
        %1461 = vset.pattern.permute.xlu0 16
        %1462 = vperm.xlu0 %1461, %v466
        %v1463 = vpop.permute.xlu0 %1462
        %1464 = vset.pattern.permute.xlu0 16
        %1465 = vperm.xlu0 %1464, %v468
        %v1466 = vpop.permute.xlu0 %1465
        %1467 = vset.pattern.permute.xlu0 16
        %1468 = vperm.xlu0 %1467, %v470
        %v1469 = vpop.permute.xlu0 %1468
        %1470 = vset.pattern.permute.xlu0 16
        %1471 = vperm.xlu0 %1470, %v472
        %v1472 = vpop.permute.xlu0 %1471
        %1473 = vset.pattern.permute.xlu0 16
        %1474 = vperm.xlu0 %1473, %v474
        %v1475 = vpop.permute.xlu0 %1474
        %1476 = vset.pattern.permute.xlu0 16
        %1477 = vperm.xlu0 %1476, %v476
        %v1478 = vpop.permute.xlu0 %1477
        %1479 = vset.pattern.permute.xlu0 16
        %1480 = vperm.xlu0 %1479, %v478
        %v1481 = vpop.permute.xlu0 %1480
        %1482 = vset.pattern.permute.xlu0 16
        %1483 = vperm.xlu0 %1482, %v480
        %v1484 = vpop.permute.xlu0 %1483
        %1485 = vset.pattern.permute.xlu0 16
        %1486 = vperm.xlu0 %1485, %v482
        %v1487 = vpop.permute.xlu0 %1486
        %1488 = vset.pattern.permute.xlu0 16
        %1489 = vperm.xlu0 %1488, %v484
        %v1490 = vpop.permute.xlu0 %1489
        %1491 = vset.pattern.permute.xlu0 16
        %1492 = vperm.xlu0 %1491, %v486
        %v1493 = vpop.permute.xlu0 %1492
        %1494 = vset.pattern.permute.xlu0 16
        %1495 = vperm.xlu0 %1494, %v488
        %v1496 = vpop.permute.xlu0 %1495
        %1497 = vset.pattern.permute.xlu0 16
        %1498 = vperm.xlu0 %1497, %v490
        %v1499 = vpop.permute.xlu0 %1498
        %1500 = vset.pattern.permute.xlu0 16
        %1501 = vperm.xlu0 %1500, %v492
        %v1502 = vpop.permute.xlu0 %1501
        %1503 = vset.pattern.permute.xlu0 16
        %1504 = vperm.xlu0 %1503, %v494
        %v1505 = vpop.permute.xlu0 %1504
        %1506 = vset.pattern.permute.xlu0 16
        %1507 = vperm.xlu0 %1506, %v496
        %v1508 = vpop.permute.xlu0 %1507
        %1509 = vset.pattern.permute.xlu0 16
        %1510 = vperm.xlu0 %1509, %v498
        %v1511 = vpop.permute.xlu0 %1510
        %1512 = vset.pattern.permute.xlu0 16
        %1513 = vperm.xlu0 %1512, %v500
        %v1514 = vpop.permute.xlu0 %1513
        %1515 = vset.pattern.permute.xlu0 16
        %1516 = vperm.xlu0 %1515, %v502
        %v1517 = vpop.permute.xlu0 %1516
        %1518 = vset.pattern.permute.xlu0 16
        %1519 = vperm.xlu0 %1518, %v504
        %v1520 = vpop.permute.xlu0 %1519
        %1521 = vset.pattern.permute.xlu0 16
        %1522 = vperm.xlu0 %1521, %v506
        %v1523 = vpop.permute.xlu0 %1522
        %1524 = vset.pattern.permute.xlu0 16
        %1525 = vperm.xlu0 %1524, %v508
        %v1526 = vpop.permute.xlu0 %1525
        %1527 = vset.pattern.permute.xlu0 16
        %1528 = vperm.xlu0 %1527, %v510
        %v1529 = vpop.permute.xlu0 %1528
        %1530 = vset.pattern.permute.xlu0 16
        %1531 = vperm.xlu0 %1530, %v512
        %v1532 = vpop.permute.xlu0 %1531
        %1533 = vset.pattern.permute.xlu0 16
        %1534 = vperm.xlu0 %1533, %v514
        %v1535 = vpop.permute.xlu0 %1534
        %1536 = vset.pattern.permute.xlu0 16
        %1537 = vperm.xlu0 %1536, %v516
        %v1538 = vpop.permute.xlu0 %1537
        %1539 = vset.pattern.permute.xlu0 16
        %1540 = vperm.xlu0 %1539, %v518
        %v1541 = vpop.permute.xlu0 %1540
        %1542 = vset.pattern.permute.xlu0 16
        %1543 = vperm.xlu0 %1542, %v520
        %v1544 = vpop.permute.xlu0 %1543
        %1545 = vset.pattern.permute.xlu0 16
        %1546 = vperm.xlu0 %1545, %v522
        %v1547 = vpop.permute.xlu0 %1546
        %1548 = vset.pattern.permute.xlu0 16
        %1549 = vperm.xlu0 %1548, %v524
        %v1550 = vpop.permute.xlu0 %1549
        %vm1551 = vcmp.eq.s32.totalorder %v654, %v1361
        %vm1552 = vcmp.eq.s32.totalorder %v654, %v1364
        %vm1553 = vcmp.eq.s32.totalorder %v654, %v1367
        %vm1554 = vcmp.eq.s32.totalorder %v654, %v1370
        %vm1555 = vcmp.eq.s32.totalorder %v654, %v1373
        %vm1556 = vcmp.eq.s32.totalorder %v654, %v1376
        %vm1557 = vcmp.eq.s32.totalorder %v654, %v1379
        %vm1558 = vcmp.eq.s32.totalorder %v654, %v1382
        %vm1559 = vcmp.eq.s32.totalorder %v654, %v1385
        %vm1560 = vcmp.eq.s32.totalorder %v654, %v1388
        %vm1561 = vcmp.eq.s32.totalorder %v654, %v1391
        %vm1562 = vcmp.eq.s32.totalorder %v654, %v1394
        %vm1563 = vcmp.eq.s32.totalorder %v654, %v1397
        %vm1564 = vcmp.eq.s32.totalorder %v654, %v1400
        %vm1565 = vcmp.eq.s32.totalorder %v654, %v1403
        %vm1566 = vcmp.eq.s32.totalorder %v654, %v1406
        %vm1567 = vcmp.eq.s32.totalorder %v654, %v1409
        %vm1568 = vcmp.eq.s32.totalorder %v654, %v1412
        %vm1569 = vcmp.eq.s32.totalorder %v654, %v1415
        %vm1570 = vcmp.eq.s32.totalorder %v654, %v1418
        %vm1571 = vcmp.eq.s32.totalorder %v654, %v1421
        %vm1572 = vcmp.eq.s32.totalorder %v654, %v1424
        %vm1573 = vcmp.eq.s32.totalorder %v654, %v1427
        %vm1574 = vcmp.eq.s32.totalorder %v654, %v1430
        %vm1575 = vcmp.eq.s32.totalorder %v654, %v1433
        %vm1576 = vcmp.eq.s32.totalorder %v654, %v1436
        %vm1577 = vcmp.eq.s32.totalorder %v654, %v1439
        %vm1578 = vcmp.eq.s32.totalorder %v654, %v1442
        %vm1579 = vcmp.eq.s32.totalorder %v654, %v1445
        %vm1580 = vcmp.eq.s32.totalorder %v654, %v1448
        %vm1581 = vcmp.eq.s32.totalorder %v654, %v1451
        %vm1582 = vcmp.eq.s32.totalorder %v654, %v1454
        %vm1583 = vcmp.eq.s32.totalorder %v654, %v1457
        %vm1584 = vcmp.eq.s32.totalorder %v654, %v1460
        %vm1585 = vcmp.eq.s32.totalorder %v654, %v1463
        %vm1586 = vcmp.eq.s32.totalorder %v654, %v1466
        %vm1587 = vcmp.eq.s32.totalorder %v654, %v1469
        %vm1588 = vcmp.eq.s32.totalorder %v654, %v1472
        %vm1589 = vcmp.eq.s32.totalorder %v654, %v1475
        %vm1590 = vcmp.eq.s32.totalorder %v654, %v1478
        %vm1591 = vcmp.eq.s32.totalorder %v654, %v1481
        %vm1592 = vcmp.eq.s32.totalorder %v654, %v1484
        %vm1593 = vcmp.eq.s32.totalorder %v654, %v1487
        %vm1594 = vcmp.eq.s32.totalorder %v654, %v1490
        %vm1595 = vcmp.eq.s32.totalorder %v654, %v1493
        %vm1596 = vcmp.eq.s32.totalorder %v654, %v1496
        %vm1597 = vcmp.eq.s32.totalorder %v654, %v1499
        %vm1598 = vcmp.eq.s32.totalorder %v654, %v1502
        %vm1599 = vcmp.eq.s32.totalorder %v654, %v1505
        %vm1600 = vcmp.eq.s32.totalorder %v654, %v1508
        %vm1601 = vcmp.eq.s32.totalorder %v654, %v1511
        %vm1602 = vcmp.eq.s32.totalorder %v654, %v1514
        %vm1603 = vcmp.eq.s32.totalorder %v654, %v1517
        %vm1604 = vcmp.eq.s32.totalorder %v654, %v1520
        %vm1605 = vcmp.eq.s32.totalorder %v654, %v1523
        %vm1606 = vcmp.eq.s32.totalorder %v654, %v1526
        %vm1607 = vcmp.eq.s32.totalorder %v654, %v1529
        %vm1608 = vcmp.eq.s32.totalorder %v654, %v1532
        %vm1609 = vcmp.eq.s32.totalorder %v654, %v1535
        %vm1610 = vcmp.eq.s32.totalorder %v654, %v1538
        %vm1611 = vcmp.eq.s32.totalorder %v654, %v1541
        %vm1612 = vcmp.eq.s32.totalorder %v654, %v1544
        %vm1613 = vcmp.eq.s32.totalorder %v654, %v1547
        %vm1614 = vcmp.eq.s32.totalorder %v654, %v1550
        %1616 = vset.pattern.permute.xlu0 16
        %1617 = vperm.xlu0 %1616, %v589
        %v1618 = vpop.permute.xlu0 %1617
        %1621 = vset.pattern.permute.xlu0 16
        %1622 = vperm.xlu0 %1621, %v590
        %v1623 = vpop.permute.xlu0 %1622
        %1626 = vset.pattern.permute.xlu0 16
        %1627 = vperm.xlu0 %1626, %v591
        %v1628 = vpop.permute.xlu0 %1627
        %1631 = vset.pattern.permute.xlu0 16
        %1632 = vperm.xlu0 %1631, %v592
        %v1633 = vpop.permute.xlu0 %1632
        %1636 = vset.pattern.permute.xlu0 16
        %1637 = vperm.xlu0 %1636, %v593
        %v1638 = vpop.permute.xlu0 %1637
        %1641 = vset.pattern.permute.xlu0 16
        %1642 = vperm.xlu0 %1641, %v594
        %v1643 = vpop.permute.xlu0 %1642
        %1646 = vset.pattern.permute.xlu0 16
        %1647 = vperm.xlu0 %1646, %v595
        %v1648 = vpop.permute.xlu0 %1647
        %1651 = vset.pattern.permute.xlu0 16
        %1652 = vperm.xlu0 %1651, %v596
        %v1653 = vpop.permute.xlu0 %1652
        %1656 = vset.pattern.permute.xlu0 16
        %1657 = vperm.xlu0 %1656, %v597
        %v1658 = vpop.permute.xlu0 %1657
        %1661 = vset.pattern.permute.xlu0 16
        %1662 = vperm.xlu0 %1661, %v598
        %v1663 = vpop.permute.xlu0 %1662
        %1666 = vset.pattern.permute.xlu0 16
        %1667 = vperm.xlu0 %1666, %v599
        %v1668 = vpop.permute.xlu0 %1667
        %1671 = vset.pattern.permute.xlu0 16
        %1672 = vperm.xlu0 %1671, %v600
        %v1673 = vpop.permute.xlu0 %1672
        %1676 = vset.pattern.permute.xlu0 16
        %1677 = vperm.xlu0 %1676, %v601
        %v1678 = vpop.permute.xlu0 %1677
        %1681 = vset.pattern.permute.xlu0 16
        %1682 = vperm.xlu0 %1681, %v602
        %v1683 = vpop.permute.xlu0 %1682
        %1686 = vset.pattern.permute.xlu0 16
        %1687 = vperm.xlu0 %1686, %v603
        %v1688 = vpop.permute.xlu0 %1687
        %1691 = vset.pattern.permute.xlu0 16
        %1692 = vperm.xlu0 %1691, %v604
        %v1693 = vpop.permute.xlu0 %1692
        %1696 = vset.pattern.permute.xlu0 16
        %1697 = vperm.xlu0 %1696, %v605
        %v1698 = vpop.permute.xlu0 %1697
        %1701 = vset.pattern.permute.xlu0 16
        %1702 = vperm.xlu0 %1701, %v606
        %v1703 = vpop.permute.xlu0 %1702
        %1706 = vset.pattern.permute.xlu0 16
        %1707 = vperm.xlu0 %1706, %v607
        %v1708 = vpop.permute.xlu0 %1707
        %1711 = vset.pattern.permute.xlu0 16
        %1712 = vperm.xlu0 %1711, %v608
        %v1713 = vpop.permute.xlu0 %1712
        %1716 = vset.pattern.permute.xlu0 16
        %1717 = vperm.xlu0 %1716, %v609
        %v1718 = vpop.permute.xlu0 %1717
        %1721 = vset.pattern.permute.xlu0 16
        %1722 = vperm.xlu0 %1721, %v610
        %v1723 = vpop.permute.xlu0 %1722
        %1726 = vset.pattern.permute.xlu0 16
        %1727 = vperm.xlu0 %1726, %v611
        %v1728 = vpop.permute.xlu0 %1727
        %1731 = vset.pattern.permute.xlu0 16
        %1732 = vperm.xlu0 %1731, %v612
        %v1733 = vpop.permute.xlu0 %1732
        %1736 = vset.pattern.permute.xlu0 16
        %1737 = vperm.xlu0 %1736, %v613
        %v1738 = vpop.permute.xlu0 %1737
        %1741 = vset.pattern.permute.xlu0 16
        %1742 = vperm.xlu0 %1741, %v614
        %v1743 = vpop.permute.xlu0 %1742
        %1746 = vset.pattern.permute.xlu0 16
        %1747 = vperm.xlu0 %1746, %v615
        %v1748 = vpop.permute.xlu0 %1747
        %1751 = vset.pattern.permute.xlu0 16
        %1752 = vperm.xlu0 %1751, %v616
        %v1753 = vpop.permute.xlu0 %1752
        %1756 = vset.pattern.permute.xlu0 16
        %1757 = vperm.xlu0 %1756, %v617
        %v1758 = vpop.permute.xlu0 %1757
        %1761 = vset.pattern.permute.xlu0 16
        %1762 = vperm.xlu0 %1761, %v618
        %v1763 = vpop.permute.xlu0 %1762
        %1766 = vset.pattern.permute.xlu0 16
        %1767 = vperm.xlu0 %1766, %v619
        %v1768 = vpop.permute.xlu0 %1767
        %1771 = vset.pattern.permute.xlu0 16
        %1772 = vperm.xlu0 %1771, %v620
        %v1773 = vpop.permute.xlu0 %1772
        %1776 = vset.pattern.permute.xlu0 16
        %1777 = vperm.xlu0 %1776, %v621
        %v1778 = vpop.permute.xlu0 %1777
        %1781 = vset.pattern.permute.xlu0 16
        %1782 = vperm.xlu0 %1781, %v622
        %v1783 = vpop.permute.xlu0 %1782
        %1786 = vset.pattern.permute.xlu0 16
        %1787 = vperm.xlu0 %1786, %v623
        %v1788 = vpop.permute.xlu0 %1787
        %1791 = vset.pattern.permute.xlu0 16
        %1792 = vperm.xlu0 %1791, %v624
        %v1793 = vpop.permute.xlu0 %1792
        %1796 = vset.pattern.permute.xlu0 16
        %1797 = vperm.xlu0 %1796, %v625
        %v1798 = vpop.permute.xlu0 %1797
        %1801 = vset.pattern.permute.xlu0 16
        %1802 = vperm.xlu0 %1801, %v626
        %v1803 = vpop.permute.xlu0 %1802
        %1806 = vset.pattern.permute.xlu0 16
        %1807 = vperm.xlu0 %1806, %v627
        %v1808 = vpop.permute.xlu0 %1807
        %1811 = vset.pattern.permute.xlu0 16
        %1812 = vperm.xlu0 %1811, %v628
        %v1813 = vpop.permute.xlu0 %1812
        %1816 = vset.pattern.permute.xlu0 16
        %1817 = vperm.xlu0 %1816, %v629
        %v1818 = vpop.permute.xlu0 %1817
        %1821 = vset.pattern.permute.xlu0 16
        %1822 = vperm.xlu0 %1821, %v630
        %v1823 = vpop.permute.xlu0 %1822
        %1826 = vset.pattern.permute.xlu0 16
        %1827 = vperm.xlu0 %1826, %v631
        %v1828 = vpop.permute.xlu0 %1827
        %1831 = vset.pattern.permute.xlu0 16
        %1832 = vperm.xlu0 %1831, %v632
        %v1833 = vpop.permute.xlu0 %1832
        %1836 = vset.pattern.permute.xlu0 16
        %1837 = vperm.xlu0 %1836, %v633
        %v1838 = vpop.permute.xlu0 %1837
        %1841 = vset.pattern.permute.xlu0 16
        %1842 = vperm.xlu0 %1841, %v634
        %v1843 = vpop.permute.xlu0 %1842
        %1846 = vset.pattern.permute.xlu0 16
        %1847 = vperm.xlu0 %1846, %v635
        %v1848 = vpop.permute.xlu0 %1847
        %1851 = vset.pattern.permute.xlu0 16
        %1852 = vperm.xlu0 %1851, %v636
        %v1853 = vpop.permute.xlu0 %1852
        %1856 = vset.pattern.permute.xlu0 16
        %1857 = vperm.xlu0 %1856, %v637
        %v1858 = vpop.permute.xlu0 %1857
        %1861 = vset.pattern.permute.xlu0 16
        %1862 = vperm.xlu0 %1861, %v638
        %v1863 = vpop.permute.xlu0 %1862
        %1866 = vset.pattern.permute.xlu0 16
        %1867 = vperm.xlu0 %1866, %v639
        %v1868 = vpop.permute.xlu0 %1867
        %1871 = vset.pattern.permute.xlu0 16
        %1872 = vperm.xlu0 %1871, %v640
        %v1873 = vpop.permute.xlu0 %1872
        %1876 = vset.pattern.permute.xlu0 16
        %1877 = vperm.xlu0 %1876, %v641
        %v1878 = vpop.permute.xlu0 %1877
        %1881 = vset.pattern.permute.xlu0 16
        %1882 = vperm.xlu0 %1881, %v642
        %v1883 = vpop.permute.xlu0 %1882
        %1886 = vset.pattern.permute.xlu0 16
        %1887 = vperm.xlu0 %1886, %v643
        %v1888 = vpop.permute.xlu0 %1887
        %1891 = vset.pattern.permute.xlu0 16
        %1892 = vperm.xlu0 %1891, %v644
        %v1893 = vpop.permute.xlu0 %1892
        %1896 = vset.pattern.permute.xlu0 16
        %1897 = vperm.xlu0 %1896, %v645
        %v1898 = vpop.permute.xlu0 %1897
        %1901 = vset.pattern.permute.xlu0 16
        %1902 = vperm.xlu0 %1901, %v646
        %v1903 = vpop.permute.xlu0 %1902
        %1906 = vset.pattern.permute.xlu0 16
        %1907 = vperm.xlu0 %1906, %v647
        %v1908 = vpop.permute.xlu0 %1907
        %1911 = vset.pattern.permute.xlu0 16
        %1912 = vperm.xlu0 %1911, %v648
        %v1913 = vpop.permute.xlu0 %1912
        %1916 = vset.pattern.permute.xlu0 16
        %1917 = vperm.xlu0 %1916, %v649
        %v1918 = vpop.permute.xlu0 %1917
        %1921 = vset.pattern.permute.xlu0 16
        %1922 = vperm.xlu0 %1921, %v650
        %v1923 = vpop.permute.xlu0 %1922
        %1926 = vset.pattern.permute.xlu0 16
        %1927 = vperm.xlu0 %1926, %v651
        %v1928 = vpop.permute.xlu0 %1927
        %1931 = vset.pattern.permute.xlu0 16
        %1932 = vperm.xlu0 %1931, %v652
        %v1933 = vpop.permute.xlu0 %1932
        %v1935 = vsel %vm1551, %v1618, 0.0
        %v1936 = vsel %vm1552, %v1623, 0.0
        %v1937 = vsel %vm1553, %v1628, 0.0
        %v1938 = vsel %vm1554, %v1633, 0.0
        %v1939 = vsel %vm1555, %v1638, 0.0
        %v1940 = vsel %vm1556, %v1643, 0.0
        %v1941 = vsel %vm1557, %v1648, 0.0
        %v1942 = vsel %vm1558, %v1653, 0.0
        %v1943 = vsel %vm1559, %v1658, 0.0
        %v1944 = vsel %vm1560, %v1663, 0.0
        %v1945 = vsel %vm1561, %v1668, 0.0
        %v1946 = vsel %vm1562, %v1673, 0.0
        %v1947 = vsel %vm1563, %v1678, 0.0
        %v1948 = vsel %vm1564, %v1683, 0.0
        %v1949 = vsel %vm1565, %v1688, 0.0
        %v1950 = vsel %vm1566, %v1693, 0.0
        %v1951 = vsel %vm1567, %v1698, 0.0
        %v1952 = vsel %vm1568, %v1703, 0.0
        %v1953 = vsel %vm1569, %v1708, 0.0
        %v1954 = vsel %vm1570, %v1713, 0.0
        %v1955 = vsel %vm1571, %v1718, 0.0
        %v1956 = vsel %vm1572, %v1723, 0.0
        %v1957 = vsel %vm1573, %v1728, 0.0
        %v1958 = vsel %vm1574, %v1733, 0.0
        %v1959 = vsel %vm1575, %v1738, 0.0
        %v1960 = vsel %vm1576, %v1743, 0.0
        %v1961 = vsel %vm1577, %v1748, 0.0
        %v1962 = vsel %vm1578, %v1753, 0.0
        %v1963 = vsel %vm1579, %v1758, 0.0
        %v1964 = vsel %vm1580, %v1763, 0.0
        %v1965 = vsel %vm1581, %v1768, 0.0
        %v1966 = vsel %vm1582, %v1773, 0.0
        %v1967 = vsel %vm1583, %v1778, 0.0
        %v1968 = vsel %vm1584, %v1783, 0.0
        %v1969 = vsel %vm1585, %v1788, 0.0
        %v1970 = vsel %vm1586, %v1793, 0.0
        %v1971 = vsel %vm1587, %v1798, 0.0
        %v1972 = vsel %vm1588, %v1803, 0.0
        %v1973 = vsel %vm1589, %v1808, 0.0
        %v1974 = vsel %vm1590, %v1813, 0.0
        %v1975 = vsel %vm1591, %v1818, 0.0
        %v1976 = vsel %vm1592, %v1823, 0.0
        %v1977 = vsel %vm1593, %v1828, 0.0
        %v1978 = vsel %vm1594, %v1833, 0.0
        %v1979 = vsel %vm1595, %v1838, 0.0
        %v1980 = vsel %vm1596, %v1843, 0.0
        %v1981 = vsel %vm1597, %v1848, 0.0
        %v1982 = vsel %vm1598, %v1853, 0.0
        %v1983 = vsel %vm1599, %v1858, 0.0
        %v1984 = vsel %vm1600, %v1863, 0.0
        %v1985 = vsel %vm1601, %v1868, 0.0
        %v1986 = vsel %vm1602, %v1873, 0.0
        %v1987 = vsel %vm1603, %v1878, 0.0
        %v1988 = vsel %vm1604, %v1883, 0.0
        %v1989 = vsel %vm1605, %v1888, 0.0
        %v1990 = vsel %vm1606, %v1893, 0.0
        %v1991 = vsel %vm1607, %v1898, 0.0
        %v1992 = vsel %vm1608, %v1903, 0.0
        %v1993 = vsel %vm1609, %v1908, 0.0
        %v1994 = vsel %vm1610, %v1913, 0.0
        %v1995 = vsel %vm1611, %v1918, 0.0
        %v1996 = vsel %vm1612, %v1923, 0.0
        %v1997 = vsel %vm1613, %v1928, 0.0
        %v1998 = vsel %vm1614, %v1933, 0.0
        %v1999 = vadd.f32 %v1295, %v1935
        %v2000 = vadd.f32 %v1296, %v1936
        %v2001 = vadd.f32 %v1297, %v1937
        %v2002 = vadd.f32 %v1298, %v1938
        %v2003 = vadd.f32 %v1299, %v1939
        %v2004 = vadd.f32 %v1300, %v1940
        %v2005 = vadd.f32 %v1301, %v1941
        %v2006 = vadd.f32 %v1302, %v1942
        %v2007 = vadd.f32 %v1303, %v1943
        %v2008 = vadd.f32 %v1304, %v1944
        %v2009 = vadd.f32 %v1305, %v1945
        %v2010 = vadd.f32 %v1306, %v1946
        %v2011 = vadd.f32 %v1307, %v1947
        %v2012 = vadd.f32 %v1308, %v1948
        %v2013 = vadd.f32 %v1309, %v1949
        %v2014 = vadd.f32 %v1310, %v1950
        %v2015 = vadd.f32 %v1311, %v1951
        %v2016 = vadd.f32 %v1312, %v1952
        %v2017 = vadd.f32 %v1313, %v1953
        %v2018 = vadd.f32 %v1314, %v1954
        %v2019 = vadd.f32 %v1315, %v1955
        %v2020 = vadd.f32 %v1316, %v1956
        %v2021 = vadd.f32 %v1317, %v1957
        %v2022 = vadd.f32 %v1318, %v1958
        %v2023 = vadd.f32 %v1319, %v1959
        %v2024 = vadd.f32 %v1320, %v1960
        %v2025 = vadd.f32 %v1321, %v1961
        %v2026 = vadd.f32 %v1322, %v1962
        %v2027 = vadd.f32 %v1323, %v1963
        %v2028 = vadd.f32 %v1324, %v1964
        %v2029 = vadd.f32 %v1325, %v1965
        %v2030 = vadd.f32 %v1326, %v1966
        %v2031 = vadd.f32 %v1327, %v1967
        %v2032 = vadd.f32 %v1328, %v1968
        %v2033 = vadd.f32 %v1329, %v1969
        %v2034 = vadd.f32 %v1330, %v1970
        %v2035 = vadd.f32 %v1331, %v1971
        %v2036 = vadd.f32 %v1332, %v1972
        %v2037 = vadd.f32 %v1333, %v1973
        %v2038 = vadd.f32 %v1334, %v1974
        %v2039 = vadd.f32 %v1335, %v1975
        %v2040 = vadd.f32 %v1336, %v1976
        %v2041 = vadd.f32 %v1337, %v1977
        %v2042 = vadd.f32 %v1338, %v1978
        %v2043 = vadd.f32 %v1339, %v1979
        %v2044 = vadd.f32 %v1340, %v1980
        %v2045 = vadd.f32 %v1341, %v1981
        %v2046 = vadd.f32 %v1342, %v1982
        %v2047 = vadd.f32 %v1343, %v1983
        %v2048 = vadd.f32 %v1344, %v1984
        %v2049 = vadd.f32 %v1345, %v1985
        %v2050 = vadd.f32 %v1346, %v1986
        %v2051 = vadd.f32 %v1347, %v1987
        %v2052 = vadd.f32 %v1348, %v1988
        %v2053 = vadd.f32 %v1349, %v1989
        %v2054 = vadd.f32 %v1350, %v1990
        %v2055 = vadd.f32 %v1351, %v1991
        %v2056 = vadd.f32 %v1352, %v1992
        %v2057 = vadd.f32 %v1353, %v1993
        %v2058 = vadd.f32 %v1354, %v1994
        %v2059 = vadd.f32 %v1355, %v1995
        %v2060 = vadd.f32 %v1356, %v1996
        %v2061 = vadd.f32 %v1357, %v1997
        %v2062 = vadd.f32 %v1358, %v1998
        %v2063 = vpack.c.bf16 %v2000, %v1999
        %v2064 = vpack.c.bf16 %v2002, %v2001
        %v2065 = vpack.c.bf16 %v2004, %v2003
        %v2066 = vpack.c.bf16 %v2006, %v2005
        %v2067 = vpack.c.bf16 %v2008, %v2007
        %v2068 = vpack.c.bf16 %v2010, %v2009
        %v2069 = vpack.c.bf16 %v2012, %v2011
        %v2070 = vpack.c.bf16 %v2014, %v2013
        %v2071 = vpack.c.bf16 %v2016, %v2015
        %v2072 = vpack.c.bf16 %v2018, %v2017
        %v2073 = vpack.c.bf16 %v2020, %v2019
        %v2074 = vpack.c.bf16 %v2022, %v2021
        %v2075 = vpack.c.bf16 %v2024, %v2023
        %v2076 = vpack.c.bf16 %v2026, %v2025
        %v2077 = vpack.c.bf16 %v2028, %v2027
        %v2078 = vpack.c.bf16 %v2030, %v2029
        %v2079 = vpack.c.bf16 %v2032, %v2031
        %v2080 = vpack.c.bf16 %v2034, %v2033
        %v2081 = vpack.c.bf16 %v2036, %v2035
        %v2082 = vpack.c.bf16 %v2038, %v2037
        %v2083 = vpack.c.bf16 %v2040, %v2039
        %v2084 = vpack.c.bf16 %v2042, %v2041
        %v2085 = vpack.c.bf16 %v2044, %v2043
        %v2086 = vpack.c.bf16 %v2046, %v2045
        %v2087 = vpack.c.bf16 %v2048, %v2047
        %v2088 = vpack.c.bf16 %v2050, %v2049
        %v2089 = vpack.c.bf16 %v2052, %v2051
        %v2090 = vpack.c.bf16 %v2054, %v2053
        %v2091 = vpack.c.bf16 %v2056, %v2055
        %v2092 = vpack.c.bf16 %v2058, %v2057
        %v2093 = vpack.c.bf16 %v2060, %v2059
        %v2094 = vpack.c.bf16 %v2062, %v2061
        %v2095 = vld [vmem:[%s1] sm:$0xf]
        %v2096 = vld [vmem:[%s1 + $0x4] sm:$0xf]
        %v2097 = vld [vmem:[%s1 + $0x8] sm:$0xf]
        %v2098 = vld [vmem:[%s1 + $0xc] sm:$0xf]
        %v2099 = vld [vmem:[%s1 + $0x10] sm:$0xf]
        %v2100 = vld [vmem:[%s1 + $0x14] sm:$0xf]
        %v2101 = vld [vmem:[%s1 + $0x18] sm:$0xf]
        %v2102 = vld [vmem:[%s1 + $0x1c] sm:$0xf]
        %v2103 = vld [vmem:[%s1 + $0x20] sm:$0xf]
        %v2104 = vld [vmem:[%s1 + $0x24] sm:$0xf]
        %v2105 = vld [vmem:[%s1 + $0x28] sm:$0xf]
        %v2106 = vld [vmem:[%s1 + $0x2c] sm:$0xf]
        %v2107 = vld [vmem:[%s1 + $0x30] sm:$0xf]
        %v2108 = vld [vmem:[%s1 + $0x34] sm:$0xf]
        %v2109 = vld [vmem:[%s1 + $0x38] sm:$0xf]
        %v2110 = vld [vmem:[%s1 + $0x3c] sm:$0xf]
        %v2111 = vld [vmem:[%s1 + $0x40] sm:$0xf]
        %v2112 = vld [vmem:[%s1 + $0x44] sm:$0xf]
        %v2113 = vld [vmem:[%s1 + $0x48] sm:$0xf]
        %v2114 = vld [vmem:[%s1 + $0x4c] sm:$0xf]
        %v2115 = vld [vmem:[%s1 + $0x50] sm:$0xf]
        %v2116 = vld [vmem:[%s1 + $0x54] sm:$0xf]
        %v2117 = vld [vmem:[%s1 + $0x58] sm:$0xf]
        %v2118 = vld [vmem:[%s1 + $0x5c] sm:$0xf]
        %v2119 = vld [vmem:[%s1 + $0x60] sm:$0xf]
        %v2120 = vld [vmem:[%s1 + $0x64] sm:$0xf]
        %v2129 = vunpack.c.l.b16 %v2097
        %v2130 = vunpack.c.l.b16 %v2098
        %v2131 = vunpack.c.l.b16 %v2099
        %v2132 = vunpack.c.l.b16 %v2100
        %v2133 = vunpack.c.l.b16 %v2101
        %v2134 = vunpack.c.l.b16 %v2102
        %v2135 = vunpack.c.l.b16 %v2103
        %v2136 = vunpack.c.l.b16 %v2104
        %v2137 = vpack.c.b16 %v2130, %v2129
        %v2138 = vpack.c.b16 %v2132, %v2131
        %v2139 = vpack.c.b16 %v2134, %v2133
        %v2140 = vpack.c.b16 %v2136, %v2135
        %vm2145 = vcmask 523264
        %v2147 = vsel %vm2145, %v2063, 0
        %v2150 = vsel %vm2145, %v2064, 0
        %v2153 = vsel %vm2145, %v2065, 0
        %v2156 = vsel %vm2145, %v2066, 0
        %v2159 = vsel %vm2145, %v2067, 0
        %v2162 = vsel %vm2145, %v2068, 0
        %v2165 = vsel %vm2145, %v2069, 0
        %v2168 = vsel %vm2145, %v2070, 0
        %v2171 = vsel %vm2145, %v2071, 0
        %v2174 = vsel %vm2145, %v2072, 0
        %v2177 = vsel %vm2145, %v2073, 0
        %v2180 = vsel %vm2145, %v2074, 0
        %v2183 = vsel %vm2145, %v2075, 0
        %v2186 = vsel %vm2145, %v2076, 0
        %v2189 = vsel %vm2145, %v2077, 0
        %v2192 = vsel %vm2145, %v2078, 0
        %v2195 = vsel %vm2145, %v2079, 0
        %v2198 = vsel %vm2145, %v2080, 0
        %v2201 = vsel %vm2145, %v2081, 0
        %v2204 = vsel %vm2145, %v2082, 0
        %v2207 = vsel %vm2145, %v2083, 0
        %v2210 = vsel %vm2145, %v2084, 0
        %v2213 = vsel %vm2145, %v2085, 0
        %v2216 = vsel %vm2145, %v2086, 0
        %v2219 = vsel %vm2145, %v2087, 0
        %v2222 = vsel %vm2145, %v2088, 0
        %v2225 = vsel %vm2145, %v2089, 0
        %v2228 = vsel %vm2145, %v2090, 0
        %v2231 = vsel %vm2145, %v2091, 0
        %v2234 = vsel %vm2145, %v2092, 0
        %v2237 = vsel %vm2145, %v2093, 0
        %v2240 = vsel %vm2145, %v2094, 0
        %2242 = vmatprep.subr.bf16.mxu0 0
        %2243 = vmatpush1.bf16.msra.mxu0 %v2137
        %2244 = vmatprep.subr.bf16.mxu0 0
        %2245 = vmatpush1.bf16.msra.mxu0 %v2138
        %2246 = vmatprep.subr.bf16.mxu0 0
        %2247 = vmatpush1.bf16.msra.mxu0 %v2139
        %2248 = vmatprep.subr.bf16.mxu0 0
        %2249 = vmatpush1.bf16.msra.mxu0 %v2140
        %2250 = vmatprep.subr.bf16.mxu0 0
        %2251 = vmatpush1.bf16.msra.mxu0 0
        %2252 = vmatprep.subr.bf16.mxu0 0
        %2253 = vmatpush1.bf16.msra.mxu0 0
        %2254 = vmatprep.subr.bf16.mxu0 0
        %2255 = vmatpush1.bf16.msra.mxu0 0
        %2256 = vmatprep.subr.bf16.mxu0 0
        %2257 = vmatpush1.bf16.msra.mxu0 0
        %2258 = vmatprep.subr.bf16.mxu0 0
        %2259 = vmatpush1.bf16.msra.mxu0 0
        %2260 = vmatprep.subr.bf16.mxu0 0
        %2261 = vmatpush1.bf16.msra.mxu0 0
        %2262 = vmatprep.subr.bf16.mxu0 0
        %2263 = vmatpush1.bf16.msra.mxu0 0
        %2264 = vmatprep.subr.bf16.mxu0 0
        %2265 = vmatpush1.bf16.msra.mxu0 0
        %2266 = vmatprep.subr.bf16.mxu0 0
        %2267 = vmatpush1.bf16.msra.mxu0 0
        %2268 = vmatprep.subr.bf16.mxu0 0
        %2269 = vmatpush1.bf16.msra.mxu0 0
        %2270 = vmatprep.subr.bf16.mxu0 0
        %2271 = vmatpush1.bf16.msra.mxu0 0
        %2272 = vmatprep.subr.bf16.mxu0 0
        %2273 = vmatpush1.bf16.msra.mxu0 0
        %2274 = vmatprep.mubr.bf16.mxu0 0
        %2275 = vmatmul.mubr.bf16.gmra.mrb[0].mxu0 %v2147
        %v2276 = vpop.f32.mrb[0].mxu0
        %v2277 = vadd.f32 0.0, %v2276
        %v2278 = vpop.f32.mrb[0].mxu0
        %v2279 = vpop.f32.mrb[0].mxu0
        %v2280 = vadd.f32 0.0, %v2279
        %v2281 = vpop.f32.mrb[0].mxu0
        %2282 = vmatprep.mubr.bf16.mxu0 0
        %2283 = vmatmul.mubr.bf16.gmra.mrb[0].mxu0 %v2150
        %v2284 = vpop.f32.mrb[0].mxu0
        %v2285 = vadd.f32 0.0, %v2284
        %v2286 = vpop.f32.mrb[0].mxu0
        %v2287 = vpop.f32.mrb[0].mxu0
        %v2288 = vadd.f32 0.0, %v2287
        %v2289 = vpop.f32.mrb[0].mxu0
        %2290 = vmatprep.mubr.bf16.mxu0 0
        %2291 = vmatmul.mubr.bf16.gmra.mrb[0].mxu0 %v2153
        %v2292 = vpop.f32.mrb[0].mxu0
        %v2293 = vadd.f32 0.0, %v2292
        %v2294 = vpop.f32.mrb[0].mxu0
        %v2295 = vpop.f32.mrb[0].mxu0
        %v2296 = vadd.f32 0.0, %v2295
        %v2297 = vpop.f32.mrb[0].mxu0
        %2298 = vmatprep.mubr.bf16.mxu0 0
        %2299 = vmatmul.mubr.bf16.gmra.mrb[0].mxu0 %v2156
        %v2300 = vpop.f32.mrb[0].mxu0
        %v2301 = vadd.f32 0.0, %v2300
        %v2302 = vpop.f32.mrb[0].mxu0
        %v2303 = vpop.f32.mrb[0].mxu0
        %v2304 = vadd.f32 0.0, %v2303
        %v2305 = vpop.f32.mrb[0].mxu0
        %2306 = vmatprep.mubr.bf16.mxu0 0
        %2307 = vmatmul.mubr.bf16.gmra.mrb[0].mxu0 %v2159
        %v2308 = vpop.f32.mrb[0].mxu0
        %v2309 = vadd.f32 0.0, %v2308
        %v2310 = vpop.f32.mrb[0].mxu0
        %v2311 = vpop.f32.mrb[0].mxu0
        %v2312 = vadd.f32 0.0, %v2311
        %v2313 = vpop.f32.mrb[0].mxu0
        %2314 = vmatprep.mubr.bf16.mxu0 0
        %2315 = vmatmul.mubr.bf16.gmra.mrb[0].mxu0 %v2162
        %v2316 = vpop.f32.mrb[0].mxu0
        %v2317 = vadd.f32 0.0, %v2316
        %v2318 = vpop.f32.mrb[0].mxu0
        %v2319 = vpop.f32.mrb[0].mxu0
        %v2320 = vadd.f32 0.0, %v2319
        %v2321 = vpop.f32.mrb[0].mxu0
        %2322 = vmatprep.mubr.bf16.mxu0 0
        %2323 = vmatmul.mubr.bf16.gmra.mrb[0].mxu0 %v2165
        %v2324 = vpop.f32.mrb[0].mxu0
        %v2325 = vadd.f32 0.0, %v2324
        %v2326 = vpop.f32.mrb[0].mxu0
        %v2327 = vpop.f32.mrb[0].mxu0
        %v2328 = vadd.f32 0.0, %v2327
        %v2329 = vpop.f32.mrb[0].mxu0
        %2330 = vmatprep.mubr.bf16.mxu0 0
        %2331 = vmatmul.mubr.bf16.gmra.mrb[0].mxu0 %v2168
        %v2332 = vpop.f32.mrb[0].mxu0
        %v2333 = vadd.f32 0.0, %v2332
        %v2334 = vpop.f32.mrb[0].mxu0
        %v2335 = vpop.f32.mrb[0].mxu0
        %v2336 = vadd.f32 0.0, %v2335
        %v2337 = vpop.f32.mrb[0].mxu0
        %2338 = vmatprep.mubr.bf16.mxu0 0
        %2339 = vmatmul.mubr.bf16.gmra.mrb[0].mxu0 %v2171
        %v2340 = vpop.f32.mrb[0].mxu0
        %v2341 = vadd.f32 0.0, %v2340
        %v2342 = vpop.f32.mrb[0].mxu0
        %v2343 = vpop.f32.mrb[0].mxu0
        %v2344 = vadd.f32 0.0, %v2343
        %v2345 = vpop.f32.mrb[0].mxu0
        %2346 = vmatprep.mubr.bf16.mxu0 0
        %2347 = vmatmul.mubr.bf16.gmra.mrb[0].mxu0 %v2174
        %v2348 = vpop.f32.mrb[0].mxu0
        %v2349 = vadd.f32 0.0, %v2348
        %v2350 = vpop.f32.mrb[0].mxu0
        %v2351 = vpop.f32.mrb[0].mxu0
        %v2352 = vadd.f32 0.0, %v2351
        %v2353 = vpop.f32.mrb[0].mxu0
        %2354 = vmatprep.mubr.bf16.mxu0 0
        %2355 = vmatmul.mubr.bf16.gmra.mrb[0].mxu0 %v2177
        %v2356 = vpop.f32.mrb[0].mxu0
        %v2357 = vadd.f32 0.0, %v2356
        %v2358 = vpop.f32.mrb[0].mxu0
        %v2359 = vpop.f32.mrb[0].mxu0
        %v2360 = vadd.f32 0.0, %v2359
        %v2361 = vpop.f32.mrb[0].mxu0
        %2362 = vmatprep.mubr.bf16.mxu0 0
        %2363 = vmatmul.mubr.bf16.gmra.mrb[0].mxu0 %v2180
        %v2364 = vpop.f32.mrb[0].mxu0
        %v2365 = vadd.f32 0.0, %v2364
        %v2366 = vpop.f32.mrb[0].mxu0
        %v2367 = vpop.f32.mrb[0].mxu0
        %v2368 = vadd.f32 0.0, %v2367
        %v2369 = vpop.f32.mrb[0].mxu0
        %2370 = vmatprep.mubr.bf16.mxu0 0
        %2371 = vmatmul.mubr.bf16.gmra.mrb[0].mxu0 %v2183
        %v2372 = vpop.f32.mrb[0].mxu0
        %v2373 = vadd.f32 0.0, %v2372
        %v2374 = vpop.f32.mrb[0].mxu0
        %v2375 = vpop.f32.mrb[0].mxu0
        %v2376 = vadd.f32 0.0, %v2375
        %v2377 = vpop.f32.mrb[0].mxu0
        %2378 = vmatprep.mubr.bf16.mxu0 0
        %2379 = vmatmul.mubr.bf16.gmra.mrb[0].mxu0 %v2186
        %v2380 = vpop.f32.mrb[0].mxu0
        %v2381 = vadd.f32 0.0, %v2380
        %v2382 = vpop.f32.mrb[0].mxu0
        %v2383 = vpop.f32.mrb[0].mxu0
        %v2384 = vadd.f32 0.0, %v2383
        %v2385 = vpop.f32.mrb[0].mxu0
        %2386 = vmatprep.mubr.bf16.mxu0 0
        %2387 = vmatmul.mubr.bf16.gmra.mrb[0].mxu0 %v2189
        %v2388 = vpop.f32.mrb[0].mxu0
        %v2389 = vadd.f32 0.0, %v2388
        %v2390 = vpop.f32.mrb[0].mxu0
        %v2391 = vpop.f32.mrb[0].mxu0
        %v2392 = vadd.f32 0.0, %v2391
        %v2393 = vpop.f32.mrb[0].mxu0
        %2394 = vmatprep.mubr.bf16.mxu0 0
        %2395 = vmatmul.mubr.bf16.gmra.mrb[0].mxu0 %v2192
        %v2396 = vpop.f32.mrb[0].mxu0
        %v2397 = vadd.f32 0.0, %v2396
        %v2398 = vpop.f32.mrb[0].mxu0
        %v2399 = vpop.f32.mrb[0].mxu0
        %v2400 = vadd.f32 0.0, %v2399
        %v2401 = vpop.f32.mrb[0].mxu0
        %2402 = vmatprep.mubr.bf16.mxu0 0
        %2403 = vmatmul.mubr.bf16.gmra.mrb[0].mxu0 %v2195
        %v2404 = vpop.f32.mrb[0].mxu0
        %v2405 = vadd.f32 0.0, %v2404
        %v2406 = vpop.f32.mrb[0].mxu0
        %v2407 = vpop.f32.mrb[0].mxu0
        %v2408 = vadd.f32 0.0, %v2407
        %v2409 = vpop.f32.mrb[0].mxu0
        %2410 = vmatprep.mubr.bf16.mxu0 0
        %2411 = vmatmul.mubr.bf16.gmra.mrb[0].mxu0 %v2198
        %v2412 = vpop.f32.mrb[0].mxu0
        %v2413 = vadd.f32 0.0, %v2412
        %v2414 = vpop.f32.mrb[0].mxu0
        %v2415 = vpop.f32.mrb[0].mxu0
        %v2416 = vadd.f32 0.0, %v2415
        %v2417 = vpop.f32.mrb[0].mxu0
        %2418 = vmatprep.mubr.bf16.mxu0 0
        %2419 = vmatmul.mubr.bf16.gmra.mrb[0].mxu0 %v2201
        %v2420 = vpop.f32.mrb[0].mxu0
        %v2421 = vadd.f32 0.0, %v2420
        %v2422 = vpop.f32.mrb[0].mxu0
        %v2423 = vpop.f32.mrb[0].mxu0
        %v2424 = vadd.f32 0.0, %v2423
        %v2425 = vpop.f32.mrb[0].mxu0
        %2426 = vmatprep.mubr.bf16.mxu0 0
        %2427 = vmatmul.mubr.bf16.gmra.mrb[0].mxu0 %v2204
        %v2428 = vpop.f32.mrb[0].mxu0
        %v2429 = vadd.f32 0.0, %v2428
        %v2430 = vpop.f32.mrb[0].mxu0
        %v2431 = vpop.f32.mrb[0].mxu0
        %v2432 = vadd.f32 0.0, %v2431
        %v2433 = vpop.f32.mrb[0].mxu0
        %2434 = vmatprep.mubr.bf16.mxu0 0
        %2435 = vmatmul.mubr.bf16.gmra.mrb[0].mxu0 %v2207
        %v2436 = vpop.f32.mrb[0].mxu0
        %v2437 = vadd.f32 0.0, %v2436
        %v2438 = vpop.f32.mrb[0].mxu0
        %v2439 = vpop.f32.mrb[0].mxu0
        %v2440 = vadd.f32 0.0, %v2439
        %v2441 = vpop.f32.mrb[0].mxu0
        %2442 = vmatprep.mubr.bf16.mxu0 0
        %2443 = vmatmul.mubr.bf16.gmra.mrb[0].mxu0 %v2210
        %v2444 = vpop.f32.mrb[0].mxu0
        %v2445 = vadd.f32 0.0, %v2444
        %v2446 = vpop.f32.mrb[0].mxu0
        %v2447 = vpop.f32.mrb[0].mxu0
        %v2448 = vadd.f32 0.0, %v2447
        %v2449 = vpop.f32.mrb[0].mxu0
        %2450 = vmatprep.mubr.bf16.mxu0 0
        %2451 = vmatmul.mubr.bf16.gmra.mrb[0].mxu0 %v2213
        %v2452 = vpop.f32.mrb[0].mxu0
        %v2453 = vadd.f32 0.0, %v2452
        %v2454 = vpop.f32.mrb[0].mxu0
        %v2455 = vpop.f32.mrb[0].mxu0
        %v2456 = vadd.f32 0.0, %v2455
        %v2457 = vpop.f32.mrb[0].mxu0
        %2458 = vmatprep.mubr.bf16.mxu0 0
        %2459 = vmatmul.mubr.bf16.gmra.mrb[0].mxu0 %v2216
        %v2460 = vpop.f32.mrb[0].mxu0
        %v2461 = vadd.f32 0.0, %v2460
        %v2462 = vpop.f32.mrb[0].mxu0
        %v2463 = vpop.f32.mrb[0].mxu0
        %v2464 = vadd.f32 0.0, %v2463
        %v2465 = vpop.f32.mrb[0].mxu0
        %2466 = vmatprep.mubr.bf16.mxu0 0
        %2467 = vmatmul.mubr.bf16.gmra.mrb[0].mxu0 %v2219
        %v2468 = vpop.f32.mrb[0].mxu0
        %v2469 = vadd.f32 0.0, %v2468
        %v2470 = vpop.f32.mrb[0].mxu0
        %v2471 = vpop.f32.mrb[0].mxu0
        %v2472 = vadd.f32 0.0, %v2471
        %v2473 = vpop.f32.mrb[0].mxu0
        %2474 = vmatprep.mubr.bf16.mxu0 0
        %2475 = vmatmul.mubr.bf16.gmra.mrb[0].mxu0 %v2222
        %v2476 = vpop.f32.mrb[0].mxu0
        %v2477 = vadd.f32 0.0, %v2476
        %v2478 = vpop.f32.mrb[0].mxu0
        %v2479 = vpop.f32.mrb[0].mxu0
        %v2480 = vadd.f32 0.0, %v2479
        %v2481 = vpop.f32.mrb[0].mxu0
        %2482 = vmatprep.mubr.bf16.mxu0 0
        %2483 = vmatmul.mubr.bf16.gmra.mrb[0].mxu0 %v2225
        %v2484 = vpop.f32.mrb[0].mxu0
        %v2485 = vadd.f32 0.0, %v2484
        %v2486 = vpop.f32.mrb[0].mxu0
        %v2487 = vpop.f32.mrb[0].mxu0
        %v2488 = vadd.f32 0.0, %v2487
        %v2489 = vpop.f32.mrb[0].mxu0
        %2490 = vmatprep.mubr.bf16.mxu0 0
        %2491 = vmatmul.mubr.bf16.gmra.mrb[0].mxu0 %v2228
        %v2492 = vpop.f32.mrb[0].mxu0
        %v2493 = vadd.f32 0.0, %v2492
        %v2494 = vpop.f32.mrb[0].mxu0
        %v2495 = vpop.f32.mrb[0].mxu0
        %v2496 = vadd.f32 0.0, %v2495
        %v2497 = vpop.f32.mrb[0].mxu0
        %2498 = vmatprep.mubr.bf16.mxu0 0
        %2499 = vmatmul.mubr.bf16.gmra.mrb[0].mxu0 %v2231
        %v2500 = vpop.f32.mrb[0].mxu0
        %v2501 = vadd.f32 0.0, %v2500
        %v2502 = vpop.f32.mrb[0].mxu0
        %v2503 = vpop.f32.mrb[0].mxu0
        %v2504 = vadd.f32 0.0, %v2503
        %v2505 = vpop.f32.mrb[0].mxu0
        %2506 = vmatprep.mubr.bf16.mxu0 0
        %2507 = vmatmul.mubr.bf16.gmra.mrb[0].mxu0 %v2234
        %v2508 = vpop.f32.mrb[0].mxu0
        %v2509 = vadd.f32 0.0, %v2508
        %v2510 = vpop.f32.mrb[0].mxu0
        %v2511 = vpop.f32.mrb[0].mxu0
        %v2512 = vadd.f32 0.0, %v2511
        %v2513 = vpop.f32.mrb[0].mxu0
        %2514 = vmatprep.mubr.bf16.mxu0 0
        %2515 = vmatmul.mubr.bf16.gmra.mrb[0].mxu0 %v2237
        %v2516 = vpop.f32.mrb[0].mxu0
        %v2517 = vadd.f32 0.0, %v2516
        %v2518 = vpop.f32.mrb[0].mxu0
        %v2519 = vpop.f32.mrb[0].mxu0
        %v2520 = vadd.f32 0.0, %v2519
        %v2521 = vpop.f32.mrb[0].mxu0
        %2522 = vmatprep.mubr.bf16.mxu0 0
        %2523 = vmatmul.mubr.bf16.gmra.mrb[0].mxu0 %v2240
        %v2524 = vpop.f32.mrb[0].mxu0
        %v2525 = vadd.f32 0.0, %v2524
        %v2526 = vpop.f32.mrb[0].mxu0
        %v2527 = vpop.f32.mrb[0].mxu0
        %v2528 = vadd.f32 0.0, %v2527
        %v2529 = vpop.f32.mrb[0].mxu0
        %2530 = vdwg.mxu0
        %v2533 = vunpack.c.l.b16 %v2095
        %v2534 = vunpack.c.l.b16 %v2096
        %v2535 = vpack.c.b16 %v2534, %v2533
        %vm2537 = vcmask 130048
        %v2539 = vsel %vm2537, %v237, 0
        %v2542 = vsel %vm2537, %v238, 0
        %v2545 = vsel %vm2537, %v239, 0
        %v2548 = vsel %vm2537, %v240, 0
        %v2551 = vsel %vm2537, %v241, 0
        %v2554 = vsel %vm2537, %v242, 0
        %v2557 = vsel %vm2537, %v243, 0
        %v2560 = vsel %vm2537, %v244, 0
        %v2563 = vsel %vm2537, %v245, 0
        %v2566 = vsel %vm2537, %v246, 0
        %v2569 = vsel %vm2537, %v247, 0
        %v2572 = vsel %vm2537, %v248, 0
        %v2575 = vsel %vm2537, %v249, 0
        %v2578 = vsel %vm2537, %v250, 0
        %v2581 = vsel %vm2537, %v251, 0
        %v2584 = vsel %vm2537, %v252, 0
        %v2587 = vsel %vm2537, %v253, 0
        %v2590 = vsel %vm2537, %v254, 0
        %v2593 = vsel %vm2537, %v255, 0
        %v2596 = vsel %vm2537, %v256, 0
        %v2599 = vsel %vm2537, %v257, 0
        %v2602 = vsel %vm2537, %v258, 0
        %v2605 = vsel %vm2537, %v259, 0
        %v2608 = vsel %vm2537, %v260, 0
        %v2611 = vsel %vm2537, %v261, 0
        %v2614 = vsel %vm2537, %v262, 0
        %v2617 = vsel %vm2537, %v263, 0
        %v2620 = vsel %vm2537, %v264, 0
        %v2623 = vsel %vm2537, %v265, 0
        %v2626 = vsel %vm2537, %v266, 0
        %v2629 = vsel %vm2537, %v267, 0
        %v2632 = vsel %vm2537, %v268, 0
        %2634 = vmatprep.subr.bf16.mxu0 0
        %2635 = vmatpush1.bf16.msra.mxu0 %v2535
        %2636 = vmatprep.subr.bf16.mxu0 0
        %2637 = vmatpush1.bf16.msra.mxu0 0
        %2638 = vmatprep.subr.bf16.mxu0 0
        %2639 = vmatpush1.bf16.msra.mxu0 0
        %2640 = vmatprep.subr.bf16.mxu0 0
        %2641 = vmatpush1.bf16.msra.mxu0 0
        %2642 = vmatprep.subr.bf16.mxu0 0
        %2643 = vmatpush1.bf16.msra.mxu0 0
        %2644 = vmatprep.subr.bf16.mxu0 0
        %2645 = vmatpush1.bf16.msra.mxu0 0
        %2646 = vmatprep.subr.bf16.mxu0 0
        %2647 = vmatpush1.bf16.msra.mxu0 0
        %2648 = vmatprep.subr.bf16.mxu0 0
        %2649 = vmatpush1.bf16.msra.mxu0 0
        %2650 = vmatprep.subr.bf16.mxu0 0
        %2651 = vmatpush1.bf16.msra.mxu0 0
        %2652 = vmatprep.subr.bf16.mxu0 0
        %2653 = vmatpush1.bf16.msra.mxu0 0
        %2654 = vmatprep.subr.bf16.mxu0 0
        %2655 = vmatpush1.bf16.msra.mxu0 0
        %2656 = vmatprep.subr.bf16.mxu0 0
        %2657 = vmatpush1.bf16.msra.mxu0 0
        %2658 = vmatprep.subr.bf16.mxu0 0
        %2659 = vmatpush1.bf16.msra.mxu0 0
        %2660 = vmatprep.subr.bf16.mxu0 0
        %2661 = vmatpush1.bf16.msra.mxu0 0
        %2662 = vmatprep.subr.bf16.mxu0 0
        %2663 = vmatpush1.bf16.msra.mxu0 0
        %2664 = vmatprep.subr.bf16.mxu0 0
        %2665 = vmatpush1.bf16.msra.mxu0 0
        %2666 = vmatprep.mubr.bf16.mxu0 0
        %2667 = vmatmul.mubr.bf16.gmra.mrb[0].mxu0 %v2539
        %v2668 = vpop.f32.mrb[0].mxu0
        %v2669 = vadd.f32 %v2277, %v2668
        %v2670 = vpop.f32.mrb[0].mxu0
        %v2671 = vpop.f32.mrb[0].mxu0
        %v2672 = vadd.f32 %v2280, %v2671
        %v2673 = vpop.f32.mrb[0].mxu0
        %2674 = vmatprep.mubr.bf16.mxu0 0
        %2675 = vmatmul.mubr.bf16.gmra.mrb[0].mxu0 %v2542
        %v2676 = vpop.f32.mrb[0].mxu0
        %v2677 = vadd.f32 %v2285, %v2676
        %v2678 = vpop.f32.mrb[0].mxu0
        %v2679 = vpop.f32.mrb[0].mxu0
        %v2680 = vadd.f32 %v2288, %v2679
        %v2681 = vpop.f32.mrb[0].mxu0
        %2682 = vmatprep.mubr.bf16.mxu0 0
        %2683 = vmatmul.mubr.bf16.gmra.mrb[0].mxu0 %v2545
        %v2684 = vpop.f32.mrb[0].mxu0
        %v2685 = vadd.f32 %v2293, %v2684
        %v2686 = vpop.f32.mrb[0].mxu0
        %v2687 = vpop.f32.mrb[0].mxu0
        %v2688 = vadd.f32 %v2296, %v2687
        %v2689 = vpop.f32.mrb[0].mxu0
        %2690 = vmatprep.mubr.bf16.mxu0 0
        %2691 = vmatmul.mubr.bf16.gmra.mrb[0].mxu0 %v2548
        %v2692 = vpop.f32.mrb[0].mxu0
        %v2693 = vadd.f32 %v2301, %v2692
        %v2694 = vpop.f32.mrb[0].mxu0
        %v2695 = vpop.f32.mrb[0].mxu0
        %v2696 = vadd.f32 %v2304, %v2695
        %v2697 = vpop.f32.mrb[0].mxu0
        %2698 = vmatprep.mubr.bf16.mxu0 0
        %2699 = vmatmul.mubr.bf16.gmra.mrb[0].mxu0 %v2551
        %v2700 = vpop.f32.mrb[0].mxu0
        %v2701 = vadd.f32 %v2309, %v2700
        %v2702 = vpop.f32.mrb[0].mxu0
        %v2703 = vpop.f32.mrb[0].mxu0
        %v2704 = vadd.f32 %v2312, %v2703
        %v2705 = vpop.f32.mrb[0].mxu0
        %2706 = vmatprep.mubr.bf16.mxu0 0
        %2707 = vmatmul.mubr.bf16.gmra.mrb[0].mxu0 %v2554
        %v2708 = vpop.f32.mrb[0].mxu0
        %v2709 = vadd.f32 %v2317, %v2708
        %v2710 = vpop.f32.mrb[0].mxu0
        %v2711 = vpop.f32.mrb[0].mxu0
        %v2712 = vadd.f32 %v2320, %v2711
        %v2713 = vpop.f32.mrb[0].mxu0
        %2714 = vmatprep.mubr.bf16.mxu0 0
        %2715 = vmatmul.mubr.bf16.gmra.mrb[0].mxu0 %v2557
        %v2716 = vpop.f32.mrb[0].mxu0
        %v2717 = vadd.f32 %v2325, %v2716
        %v2718 = vpop.f32.mrb[0].mxu0
        %v2719 = vpop.f32.mrb[0].mxu0
        %v2720 = vadd.f32 %v2328, %v2719
        %v2721 = vpop.f32.mrb[0].mxu0
        %2722 = vmatprep.mubr.bf16.mxu0 0
        %2723 = vmatmul.mubr.bf16.gmra.mrb[0].mxu0 %v2560
        %v2724 = vpop.f32.mrb[0].mxu0
        %v2725 = vadd.f32 %v2333, %v2724
        %v2726 = vpop.f32.mrb[0].mxu0
        %v2727 = vpop.f32.mrb[0].mxu0
        %v2728 = vadd.f32 %v2336, %v2727
        %v2729 = vpop.f32.mrb[0].mxu0
        %2730 = vmatprep.mubr.bf16.mxu0 0
        %2731 = vmatmul.mubr.bf16.gmra.mrb[0].mxu0 %v2563
        %v2732 = vpop.f32.mrb[0].mxu0
        %v2733 = vadd.f32 %v2341, %v2732
        %v2734 = vpop.f32.mrb[0].mxu0
        %v2735 = vpop.f32.mrb[0].mxu0
        %v2736 = vadd.f32 %v2344, %v2735
        %v2737 = vpop.f32.mrb[0].mxu0
        %2738 = vmatprep.mubr.bf16.mxu0 0
        %2739 = vmatmul.mubr.bf16.gmra.mrb[0].mxu0 %v2566
        %v2740 = vpop.f32.mrb[0].mxu0
        %v2741 = vadd.f32 %v2349, %v2740
        %v2742 = vpop.f32.mrb[0].mxu0
        %v2743 = vpop.f32.mrb[0].mxu0
        %v2744 = vadd.f32 %v2352, %v2743
        %v2745 = vpop.f32.mrb[0].mxu0
        %2746 = vmatprep.mubr.bf16.mxu0 0
        %2747 = vmatmul.mubr.bf16.gmra.mrb[0].mxu0 %v2569
        %v2748 = vpop.f32.mrb[0].mxu0
        %v2749 = vadd.f32 %v2357, %v2748
        %v2750 = vpop.f32.mrb[0].mxu0
        %v2751 = vpop.f32.mrb[0].mxu0
        %v2752 = vadd.f32 %v2360, %v2751
        %v2753 = vpop.f32.mrb[0].mxu0
        %2754 = vmatprep.mubr.bf16.mxu0 0
        %2755 = vmatmul.mubr.bf16.gmra.mrb[0].mxu0 %v2572
        %v2756 = vpop.f32.mrb[0].mxu0
        %v2757 = vadd.f32 %v2365, %v2756
        %v2758 = vpop.f32.mrb[0].mxu0
        %v2759 = vpop.f32.mrb[0].mxu0
        %v2760 = vadd.f32 %v2368, %v2759
        %v2761 = vpop.f32.mrb[0].mxu0
        %2762 = vmatprep.mubr.bf16.mxu0 0
        %2763 = vmatmul.mubr.bf16.gmra.mrb[0].mxu0 %v2575
        %v2764 = vpop.f32.mrb[0].mxu0
        %v2765 = vadd.f32 %v2373, %v2764
        %v2766 = vpop.f32.mrb[0].mxu0
        %v2767 = vpop.f32.mrb[0].mxu0
        %v2768 = vadd.f32 %v2376, %v2767
        %v2769 = vpop.f32.mrb[0].mxu0
        %2770 = vmatprep.mubr.bf16.mxu0 0
        %2771 = vmatmul.mubr.bf16.gmra.mrb[0].mxu0 %v2578
        %v2772 = vpop.f32.mrb[0].mxu0
        %v2773 = vadd.f32 %v2381, %v2772
        %v2774 = vpop.f32.mrb[0].mxu0
        %v2775 = vpop.f32.mrb[0].mxu0
        %v2776 = vadd.f32 %v2384, %v2775
        %v2777 = vpop.f32.mrb[0].mxu0
        %2778 = vmatprep.mubr.bf16.mxu0 0
        %2779 = vmatmul.mubr.bf16.gmra.mrb[0].mxu0 %v2581
        %v2780 = vpop.f32.mrb[0].mxu0
        %v2781 = vadd.f32 %v2389, %v2780
        %v2782 = vpop.f32.mrb[0].mxu0
        %v2783 = vpop.f32.mrb[0].mxu0
        %v2784 = vadd.f32 %v2392, %v2783
        %v2785 = vpop.f32.mrb[0].mxu0
        %2786 = vmatprep.mubr.bf16.mxu0 0
        %2787 = vmatmul.mubr.bf16.gmra.mrb[0].mxu0 %v2584
        %v2788 = vpop.f32.mrb[0].mxu0
        %v2789 = vadd.f32 %v2397, %v2788
        %v2790 = vpop.f32.mrb[0].mxu0
        %v2791 = vpop.f32.mrb[0].mxu0
        %v2792 = vadd.f32 %v2400, %v2791
        %v2793 = vpop.f32.mrb[0].mxu0
        %2794 = vmatprep.mubr.bf16.mxu0 0
        %2795 = vmatmul.mubr.bf16.gmra.mrb[0].mxu0 %v2587
        %v2796 = vpop.f32.mrb[0].mxu0
        %v2797 = vadd.f32 %v2405, %v2796
        %v2798 = vpop.f32.mrb[0].mxu0
        %v2799 = vpop.f32.mrb[0].mxu0
        %v2800 = vadd.f32 %v2408, %v2799
        %v2801 = vpop.f32.mrb[0].mxu0
        %2802 = vmatprep.mubr.bf16.mxu0 0
        %2803 = vmatmul.mubr.bf16.gmra.mrb[0].mxu0 %v2590
        %v2804 = vpop.f32.mrb[0].mxu0
        %v2805 = vadd.f32 %v2413, %v2804
        %v2806 = vpop.f32.mrb[0].mxu0
        %v2807 = vpop.f32.mrb[0].mxu0
        %v2808 = vadd.f32 %v2416, %v2807
        %v2809 = vpop.f32.mrb[0].mxu0
        %2810 = vmatprep.mubr.bf16.mxu0 0
        %2811 = vmatmul.mubr.bf16.gmra.mrb[0].mxu0 %v2593
        %v2812 = vpop.f32.mrb[0].mxu0
        %v2813 = vadd.f32 %v2421, %v2812
        %v2814 = vpop.f32.mrb[0].mxu0
        %v2815 = vpop.f32.mrb[0].mxu0
        %v2816 = vadd.f32 %v2424, %v2815
        %v2817 = vpop.f32.mrb[0].mxu0
        %2818 = vmatprep.mubr.bf16.mxu0 0
        %2819 = vmatmul.mubr.bf16.gmra.mrb[0].mxu0 %v2596
        %v2820 = vpop.f32.mrb[0].mxu0
        %v2821 = vadd.f32 %v2429, %v2820
        %v2822 = vpop.f32.mrb[0].mxu0
        %v2823 = vpop.f32.mrb[0].mxu0
        %v2824 = vadd.f32 %v2432, %v2823
        %v2825 = vpop.f32.mrb[0].mxu0
        %2826 = vmatprep.mubr.bf16.mxu0 0
        %2827 = vmatmul.mubr.bf16.gmra.mrb[0].mxu0 %v2599
        %v2828 = vpop.f32.mrb[0].mxu0
        %v2829 = vadd.f32 %v2437, %v2828
        %v2830 = vpop.f32.mrb[0].mxu0
        %v2831 = vpop.f32.mrb[0].mxu0
        %v2832 = vadd.f32 %v2440, %v2831
        %v2833 = vpop.f32.mrb[0].mxu0
        %2834 = vmatprep.mubr.bf16.mxu0 0
        %2835 = vmatmul.mubr.bf16.gmra.mrb[0].mxu0 %v2602
        %v2836 = vpop.f32.mrb[0].mxu0
        %v2837 = vadd.f32 %v2445, %v2836
        %v2838 = vpop.f32.mrb[0].mxu0
        %v2839 = vpop.f32.mrb[0].mxu0
        %v2840 = vadd.f32 %v2448, %v2839
        %v2841 = vpop.f32.mrb[0].mxu0
        %2842 = vmatprep.mubr.bf16.mxu0 0
        %2843 = vmatmul.mubr.bf16.gmra.mrb[0].mxu0 %v2605
        %v2844 = vpop.f32.mrb[0].mxu0
        %v2845 = vadd.f32 %v2453, %v2844
        %v2846 = vpop.f32.mrb[0].mxu0
        %v2847 = vpop.f32.mrb[0].mxu0
        %v2848 = vadd.f32 %v2456, %v2847
        %v2849 = vpop.f32.mrb[0].mxu0
        %2850 = vmatprep.mubr.bf16.mxu0 0
        %2851 = vmatmul.mubr.bf16.gmra.mrb[0].mxu0 %v2608
        %v2852 = vpop.f32.mrb[0].mxu0
        %v2853 = vadd.f32 %v2461, %v2852
        %v2854 = vpop.f32.mrb[0].mxu0
        %v2855 = vpop.f32.mrb[0].mxu0
        %v2856 = vadd.f32 %v2464, %v2855
        %v2857 = vpop.f32.mrb[0].mxu0
        %2858 = vmatprep.mubr.bf16.mxu0 0
        %2859 = vmatmul.mubr.bf16.gmra.mrb[0].mxu0 %v2611
        %v2860 = vpop.f32.mrb[0].mxu0
        %v2861 = vadd.f32 %v2469, %v2860
        %v2862 = vpop.f32.mrb[0].mxu0
        %v2863 = vpop.f32.mrb[0].mxu0
        %v2864 = vadd.f32 %v2472, %v2863
        %v2865 = vpop.f32.mrb[0].mxu0
        %2866 = vmatprep.mubr.bf16.mxu0 0
        %2867 = vmatmul.mubr.bf16.gmra.mrb[0].mxu0 %v2614
        %v2868 = vpop.f32.mrb[0].mxu0
        %v2869 = vadd.f32 %v2477, %v2868
        %v2870 = vpop.f32.mrb[0].mxu0
        %v2871 = vpop.f32.mrb[0].mxu0
        %v2872 = vadd.f32 %v2480, %v2871
        %v2873 = vpop.f32.mrb[0].mxu0
        %2874 = vmatprep.mubr.bf16.mxu0 0
        %2875 = vmatmul.mubr.bf16.gmra.mrb[0].mxu0 %v2617
        %v2876 = vpop.f32.mrb[0].mxu0
        %v2877 = vadd.f32 %v2485, %v2876
        %v2878 = vpop.f32.mrb[0].mxu0
        %v2879 = vpop.f32.mrb[0].mxu0
        %v2880 = vadd.f32 %v2488, %v2879
        %v2881 = vpop.f32.mrb[0].mxu0
        %2882 = vmatprep.mubr.bf16.mxu0 0
        %2883 = vmatmul.mubr.bf16.gmra.mrb[0].mxu0 %v2620
        %v2884 = vpop.f32.mrb[0].mxu0
        %v2885 = vadd.f32 %v2493, %v2884
        %v2886 = vpop.f32.mrb[0].mxu0
        %v2887 = vpop.f32.mrb[0].mxu0
        %v2888 = vadd.f32 %v2496, %v2887
        %v2889 = vpop.f32.mrb[0].mxu0
        %2890 = vmatprep.mubr.bf16.mxu0 0
        %2891 = vmatmul.mubr.bf16.gmra.mrb[0].mxu0 %v2623
        %v2892 = vpop.f32.mrb[0].mxu0
        %v2893 = vadd.f32 %v2501, %v2892
        %v2894 = vpop.f32.mrb[0].mxu0
        %v2895 = vpop.f32.mrb[0].mxu0
        %v2896 = vadd.f32 %v2504, %v2895
        %v2897 = vpop.f32.mrb[0].mxu0
        %2898 = vmatprep.mubr.bf16.mxu0 0
        %2899 = vmatmul.mubr.bf16.gmra.mrb[0].mxu0 %v2626
        %v2900 = vpop.f32.mrb[0].mxu0
        %v2901 = vadd.f32 %v2509, %v2900
        %v2902 = vpop.f32.mrb[0].mxu0
        %v2903 = vpop.f32.mrb[0].mxu0
        %v2904 = vadd.f32 %v2512, %v2903
        %v2905 = vpop.f32.mrb[0].mxu0
        %2906 = vmatprep.mubr.bf16.mxu0 0
        %2907 = vmatmul.mubr.bf16.gmra.mrb[0].mxu0 %v2629
        %v2908 = vpop.f32.mrb[0].mxu0
        %v2909 = vadd.f32 %v2517, %v2908
        %v2910 = vpop.f32.mrb[0].mxu0
        %v2911 = vpop.f32.mrb[0].mxu0
        %v2912 = vadd.f32 %v2520, %v2911
        %v2913 = vpop.f32.mrb[0].mxu0
        %2914 = vmatprep.mubr.bf16.mxu0 0
        %2915 = vmatmul.mubr.bf16.gmra.mrb[0].mxu0 %v2632
        %v2916 = vpop.f32.mrb[0].mxu0
        %v2917 = vadd.f32 %v2525, %v2916
        %v2918 = vpop.f32.mrb[0].mxu0
        %v2919 = vpop.f32.mrb[0].mxu0
        %v2920 = vadd.f32 %v2528, %v2919
        %v2921 = vpop.f32.mrb[0].mxu0
        %2922 = vdwg.mxu0
        %v2923 = vmax.f32 %v2669, 0.0
        %v2924 = vmax.f32 %v2672, 0.0
        %v2925 = vmax.f32 %v2677, 0.0
        %v2926 = vmax.f32 %v2680, 0.0
        %v2927 = vmax.f32 %v2685, 0.0
        %v2928 = vmax.f32 %v2688, 0.0
        %v2929 = vmax.f32 %v2693, 0.0
        %v2930 = vmax.f32 %v2696, 0.0
        %v2931 = vmax.f32 %v2701, 0.0
        %v2932 = vmax.f32 %v2704, 0.0
        %v2933 = vmax.f32 %v2709, 0.0
        %v2934 = vmax.f32 %v2712, 0.0
        %v2935 = vmax.f32 %v2717, 0.0
        %v2936 = vmax.f32 %v2720, 0.0
        %v2937 = vmax.f32 %v2725, 0.0
        %v2938 = vmax.f32 %v2728, 0.0
        %v2939 = vmax.f32 %v2733, 0.0
        %v2940 = vmax.f32 %v2736, 0.0
        %v2941 = vmax.f32 %v2741, 0.0
        %v2942 = vmax.f32 %v2744, 0.0
        %v2943 = vmax.f32 %v2749, 0.0
        %v2944 = vmax.f32 %v2752, 0.0
        %v2945 = vmax.f32 %v2757, 0.0
        %v2946 = vmax.f32 %v2760, 0.0
        %v2947 = vmax.f32 %v2765, 0.0
        %v2948 = vmax.f32 %v2768, 0.0
        %v2949 = vmax.f32 %v2773, 0.0
        %v2950 = vmax.f32 %v2776, 0.0
        %v2951 = vmax.f32 %v2781, 0.0
        %v2952 = vmax.f32 %v2784, 0.0
        %v2953 = vmax.f32 %v2789, 0.0
        %v2954 = vmax.f32 %v2792, 0.0
        %v2955 = vmax.f32 %v2797, 0.0
        %v2956 = vmax.f32 %v2800, 0.0
        %v2957 = vmax.f32 %v2805, 0.0
        %v2958 = vmax.f32 %v2808, 0.0
        %v2959 = vmax.f32 %v2813, 0.0
        %v2960 = vmax.f32 %v2816, 0.0
        %v2961 = vmax.f32 %v2821, 0.0
        %v2962 = vmax.f32 %v2824, 0.0
        %v2963 = vmax.f32 %v2829, 0.0
        %v2964 = vmax.f32 %v2832, 0.0
        %v2965 = vmax.f32 %v2837, 0.0
        %v2966 = vmax.f32 %v2840, 0.0
        %v2967 = vmax.f32 %v2845, 0.0
        %v2968 = vmax.f32 %v2848, 0.0
        %v2969 = vmax.f32 %v2853, 0.0
        %v2970 = vmax.f32 %v2856, 0.0
        %v2971 = vmax.f32 %v2861, 0.0
        %v2972 = vmax.f32 %v2864, 0.0
        %v2973 = vmax.f32 %v2869, 0.0
        %v2974 = vmax.f32 %v2872, 0.0
        %v2975 = vmax.f32 %v2877, 0.0
        %v2976 = vmax.f32 %v2880, 0.0
        %v2977 = vmax.f32 %v2885, 0.0
        %v2978 = vmax.f32 %v2888, 0.0
        %v2979 = vmax.f32 %v2893, 0.0
        %v2980 = vmax.f32 %v2896, 0.0
        %v2981 = vmax.f32 %v2901, 0.0
        %v2982 = vmax.f32 %v2904, 0.0
        %v2983 = vmax.f32 %v2909, 0.0
        %v2984 = vmax.f32 %v2912, 0.0
        %v2985 = vmax.f32 %v2917, 0.0
        %v2986 = vmax.f32 %v2920, 0.0
        %v2987 = vmin.f32 %v2923, 1.0
        %v2988 = vmin.f32 %v2924, 1.0
        %v2989 = vmin.f32 %v2925, 1.0
        %v2990 = vmin.f32 %v2926, 1.0
        %v2991 = vmin.f32 %v2927, 1.0
        %v2992 = vmin.f32 %v2928, 1.0
        %v2993 = vmin.f32 %v2929, 1.0
        %v2994 = vmin.f32 %v2930, 1.0
        %v2995 = vmin.f32 %v2931, 1.0
        %v2996 = vmin.f32 %v2932, 1.0
        %v2997 = vmin.f32 %v2933, 1.0
        %v2998 = vmin.f32 %v2934, 1.0
        %v2999 = vmin.f32 %v2935, 1.0
        %v3000 = vmin.f32 %v2936, 1.0
        %v3001 = vmin.f32 %v2937, 1.0
        %v3002 = vmin.f32 %v2938, 1.0
        %v3003 = vmin.f32 %v2939, 1.0
        %v3004 = vmin.f32 %v2940, 1.0
        %v3005 = vmin.f32 %v2941, 1.0
        %v3006 = vmin.f32 %v2942, 1.0
        %v3007 = vmin.f32 %v2943, 1.0
        %v3008 = vmin.f32 %v2944, 1.0
        %v3009 = vmin.f32 %v2945, 1.0
        %v3010 = vmin.f32 %v2946, 1.0
        %v3011 = vmin.f32 %v2947, 1.0
        %v3012 = vmin.f32 %v2948, 1.0
        %v3013 = vmin.f32 %v2949, 1.0
        %v3014 = vmin.f32 %v2950, 1.0
        %v3015 = vmin.f32 %v2951, 1.0
        %v3016 = vmin.f32 %v2952, 1.0
        %v3017 = vmin.f32 %v2953, 1.0
        %v3018 = vmin.f32 %v2954, 1.0
        %v3019 = vmin.f32 %v2955, 1.0
        %v3020 = vmin.f32 %v2956, 1.0
        %v3021 = vmin.f32 %v2957, 1.0
        %v3022 = vmin.f32 %v2958, 1.0
        %v3023 = vmin.f32 %v2959, 1.0
        %v3024 = vmin.f32 %v2960, 1.0
        %v3025 = vmin.f32 %v2961, 1.0
        %v3026 = vmin.f32 %v2962, 1.0
        %v3027 = vmin.f32 %v2963, 1.0
        %v3028 = vmin.f32 %v2964, 1.0
        %v3029 = vmin.f32 %v2965, 1.0
        %v3030 = vmin.f32 %v2966, 1.0
        %v3031 = vmin.f32 %v2967, 1.0
        %v3032 = vmin.f32 %v2968, 1.0
        %v3033 = vmin.f32 %v2969, 1.0
        %v3034 = vmin.f32 %v2970, 1.0
        %v3035 = vmin.f32 %v2971, 1.0
        %v3036 = vmin.f32 %v2972, 1.0
        %v3037 = vmin.f32 %v2973, 1.0
        %v3038 = vmin.f32 %v2974, 1.0
        %v3039 = vmin.f32 %v2975, 1.0
        %v3040 = vmin.f32 %v2976, 1.0
        %v3041 = vmin.f32 %v2977, 1.0
        %v3042 = vmin.f32 %v2978, 1.0
        %v3043 = vmin.f32 %v2979, 1.0
        %v3044 = vmin.f32 %v2980, 1.0
        %v3045 = vmin.f32 %v2981, 1.0
        %v3046 = vmin.f32 %v2982, 1.0
        %v3047 = vmin.f32 %v2983, 1.0
        %v3048 = vmin.f32 %v2984, 1.0
        %v3049 = vmin.f32 %v2985, 1.0
        %v3050 = vmin.f32 %v2986, 1.0
        %v3051 = vpack.c.bf16 %v2988, %v2987
        %v3052 = vpack.c.bf16 %v2990, %v2989
        %v3053 = vpack.c.bf16 %v2992, %v2991
        %v3054 = vpack.c.bf16 %v2994, %v2993
        %v3055 = vpack.c.bf16 %v2996, %v2995
        %v3056 = vpack.c.bf16 %v2998, %v2997
        %v3057 = vpack.c.bf16 %v3000, %v2999
        %v3058 = vpack.c.bf16 %v3002, %v3001
        %v3059 = vpack.c.bf16 %v3004, %v3003
        %v3060 = vpack.c.bf16 %v3006, %v3005
        %v3061 = vpack.c.bf16 %v3008, %v3007
        %v3062 = vpack.c.bf16 %v3010, %v3009
        %v3063 = vpack.c.bf16 %v3012, %v3011
        %v3064 = vpack.c.bf16 %v3014, %v3013
        %v3065 = vpack.c.bf16 %v3016, %v3015
        %v3066 = vpack.c.bf16 %v3018, %v3017
        %v3067 = vpack.c.bf16 %v3020, %v3019
        %v3068 = vpack.c.bf16 %v3022, %v3021
        %v3069 = vpack.c.bf16 %v3024, %v3023
        %v3070 = vpack.c.bf16 %v3026, %v3025
        %v3071 = vpack.c.bf16 %v3028, %v3027
        %v3072 = vpack.c.bf16 %v3030, %v3029
        %v3073 = vpack.c.bf16 %v3032, %v3031
        %v3074 = vpack.c.bf16 %v3034, %v3033
        %v3075 = vpack.c.bf16 %v3036, %v3035
        %v3076 = vpack.c.bf16 %v3038, %v3037
        %v3077 = vpack.c.bf16 %v3040, %v3039
        %v3078 = vpack.c.bf16 %v3042, %v3041
        %v3079 = vpack.c.bf16 %v3044, %v3043
        %v3080 = vpack.c.bf16 %v3046, %v3045
        %v3081 = vpack.c.bf16 %v3048, %v3047
        %v3082 = vpack.c.bf16 %v3050, %v3049
        %v3083 = vld [vmem:[%s2] sm:$0x1]
        %v3084 = vlaneseq
        %v3085 = vshrl.u32 %v3084, 7
        %v3086 = vsub.s32 0, %v3085
        %v3087 = vrot.slane %v3083, %v3086
        %v3104 = vunpack.c.l.b16 %v2105
        %v3105 = vunpack.c.l.b16 %v2106
        %v3106 = vunpack.c.l.b16 %v2107
        %v3107 = vunpack.c.l.b16 %v2108
        %v3108 = vunpack.c.l.b16 %v2109
        %v3109 = vunpack.c.l.b16 %v2110
        %v3110 = vunpack.c.l.b16 %v2111
        %v3111 = vunpack.c.l.b16 %v2112
        %v3112 = vunpack.c.l.b16 %v2113
        %v3113 = vunpack.c.l.b16 %v2114
        %v3114 = vunpack.c.l.b16 %v2115
        %v3115 = vunpack.c.l.b16 %v2116
        %v3116 = vunpack.c.l.b16 %v2117
        %v3117 = vunpack.c.l.b16 %v2118
        %v3118 = vunpack.c.l.b16 %v2119
        %v3119 = vunpack.c.l.b16 %v2120
        %v3120 = vpack.c.b16 %v3105, %v3104
        %v3121 = vpack.c.b16 %v3107, %v3106
        %v3122 = vpack.c.b16 %v3109, %v3108
        %v3123 = vpack.c.b16 %v3111, %v3110
        %v3124 = vpack.c.b16 %v3113, %v3112
        %v3125 = vpack.c.b16 %v3115, %v3114
        %v3126 = vpack.c.b16 %v3117, %v3116
        %v3127 = vpack.c.b16 %v3119, %v3118
        %3136 = vmatprep.subr.bf16.mxu0 0
        %3137 = vmatpush1.bf16.msra.mxu0 %v3120
        %3138 = vmatprep.subr.bf16.mxu0 0
        %3139 = vmatpush1.bf16.msra.mxu0 %v3121
        %3140 = vmatprep.subr.bf16.mxu0 0
        %3141 = vmatpush1.bf16.msra.mxu0 %v3122
        %3142 = vmatprep.subr.bf16.mxu0 0
        %3143 = vmatpush1.bf16.msra.mxu0 %v3123
        %3144 = vmatprep.subr.bf16.mxu0 0
        %3145 = vmatpush1.bf16.msra.mxu0 %v3124
        %3146 = vmatprep.subr.bf16.mxu0 0
        %3147 = vmatpush1.bf16.msra.mxu0 %v3125
        %3148 = vmatprep.subr.bf16.mxu0 0
        %3149 = vmatpush1.bf16.msra.mxu0 %v3126
        %3150 = vmatprep.subr.bf16.mxu0 0
        %3151 = vmatpush1.bf16.msra.mxu0 %v3127
        %3152 = vmatprep.subr.bf16.mxu0 0
        %3153 = vmatpush1.bf16.msra.mxu0 0
        %3154 = vmatprep.subr.bf16.mxu0 0
        %3155 = vmatpush1.bf16.msra.mxu0 0
        %3156 = vmatprep.subr.bf16.mxu0 0
        %3157 = vmatpush1.bf16.msra.mxu0 0
        %3158 = vmatprep.subr.bf16.mxu0 0
        %3159 = vmatpush1.bf16.msra.mxu0 0
        %3160 = vmatprep.subr.bf16.mxu0 0
        %3161 = vmatpush1.bf16.msra.mxu0 0
        %3162 = vmatprep.subr.bf16.mxu0 0
        %3163 = vmatpush1.bf16.msra.mxu0 0
        %3164 = vmatprep.subr.bf16.mxu0 0
        %3165 = vmatpush1.bf16.msra.mxu0 0
        %3166 = vmatprep.subr.bf16.mxu0 0
        %3167 = vmatpush1.bf16.msra.mxu0 0
        %3168 = vmatprep.mubr.bf16.mxu0 0
        %3169 = vmatmul.mubr.bf16.gmra.mrb[0].mxu0 %v3051
        %v3170 = vpop.f32.mrb[0].mxu0
        %v3171 = vadd.f32 %v3087, %v3170
        %v3172 = vpop.f32.mrb[0].mxu0
        %v3173 = vpop.f32.mrb[0].mxu0
        %v3174 = vadd.f32 %v3087, %v3173
        %v3175 = vpop.f32.mrb[0].mxu0
        %3176 = vmatprep.mubr.bf16.mxu0 0
        %3177 = vmatmul.mubr.bf16.gmra.mrb[0].mxu0 %v3052
        %v3178 = vpop.f32.mrb[0].mxu0
        %v3179 = vadd.f32 %v3087, %v3178
        %v3180 = vpop.f32.mrb[0].mxu0
        %v3181 = vpop.f32.mrb[0].mxu0
        %v3182 = vadd.f32 %v3087, %v3181
        %v3183 = vpop.f32.mrb[0].mxu0
        %3184 = vmatprep.mubr.bf16.mxu0 0
        %3185 = vmatmul.mubr.bf16.gmra.mrb[0].mxu0 %v3053
        %v3186 = vpop.f32.mrb[0].mxu0
        %v3187 = vadd.f32 %v3087, %v3186
        %v3188 = vpop.f32.mrb[0].mxu0
        %v3189 = vpop.f32.mrb[0].mxu0
        %v3190 = vadd.f32 %v3087, %v3189
        %v3191 = vpop.f32.mrb[0].mxu0
        %3192 = vmatprep.mubr.bf16.mxu0 0
        %3193 = vmatmul.mubr.bf16.gmra.mrb[0].mxu0 %v3054
        %v3194 = vpop.f32.mrb[0].mxu0
        %v3195 = vadd.f32 %v3087, %v3194
        %v3196 = vpop.f32.mrb[0].mxu0
        %v3197 = vpop.f32.mrb[0].mxu0
        %v3198 = vadd.f32 %v3087, %v3197
        %v3199 = vpop.f32.mrb[0].mxu0
        %3200 = vmatprep.mubr.bf16.mxu0 0
        %3201 = vmatmul.mubr.bf16.gmra.mrb[0].mxu0 %v3055
        %v3202 = vpop.f32.mrb[0].mxu0
        %v3203 = vadd.f32 %v3087, %v3202
        %v3204 = vpop.f32.mrb[0].mxu0
        %v3205 = vpop.f32.mrb[0].mxu0
        %v3206 = vadd.f32 %v3087, %v3205
        %v3207 = vpop.f32.mrb[0].mxu0
        %3208 = vmatprep.mubr.bf16.mxu0 0
        %3209 = vmatmul.mubr.bf16.gmra.mrb[0].mxu0 %v3056
        %v3210 = vpop.f32.mrb[0].mxu0
        %v3211 = vadd.f32 %v3087, %v3210
        %v3212 = vpop.f32.mrb[0].mxu0
        %v3213 = vpop.f32.mrb[0].mxu0
        %v3214 = vadd.f32 %v3087, %v3213
        %v3215 = vpop.f32.mrb[0].mxu0
        %3216 = vmatprep.mubr.bf16.mxu0 0
        %3217 = vmatmul.mubr.bf16.gmra.mrb[0].mxu0 %v3057
        %v3218 = vpop.f32.mrb[0].mxu0
        %v3219 = vadd.f32 %v3087, %v3218
        %v3220 = vpop.f32.mrb[0].mxu0
        %v3221 = vpop.f32.mrb[0].mxu0
        %v3222 = vadd.f32 %v3087, %v3221
        %v3223 = vpop.f32.mrb[0].mxu0
        %3224 = vmatprep.mubr.bf16.mxu0 0
        %3225 = vmatmul.mubr.bf16.gmra.mrb[0].mxu0 %v3058
        %v3226 = vpop.f32.mrb[0].mxu0
        %v3227 = vadd.f32 %v3087, %v3226
        %v3228 = vpop.f32.mrb[0].mxu0
        %v3229 = vpop.f32.mrb[0].mxu0
        %v3230 = vadd.f32 %v3087, %v3229
        %v3231 = vpop.f32.mrb[0].mxu0
        %3232 = vmatprep.mubr.bf16.mxu0 0
        %3233 = vmatmul.mubr.bf16.gmra.mrb[0].mxu0 %v3059
        %v3234 = vpop.f32.mrb[0].mxu0
        %v3235 = vadd.f32 %v3087, %v3234
        %v3236 = vpop.f32.mrb[0].mxu0
        %v3237 = vpop.f32.mrb[0].mxu0
        %v3238 = vadd.f32 %v3087, %v3237
        %v3239 = vpop.f32.mrb[0].mxu0
        %3240 = vmatprep.mubr.bf16.mxu0 0
        %3241 = vmatmul.mubr.bf16.gmra.mrb[0].mxu0 %v3060
        %v3242 = vpop.f32.mrb[0].mxu0
        %v3243 = vadd.f32 %v3087, %v3242
        %v3244 = vpop.f32.mrb[0].mxu0
        %v3245 = vpop.f32.mrb[0].mxu0
        %v3246 = vadd.f32 %v3087, %v3245
        %v3247 = vpop.f32.mrb[0].mxu0
        %3248 = vmatprep.mubr.bf16.mxu0 0
        %3249 = vmatmul.mubr.bf16.gmra.mrb[0].mxu0 %v3061
        %v3250 = vpop.f32.mrb[0].mxu0
        %v3251 = vadd.f32 %v3087, %v3250
        %v3252 = vpop.f32.mrb[0].mxu0
        %v3253 = vpop.f32.mrb[0].mxu0
        %v3254 = vadd.f32 %v3087, %v3253
        %v3255 = vpop.f32.mrb[0].mxu0
        %3256 = vmatprep.mubr.bf16.mxu0 0
        %3257 = vmatmul.mubr.bf16.gmra.mrb[0].mxu0 %v3062
        %v3258 = vpop.f32.mrb[0].mxu0
        %v3259 = vadd.f32 %v3087, %v3258
        %v3260 = vpop.f32.mrb[0].mxu0
        %v3261 = vpop.f32.mrb[0].mxu0
        %v3262 = vadd.f32 %v3087, %v3261
        %v3263 = vpop.f32.mrb[0].mxu0
        %3264 = vmatprep.mubr.bf16.mxu0 0
        %3265 = vmatmul.mubr.bf16.gmra.mrb[0].mxu0 %v3063
        %v3266 = vpop.f32.mrb[0].mxu0
        %v3267 = vadd.f32 %v3087, %v3266
        %v3268 = vpop.f32.mrb[0].mxu0
        %v3269 = vpop.f32.mrb[0].mxu0
        %v3270 = vadd.f32 %v3087, %v3269
        %v3271 = vpop.f32.mrb[0].mxu0
        %3272 = vmatprep.mubr.bf16.mxu0 0
        %3273 = vmatmul.mubr.bf16.gmra.mrb[0].mxu0 %v3064
        %v3274 = vpop.f32.mrb[0].mxu0
        %v3275 = vadd.f32 %v3087, %v3274
        %v3276 = vpop.f32.mrb[0].mxu0
        %v3277 = vpop.f32.mrb[0].mxu0
        %v3278 = vadd.f32 %v3087, %v3277
        %v3279 = vpop.f32.mrb[0].mxu0
        %3280 = vmatprep.mubr.bf16.mxu0 0
        %3281 = vmatmul.mubr.bf16.gmra.mrb[0].mxu0 %v3065
        %v3282 = vpop.f32.mrb[0].mxu0
        %v3283 = vadd.f32 %v3087, %v3282
        %v3284 = vpop.f32.mrb[0].mxu0
        %v3285 = vpop.f32.mrb[0].mxu0
        %v3286 = vadd.f32 %v3087, %v3285
        %v3287 = vpop.f32.mrb[0].mxu0
        %3288 = vmatprep.mubr.bf16.mxu0 0
        %3289 = vmatmul.mubr.bf16.gmra.mrb[0].mxu0 %v3066
        %v3290 = vpop.f32.mrb[0].mxu0
        %v3291 = vadd.f32 %v3087, %v3290
        %v3292 = vpop.f32.mrb[0].mxu0
        %v3293 = vpop.f32.mrb[0].mxu0
        %v3294 = vadd.f32 %v3087, %v3293
        %v3295 = vpop.f32.mrb[0].mxu0
        %3296 = vmatprep.mubr.bf16.mxu0 0
        %3297 = vmatmul.mubr.bf16.gmra.mrb[0].mxu0 %v3067
        %v3298 = vpop.f32.mrb[0].mxu0
        %v3299 = vadd.f32 %v3087, %v3298
        %v3300 = vpop.f32.mrb[0].mxu0
        %v3301 = vpop.f32.mrb[0].mxu0
        %v3302 = vadd.f32 %v3087, %v3301
        %v3303 = vpop.f32.mrb[0].mxu0
        %3304 = vmatprep.mubr.bf16.mxu0 0
        %3305 = vmatmul.mubr.bf16.gmra.mrb[0].mxu0 %v3068
        %v3306 = vpop.f32.mrb[0].mxu0
        %v3307 = vadd.f32 %v3087, %v3306
        %v3308 = vpop.f32.mrb[0].mxu0
        %v3309 = vpop.f32.mrb[0].mxu0
        %v3310 = vadd.f32 %v3087, %v3309
        %v3311 = vpop.f32.mrb[0].mxu0
        %3312 = vmatprep.mubr.bf16.mxu0 0
        %3313 = vmatmul.mubr.bf16.gmra.mrb[0].mxu0 %v3069
        %v3314 = vpop.f32.mrb[0].mxu0
        %v3315 = vadd.f32 %v3087, %v3314
        %v3316 = vpop.f32.mrb[0].mxu0
        %v3317 = vpop.f32.mrb[0].mxu0
        %v3318 = vadd.f32 %v3087, %v3317
        %v3319 = vpop.f32.mrb[0].mxu0
        %3320 = vmatprep.mubr.bf16.mxu0 0
        %3321 = vmatmul.mubr.bf16.gmra.mrb[0].mxu0 %v3070
        %v3322 = vpop.f32.mrb[0].mxu0
        %v3323 = vadd.f32 %v3087, %v3322
        %v3324 = vpop.f32.mrb[0].mxu0
        %v3325 = vpop.f32.mrb[0].mxu0
        %v3326 = vadd.f32 %v3087, %v3325
        %v3327 = vpop.f32.mrb[0].mxu0
        %3328 = vmatprep.mubr.bf16.mxu0 0
        %3329 = vmatmul.mubr.bf16.gmra.mrb[0].mxu0 %v3071
        %v3330 = vpop.f32.mrb[0].mxu0
        %v3331 = vadd.f32 %v3087, %v3330
        %v3332 = vpop.f32.mrb[0].mxu0
        %v3333 = vpop.f32.mrb[0].mxu0
        %v3334 = vadd.f32 %v3087, %v3333
        %v3335 = vpop.f32.mrb[0].mxu0
        %3336 = vmatprep.mubr.bf16.mxu0 0
        %3337 = vmatmul.mubr.bf16.gmra.mrb[0].mxu0 %v3072
        %v3338 = vpop.f32.mrb[0].mxu0
        %v3339 = vadd.f32 %v3087, %v3338
        %v3340 = vpop.f32.mrb[0].mxu0
        %v3341 = vpop.f32.mrb[0].mxu0
        %v3342 = vadd.f32 %v3087, %v3341
        %v3343 = vpop.f32.mrb[0].mxu0
        %3344 = vmatprep.mubr.bf16.mxu0 0
        %3345 = vmatmul.mubr.bf16.gmra.mrb[0].mxu0 %v3073
        %v3346 = vpop.f32.mrb[0].mxu0
        %v3347 = vadd.f32 %v3087, %v3346
        %v3348 = vpop.f32.mrb[0].mxu0
        %v3349 = vpop.f32.mrb[0].mxu0
        %v3350 = vadd.f32 %v3087, %v3349
        %v3351 = vpop.f32.mrb[0].mxu0
        %3352 = vmatprep.mubr.bf16.mxu0 0
        %3353 = vmatmul.mubr.bf16.gmra.mrb[0].mxu0 %v3074
        %v3354 = vpop.f32.mrb[0].mxu0
        %v3355 = vadd.f32 %v3087, %v3354
        %v3356 = vpop.f32.mrb[0].mxu0
        %v3357 = vpop.f32.mrb[0].mxu0
        %v3358 = vadd.f32 %v3087, %v3357
        %v3359 = vpop.f32.mrb[0].mxu0
        %3360 = vmatprep.mubr.bf16.mxu0 0
        %3361 = vmatmul.mubr.bf16.gmra.mrb[0].mxu0 %v3075
        %v3362 = vpop.f32.mrb[0].mxu0
        %v3363 = vadd.f32 %v3087, %v3362
        %v3364 = vpop.f32.mrb[0].mxu0
        %v3365 = vpop.f32.mrb[0].mxu0
        %v3366 = vadd.f32 %v3087, %v3365
        %v3367 = vpop.f32.mrb[0].mxu0
        %3368 = vmatprep.mubr.bf16.mxu0 0
        %3369 = vmatmul.mubr.bf16.gmra.mrb[0].mxu0 %v3076
        %v3370 = vpop.f32.mrb[0].mxu0
        %v3371 = vadd.f32 %v3087, %v3370
        %v3372 = vpop.f32.mrb[0].mxu0
        %v3373 = vpop.f32.mrb[0].mxu0
        %v3374 = vadd.f32 %v3087, %v3373
        %v3375 = vpop.f32.mrb[0].mxu0
        %3376 = vmatprep.mubr.bf16.mxu0 0
        %3377 = vmatmul.mubr.bf16.gmra.mrb[0].mxu0 %v3077
        %v3378 = vpop.f32.mrb[0].mxu0
        %v3379 = vadd.f32 %v3087, %v3378
        %v3380 = vpop.f32.mrb[0].mxu0
        %v3381 = vpop.f32.mrb[0].mxu0
        %v3382 = vadd.f32 %v3087, %v3381
        %v3383 = vpop.f32.mrb[0].mxu0
        %3384 = vmatprep.mubr.bf16.mxu0 0
        %3385 = vmatmul.mubr.bf16.gmra.mrb[0].mxu0 %v3078
        %v3386 = vpop.f32.mrb[0].mxu0
        %v3387 = vadd.f32 %v3087, %v3386
        %v3388 = vpop.f32.mrb[0].mxu0
        %v3389 = vpop.f32.mrb[0].mxu0
        %v3390 = vadd.f32 %v3087, %v3389
        %v3391 = vpop.f32.mrb[0].mxu0
        %3392 = vmatprep.mubr.bf16.mxu0 0
        %3393 = vmatmul.mubr.bf16.gmra.mrb[0].mxu0 %v3079
        %v3394 = vpop.f32.mrb[0].mxu0
        %v3395 = vadd.f32 %v3087, %v3394
        %v3396 = vpop.f32.mrb[0].mxu0
        %v3397 = vpop.f32.mrb[0].mxu0
        %v3398 = vadd.f32 %v3087, %v3397
        %v3399 = vpop.f32.mrb[0].mxu0
        %3400 = vmatprep.mubr.bf16.mxu0 0
        %3401 = vmatmul.mubr.bf16.gmra.mrb[0].mxu0 %v3080
        %v3402 = vpop.f32.mrb[0].mxu0
        %v3403 = vadd.f32 %v3087, %v3402
        %v3404 = vpop.f32.mrb[0].mxu0
        %v3405 = vpop.f32.mrb[0].mxu0
        %v3406 = vadd.f32 %v3087, %v3405
        %v3407 = vpop.f32.mrb[0].mxu0
        %3408 = vmatprep.mubr.bf16.mxu0 0
        %3409 = vmatmul.mubr.bf16.gmra.mrb[0].mxu0 %v3081
        %v3410 = vpop.f32.mrb[0].mxu0
        %v3411 = vadd.f32 %v3087, %v3410
        %v3412 = vpop.f32.mrb[0].mxu0
        %v3413 = vpop.f32.mrb[0].mxu0
        %v3414 = vadd.f32 %v3087, %v3413
        %v3415 = vpop.f32.mrb[0].mxu0
        %3416 = vmatprep.mubr.bf16.mxu0 0
        %3417 = vmatmul.mubr.bf16.gmra.mrb[0].mxu0 %v3082
        %v3418 = vpop.f32.mrb[0].mxu0
        %v3419 = vadd.f32 %v3087, %v3418
        %v3420 = vpop.f32.mrb[0].mxu0
        %v3421 = vpop.f32.mrb[0].mxu0
        %v3422 = vadd.f32 %v3087, %v3421
        %v3423 = vpop.f32.mrb[0].mxu0
        %3424 = vdwg.mxu0
        %v3425 = vmax.f32 %v3171, 0.0
        %v3426 = vmax.f32 %v3174, 0.0
        %v3427 = vmax.f32 %v3179, 0.0
        %v3428 = vmax.f32 %v3182, 0.0
        %v3429 = vmax.f32 %v3187, 0.0
        %v3430 = vmax.f32 %v3190, 0.0
        %v3431 = vmax.f32 %v3195, 0.0
        %v3432 = vmax.f32 %v3198, 0.0
        %v3433 = vmax.f32 %v3203, 0.0
        %v3434 = vmax.f32 %v3206, 0.0
        %v3435 = vmax.f32 %v3211, 0.0
        %v3436 = vmax.f32 %v3214, 0.0
        %v3437 = vmax.f32 %v3219, 0.0
        %v3438 = vmax.f32 %v3222, 0.0
        %v3439 = vmax.f32 %v3227, 0.0
        %v3440 = vmax.f32 %v3230, 0.0
        %v3441 = vmax.f32 %v3235, 0.0
        %v3442 = vmax.f32 %v3238, 0.0
        %v3443 = vmax.f32 %v3243, 0.0
        %v3444 = vmax.f32 %v3246, 0.0
        %v3445 = vmax.f32 %v3251, 0.0
        %v3446 = vmax.f32 %v3254, 0.0
        %v3447 = vmax.f32 %v3259, 0.0
        %v3448 = vmax.f32 %v3262, 0.0
        %v3449 = vmax.f32 %v3267, 0.0
        %v3450 = vmax.f32 %v3270, 0.0
        %v3451 = vmax.f32 %v3275, 0.0
        %v3452 = vmax.f32 %v3278, 0.0
        %v3453 = vmax.f32 %v3283, 0.0
        %v3454 = vmax.f32 %v3286, 0.0
        %v3455 = vmax.f32 %v3291, 0.0
        %v3456 = vmax.f32 %v3294, 0.0
        %v3457 = vmax.f32 %v3299, 0.0
        %v3458 = vmax.f32 %v3302, 0.0
        %v3459 = vmax.f32 %v3307, 0.0
        %v3460 = vmax.f32 %v3310, 0.0
        %v3461 = vmax.f32 %v3315, 0.0
        %v3462 = vmax.f32 %v3318, 0.0
        %v3463 = vmax.f32 %v3323, 0.0
        %v3464 = vmax.f32 %v3326, 0.0
        %v3465 = vmax.f32 %v3331, 0.0
        %v3466 = vmax.f32 %v3334, 0.0
        %v3467 = vmax.f32 %v3339, 0.0
        %v3468 = vmax.f32 %v3342, 0.0
        %v3469 = vmax.f32 %v3347, 0.0
        %v3470 = vmax.f32 %v3350, 0.0
        %v3471 = vmax.f32 %v3355, 0.0
        %v3472 = vmax.f32 %v3358, 0.0
        %v3473 = vmax.f32 %v3363, 0.0
        %v3474 = vmax.f32 %v3366, 0.0
        %v3475 = vmax.f32 %v3371, 0.0
        %v3476 = vmax.f32 %v3374, 0.0
        %v3477 = vmax.f32 %v3379, 0.0
        %v3478 = vmax.f32 %v3382, 0.0
        %v3479 = vmax.f32 %v3387, 0.0
        %v3480 = vmax.f32 %v3390, 0.0
        %v3481 = vmax.f32 %v3395, 0.0
        %v3482 = vmax.f32 %v3398, 0.0
        %v3483 = vmax.f32 %v3403, 0.0
        %v3484 = vmax.f32 %v3406, 0.0
        %v3485 = vmax.f32 %v3411, 0.0
        %v3486 = vmax.f32 %v3414, 0.0
        %v3487 = vmax.f32 %v3419, 0.0
        %v3488 = vmax.f32 %v3422, 0.0
        %v3489 = vmin.f32 %v3425, 1.0
        %v3490 = vmin.f32 %v3426, 1.0
        %v3491 = vmin.f32 %v3427, 1.0
        %v3492 = vmin.f32 %v3428, 1.0
        %v3493 = vmin.f32 %v3429, 1.0
        %v3494 = vmin.f32 %v3430, 1.0
        %v3495 = vmin.f32 %v3431, 1.0
        %v3496 = vmin.f32 %v3432, 1.0
        %v3497 = vmin.f32 %v3433, 1.0
        %v3498 = vmin.f32 %v3434, 1.0
        %v3499 = vmin.f32 %v3435, 1.0
        %v3500 = vmin.f32 %v3436, 1.0
        %v3501 = vmin.f32 %v3437, 1.0
        %v3502 = vmin.f32 %v3438, 1.0
        %v3503 = vmin.f32 %v3439, 1.0
        %v3504 = vmin.f32 %v3440, 1.0
        %v3505 = vmin.f32 %v3441, 1.0
        %v3506 = vmin.f32 %v3442, 1.0
        %v3507 = vmin.f32 %v3443, 1.0
        %v3508 = vmin.f32 %v3444, 1.0
        %v3509 = vmin.f32 %v3445, 1.0
        %v3510 = vmin.f32 %v3446, 1.0
        %v3511 = vmin.f32 %v3447, 1.0
        %v3512 = vmin.f32 %v3448, 1.0
        %v3513 = vmin.f32 %v3449, 1.0
        %v3514 = vmin.f32 %v3450, 1.0
        %v3515 = vmin.f32 %v3451, 1.0
        %v3516 = vmin.f32 %v3452, 1.0
        %v3517 = vmin.f32 %v3453, 1.0
        %v3518 = vmin.f32 %v3454, 1.0
        %v3519 = vmin.f32 %v3455, 1.0
        %v3520 = vmin.f32 %v3456, 1.0
        %v3521 = vmin.f32 %v3457, 1.0
        %v3522 = vmin.f32 %v3458, 1.0
        %v3523 = vmin.f32 %v3459, 1.0
        %v3524 = vmin.f32 %v3460, 1.0
        %v3525 = vmin.f32 %v3461, 1.0
        %v3526 = vmin.f32 %v3462, 1.0
        %v3527 = vmin.f32 %v3463, 1.0
        %v3528 = vmin.f32 %v3464, 1.0
        %v3529 = vmin.f32 %v3465, 1.0
        %v3530 = vmin.f32 %v3466, 1.0
        %v3531 = vmin.f32 %v3467, 1.0
        %v3532 = vmin.f32 %v3468, 1.0
        %v3533 = vmin.f32 %v3469, 1.0
        %v3534 = vmin.f32 %v3470, 1.0
        %v3535 = vmin.f32 %v3471, 1.0
        %v3536 = vmin.f32 %v3472, 1.0
        %v3537 = vmin.f32 %v3473, 1.0
        %v3538 = vmin.f32 %v3474, 1.0
        %v3539 = vmin.f32 %v3475, 1.0
        %v3540 = vmin.f32 %v3476, 1.0
        %v3541 = vmin.f32 %v3477, 1.0
        %v3542 = vmin.f32 %v3478, 1.0
        %v3543 = vmin.f32 %v3479, 1.0
        %v3544 = vmin.f32 %v3480, 1.0
        %v3545 = vmin.f32 %v3481, 1.0
        %v3546 = vmin.f32 %v3482, 1.0
        %v3547 = vmin.f32 %v3483, 1.0
        %v3548 = vmin.f32 %v3484, 1.0
        %v3549 = vmin.f32 %v3485, 1.0
        %v3550 = vmin.f32 %v3486, 1.0
        %v3551 = vmin.f32 %v3487, 1.0
        %v3552 = vmin.f32 %v3488, 1.0
        %v3553 = vld [vmem:[%s2 + $0x1] sm:$0x1]
        %v3554 = vld [vmem:[%s2 + $0x2] sm:$0x1]
        %3556 = vset.pattern.permute.xlu0 0
        %3557 = vperm.xlu0 %3556, %v3554
        %v3558 = vpop.permute.xlu0 %3557
        %3560 = vmatprep.subr.mxu0 0.0
        %3561 = vmatpush1.xpose.msra.mxu0 %v3489
        %3562 = vmatprep.subr.mxu0 0.0
        %3563 = vmatpush1.xpose.msra.mxu0 %v3490
        %3564 = vmatprep.subr.mxu0 0.0
        %3565 = vmatpush1.xpose.msra.mxu0 %v3491
        %3566 = vmatprep.subr.mxu0 0.0
        %3567 = vmatpush1.xpose.msra.mxu0 %v3492
        %3568 = vmatprep.subr.mxu0 0.0
        %3569 = vmatpush1.xpose.msra.mxu0 %v3493
        %3570 = vmatprep.subr.mxu0 0.0
        %3571 = vmatpush1.xpose.msra.mxu0 %v3494
        %3572 = vmatprep.subr.mxu0 0.0
        %3573 = vmatpush1.xpose.msra.mxu0 %v3495
        %3574 = vmatprep.subr.mxu0 0.0
        %3575 = vmatpush1.xpose.msra.mxu0 %v3496
        %3576 = vmatprep.subr.mxu0 0.0
        %3577 = vmatpush1.xpose.msra.mxu0 %v3497
        %3578 = vmatprep.subr.mxu0 0.0
        %3579 = vmatpush1.xpose.msra.mxu0 %v3498
        %3580 = vmatprep.subr.mxu0 0.0
        %3581 = vmatpush1.xpose.msra.mxu0 %v3499
        %3582 = vmatprep.subr.mxu0 0.0
        %3583 = vmatpush1.xpose.msra.mxu0 %v3500
        %3584 = vmatprep.subr.mxu0 0.0
        %3585 = vmatpush1.xpose.msra.mxu0 %v3501
        %3586 = vmatprep.subr.mxu0 0.0
        %3587 = vmatpush1.xpose.msra.mxu0 %v3502
        %3588 = vmatprep.subr.mxu0 0.0
        %3589 = vmatpush1.xpose.msra.mxu0 %v3503
        %3590 = vmatprep.subr.mxu0 0.0
        %3591 = vmatpush1.xpose.msra.mxu0 %v3504
        %3592 = vmatprep.subr.mxu0 0.0
        %3593 = vmatpush1.xpose.msra.mxu0 %v3505
        %3594 = vmatprep.subr.mxu0 0.0
        %3595 = vmatpush1.xpose.msra.mxu0 %v3506
        %3596 = vmatprep.subr.mxu0 0.0
        %3597 = vmatpush1.xpose.msra.mxu0 %v3507
        %3598 = vmatprep.subr.mxu0 0.0
        %3599 = vmatpush1.xpose.msra.mxu0 %v3508
        %3600 = vmatprep.subr.mxu0 0.0
        %3601 = vmatpush1.xpose.msra.mxu0 %v3509
        %3602 = vmatprep.subr.mxu0 0.0
        %3603 = vmatpush1.xpose.msra.mxu0 %v3510
        %3604 = vmatprep.subr.mxu0 0.0
        %3605 = vmatpush1.xpose.msra.mxu0 %v3511
        %3606 = vmatprep.subr.mxu0 0.0
        %3607 = vmatpush1.xpose.msra.mxu0 %v3512
        %3608 = vmatprep.subr.mxu0 0.0
        %3609 = vmatpush1.xpose.msra.mxu0 %v3513
        %3610 = vmatprep.subr.mxu0 0.0
        %3611 = vmatpush1.xpose.msra.mxu0 %v3514
        %3612 = vmatprep.subr.mxu0 0.0
        %3613 = vmatpush1.xpose.msra.mxu0 %v3515
        %3614 = vmatprep.subr.mxu0 0.0
        %3615 = vmatpush1.xpose.msra.mxu0 %v3516
        %3616 = vmatprep.subr.mxu0 0.0
        %3617 = vmatpush1.xpose.msra.mxu0 %v3517
        %3618 = vmatprep.subr.mxu0 0.0
        %3619 = vmatpush1.xpose.msra.mxu0 %v3518
        %3620 = vmatprep.subr.mxu0 0.0
        %3621 = vmatpush1.xpose.msra.mxu0 %v3519
        %3622 = vmatprep.subr.mxu0 0.0
        %3623 = vmatpush1.xpose.msra.mxu0 %v3520
        %3624 = vmatprep.mubr.f32.mxu0 0.0
        %3625 = vmatmul.mubr.f32.gmra.mrb[0].mxu0 %v3553
        %v3626 = vpop.f32.mrb[0].mxu0
        %v3627 = vadd.f32 %v3558, %v3626
        %v3628 = vpop.f32.mrb[0].mxu0
        %v3629 = vadd.f32 %v3558, %v3628
        %3630 = vdwg.mxu0
        %3631 = vmatprep.subr.mxu0 0.0
        %3632 = vmatpush1.xpose.msra.mxu0 %v3521
        %3633 = vmatprep.subr.mxu0 0.0
        %3634 = vmatpush1.xpose.msra.mxu0 %v3522
        %3635 = vmatprep.subr.mxu0 0.0
        %3636 = vmatpush1.xpose.msra.mxu0 %v3523
        %3637 = vmatprep.subr.mxu0 0.0
        %3638 = vmatpush1.xpose.msra.mxu0 %v3524
        %3639 = vmatprep.subr.mxu0 0.0
        %3640 = vmatpush1.xpose.msra.mxu0 %v3525
        %3641 = vmatprep.subr.mxu0 0.0
        %3642 = vmatpush1.xpose.msra.mxu0 %v3526
        %3643 = vmatprep.subr.mxu0 0.0
        %3644 = vmatpush1.xpose.msra.mxu0 %v3527
        %3645 = vmatprep.subr.mxu0 0.0
        %3646 = vmatpush1.xpose.msra.mxu0 %v3528
        %3647 = vmatprep.subr.mxu0 0.0
        %3648 = vmatpush1.xpose.msra.mxu0 %v3529
        %3649 = vmatprep.subr.mxu0 0.0
        %3650 = vmatpush1.xpose.msra.mxu0 %v3530
        %3651 = vmatprep.subr.mxu0 0.0
        %3652 = vmatpush1.xpose.msra.mxu0 %v3531
        %3653 = vmatprep.subr.mxu0 0.0
        %3654 = vmatpush1.xpose.msra.mxu0 %v3532
        %3655 = vmatprep.subr.mxu0 0.0
        %3656 = vmatpush1.xpose.msra.mxu0 %v3533
        %3657 = vmatprep.subr.mxu0 0.0
        %3658 = vmatpush1.xpose.msra.mxu0 %v3534
        %3659 = vmatprep.subr.mxu0 0.0
        %3660 = vmatpush1.xpose.msra.mxu0 %v3535
        %3661 = vmatprep.subr.mxu0 0.0
        %3662 = vmatpush1.xpose.msra.mxu0 %v3536
        %3663 = vmatprep.subr.mxu0 0.0
        %3664 = vmatpush1.xpose.msra.mxu0 %v3537
        %3665 = vmatprep.subr.mxu0 0.0
        %3666 = vmatpush1.xpose.msra.mxu0 %v3538
        %3667 = vmatprep.subr.mxu0 0.0
        %3668 = vmatpush1.xpose.msra.mxu0 %v3539
        %3669 = vmatprep.subr.mxu0 0.0
        %3670 = vmatpush1.xpose.msra.mxu0 %v3540
        %3671 = vmatprep.subr.mxu0 0.0
        %3672 = vmatpush1.xpose.msra.mxu0 %v3541
        %3673 = vmatprep.subr.mxu0 0.0
        %3674 = vmatpush1.xpose.msra.mxu0 %v3542
        %3675 = vmatprep.subr.mxu0 0.0
        %3676 = vmatpush1.xpose.msra.mxu0 %v3543
        %3677 = vmatprep.subr.mxu0 0.0
        %3678 = vmatpush1.xpose.msra.mxu0 %v3544
        %3679 = vmatprep.subr.mxu0 0.0
        %3680 = vmatpush1.xpose.msra.mxu0 %v3545
        %3681 = vmatprep.subr.mxu0 0.0
        %3682 = vmatpush1.xpose.msra.mxu0 %v3546
        %3683 = vmatprep.subr.mxu0 0.0
        %3684 = vmatpush1.xpose.msra.mxu0 %v3547
        %3685 = vmatprep.subr.mxu0 0.0
        %3686 = vmatpush1.xpose.msra.mxu0 %v3548
        %3687 = vmatprep.subr.mxu0 0.0
        %3688 = vmatpush1.xpose.msra.mxu0 %v3549
        %3689 = vmatprep.subr.mxu0 0.0
        %3690 = vmatpush1.xpose.msra.mxu0 %v3550
        %3691 = vmatprep.subr.mxu0 0.0
        %3692 = vmatpush1.xpose.msra.mxu0 %v3551
        %3693 = vmatprep.subr.mxu0 0.0
        %3694 = vmatpush1.xpose.msra.mxu0 %v3552
        %3695 = vmatprep.mubr.f32.mxu0 0.0
        %3696 = vmatmul.mubr.f32.gmra.mrb[0].mxu0 %v3553
        %v3697 = vpop.f32.mrb[0].mxu0
        %v3698 = vadd.f32 %v3558, %v3697
        %v3699 = vpop.f32.mrb[0].mxu0
        %v3700 = vadd.f32 %v3558, %v3699
        %3701 = vdwg.mxu0
        %v3702 = vxor.u32 %v3627, 2147483648
        %v3703 = vxor.u32 %v3629, 2147483648
        %v3704 = vxor.u32 %v3698, 2147483648
        %v3705 = vxor.u32 %v3700, 2147483648
        %v3706 = vmul.f32 %v3702, 1.442695
        %v3707 = vpow.pop %v3706
        %v3708 = vmul.f32 %v3703, 1.442695
        %v3709 = vpow.pop %v3708
        %v3710 = vmul.f32 %v3704, 1.442695
        %v3711 = vpow.pop %v3710
        %v3712 = vmul.f32 %v3705, 1.442695
        %v3713 = vpow.pop %v3712
        %v3714 = vadd.f32 %v3707, 1.0
        %v3715 = vadd.f32 %v3709, 1.0
        %v3716 = vadd.f32 %v3711, 1.0
        %v3717 = vadd.f32 %v3713, 1.0
        %v3718 = vrcp.pop %v3714
        %v3719 = vmul.f32 1.0, %v3718
        %v3720 = vrcp.pop %v3715
        %v3721 = vmul.f32 1.0, %v3720
        %v3722 = vrcp.pop %v3716
        %v3723 = vmul.f32 1.0, %v3722
        %v3724 = vrcp.pop %v3717
        %v3725 = vmul.f32 1.0, %v3724
        %v3730 = vcombine.low %v3719, %v3721
        %v3731 = vcombine.low %v3723, %v3725
        %v3733 = vunpack.c.l.s4 1966171168
        %v3734 = vunpack.c.0.s8 %v3733
        %v3735 = vlaneseq
        %v3736 = vshrl.u32 %v3735, 7
        %v3737 = vsub.s32 %v3734, %v3736
        %v3738 = vrot.slane %v3730, %v3737
        %v3740 = vunpack.c.l.s4 1966171168
        %v3741 = vunpack.c.0.s8 %v3740
        %v3742 = vlaneseq
        %v3743 = vshrl.u32 %v3742, 7
        %v3744 = vsub.s32 %v3741, %v3743
        %v3745 = vrot.slane %v3731, %v3744
        %v3746 = vcombine.low %v3738, %v3745
        %v3748 = vunpack.c.l.s4 1966171168
        %v3749 = vunpack.c.0.s8 %v3748
        %v3750 = vlaneseq
        %v3751 = vshrl.u32 %v3750, 7
        %v3752 = vsub.s32 %v3749, %v3751
        %v3753 = vrot.slane %v3746, %v3752
        %v3755 = vlaneseq
        %vm3756 = vcmp.ge.s32.totalorder %v3755, 0
        %vm3757 = vcmp.lt.s32.totalorder %v3755, 512
        %vm3758 = vmand %vm3756, %vm3757
        %3759 = vst.msk [vmem:[%s164] sm:$0xf] %vm3758, %v3753
        %s3760 = sand.u32 %s93, 1
        %s3761 = scalar_lea.sflag [#allocation3], %s3760
        %s3762 = sand.u32 %s93, 1
        %s3763 = smul.addr %s3762, 4
        %s3764 = scalar_lea.vmem [#allocation2], %s3763
        // Predicated region
        $region33: #{tpu_custom_call.1} parent=31 // pred_check
          %p3765 = pneg %p103
        $region34: #{tpu_custom_call.1} parent=31 // pred_check_branch
          %3767 = sbr.rel (%p3765) target = $region36
        $region35: #{tpu_custom_call.1} parent=31 // pred_region
          %s3768 = smul.u32 4, %s17
          %s3770 = ssub.s32 64, 64
          %3771 = vsyncadd %s3761, %s3770
          %s3772 = smul.addr %s3768, 16
          %s3773 = scalar_lea.hbm %s3, %s3772
          %s3775 = sshll.u32 %s3764, 4
          %s3776 = int_to_ptr.vmem [resolvable:$true] %s3775
          %3778 = dma.vmem_to_hbm [thread:$0]  %s3776, 64, %s3773, %s3761
        $region36: #{tpu_custom_call.1} parent=31 // pred_fallthru
          _
      $region32: #{tpu_custom_call.1} parent=5 // pred_fallthru
        _
      %p3779 = scmp.le.s32.totalorder 2, %s12
      // Predicated region
      $region37: #{tpu_custom_call.1} parent=5 // pred_check
        %p3780 = pneg %p3779
      $region38: #{tpu_custom_call.1} parent=5 // pred_check_branch
        %3782 = sbr.rel (%p3780) target = $region40
      $region39: #{tpu_custom_call.1} parent=5 // pred_region
        %s3783 = ssub.s32 %s12, 2
        // Predicated region
        $region41: #{tpu_custom_call.1} parent=39 // pred_check
          %p3784 = pneg %p109
        $region42: #{tpu_custom_call.1} parent=39 // pred_check_branch
          %3786 = sbr.rel (%p3784) target = $region44
        $region43: #{tpu_custom_call.1} parent=39 // pred_region
          %s3787 = sand.u32 %s94, 1
          %s3788 = scalar_lea.sflag [#allocation3], %s3787
          %s3789 = sand.u32 %s94, 1
          %s3790 = smul.addr %s3789, 4
          %s3791 = scalar_lea.vmem [#allocation2], %s3790
          %3792 = dma.done %s3788, 64
        $region44: #{tpu_custom_call.1} parent=39 // pred_fallthru
          _
      $region40: #{tpu_custom_call.1} parent=5 // pred_fallthru
        _
    $region6: #{tpu_custom_call.1} parent=1 // loop_footer
      %s16 = sadd.s32 1, %s12
    $region7: #{tpu_custom_call.1} parent=1 // loop_footer_branch
      %11 = sbr.rel target = $region3
    $region8: #{tpu_custom_call.1} parent=1 // loop_exit
      _
    %3793 = vsyncpa [#allocation3], 1
    %s3794 = scalar_lea.sflag [#allocation3], 1
    %3795 = vsyncpa %s3794, 1

</llo_original>
